<compile_context>
chip_gen: v7x
topology: tpu7x:2x2x1
jax: 0.10.0
libtpu: 0.0.40
codegen_flags: <defaults>
</compile_context>

<pallas_src>
import functools

import numpy as np
import jax
import jax.numpy as jnp
from jax import lax
from jax.experimental import pallas as pl
from jax.experimental.pallas import tpu as pltpu


RGB_DIM = 3


# ----------------------------------------------------------------------------
# Fixed plane axes (module buffer), inverted like generate_planes(return_inv=True)
# ----------------------------------------------------------------------------
def generate_planes_inv():
    planes = np.array([[[1, 0, 0], [0, 1, 0], [0, 0, 1]],
                       [[1, 0, 0], [0, 0, 1], [0, 1, 0]],
                       [[0, 0, 1], [1, 0, 0], [0, 1, 0]]], dtype=np.float32)
    return np.linalg.inv(planes)          # (3, 3, 3)


INV_PLANES = generate_planes_inv()


def _softplus(x):
    # matches torch.nn.functional.softplus (threshold=20)
    return jnp.where(x > 20.0, x, jnp.log(1.0 + jnp.exp(jnp.minimum(x, 20.0))))


def _sigmoid(x):
    # EUP reciprocal (approx) keeps the divide off the VALU; ~1e-4 rel error max.
    return pl.reciprocal(1.0 + jnp.exp(-x), approx=True)


# ----------------------------------------------------------------------------
# Kernel 1: fused triplane grid_sample + OSG-style decoder MLP
#   grid = (N, M // TM, HW // KC); HW axis is the (arbitrary) reduction axis.
# ----------------------------------------------------------------------------
def _triplane_decoder_kernel(coords_ref, feat_ref, w1_ref, b1_ref, w2_ref, b2_ref,
                             out_ref, acc_ref, *, H, W, inv_planes, kchunk):
    k = pl.program_id(2)
    nk = pl.num_programs(2)

    @pl.when(k == 0)
    def _():
        acc_ref[...] = jnp.zeros_like(acc_ref)

    coords = coords_ref[0]                    # (3, TM)  lane-dense sample coords
    TM = coords.shape[1]
    cx = coords[0:1, :]
    cy = coords[1:2, :]
    cz = coords[2:3, :]

    base = k * kchunk
    sub_iota = lax.broadcasted_iota(jnp.int32, (kchunk, TM), 0) + base   # (KC, TM)

    # TODO(synk): on v6e/v7x the feat chunk + one-hot could be cast to bf16
    # (preferred_element_type=f32) to halve DMA/VMEM; kept f32 to match torch numerics.
    for p in range(3):
        ip = inv_planes[p]
        # bmm(coordinates, inv_planes)[..., :2]  (constants from the fixed plane axes)
        u = cx * ip[0, 0] + cy * ip[1, 0] + cz * ip[2, 0]      # grid x -> width
        v = cx * ip[0, 1] + cy * ip[1, 1] + cz * ip[2, 1]      # grid y -> height

        # grid_sample, mode='bilinear', padding_mode='zeros', align_corners=False
        ix = ((u + 1.0) * W - 1.0) * 0.5
        iy = ((v + 1.0) * H - 1.0) * 0.5
        x0 = jnp.floor(ix)
        y0 = jnp.floor(iy)
        x1 = x0 + 1.0
        y1 = y0 + 1.0
        wx1 = ix - x0
        wx0 = 1.0 - wx1
        wy1 = iy - y0
        wy0 = 1.0 - wy1

        wt = jnp.zeros((kchunk, TM), jnp.float32)
        for (yy, xx, wgt) in ((y0, x0, wy0 * wx0), (y0, x1, wy0 * wx1),
                              (y1, x0, wy1 * wx0), (y1, x1, wy1 * wx1)):
            inb = (xx >= 0.0) & (xx <= W - 1.0) & (yy >= 0.0) & (yy <= H - 1.0)
            idx = (yy * W + xx).astype(jnp.int32)              # (1, TM) flat HW index
            wt = wt + jnp.where((sub_iota == idx) & inb, wgt, 0.0)

        # (C, KC) @ (KC, TM) -> (C, TM): samples on lanes, accumulate over HW chunks
        acc_ref[...] += jnp.dot(feat_ref[0, p], wt, preferred_element_type=jnp.float32)

    @pl.when(k == nk - 1)
    def _():
        feat_t = acc_ref[...] * (1.0 / 3.0)                    # mean over the 3 planes
        # decoder MLP (view directions ignored, OSGDecoder-style), all lane-dense
        h = jnp.dot(w1_ref[...], feat_t, preferred_element_type=jnp.float32) + b1_ref[...]
        h = _softplus(h)
        o = jnp.dot(w2_ref[...], h, preferred_element_type=jnp.float32) + b2_ref[...]
        sigma = o[0:1, :]
        rgb = _sigmoid(o[1:, :]) * (1.0 + 2.0 * 0.001) - 0.001
        out_ref[0] = jnp.concatenate([sigma, rgb], axis=0)     # (4, TM)


def run_model(feat, H, W, dec_t, sample_coordinates, options, *, tm=256, kchunk=512):
    """sample_from_planes + decoder, fused in one Pallas kernel.

    feat:  (N, 3, C, H*W)  channel-first plane features (reshape of NCHW, no transpose)
    dec_t: transposed decoder params {w1t:(hidden,C), b1t:(hidden,1),
                                      w2t:(out,hidden), b2t:(out,1)}
    """
    N, n_planes, C, HW = feat.shape
    _, M, _ = sample_coordinates.shape

    coords_t = jnp.transpose(sample_coordinates * (2.0 / options['box_warp']),
                             (0, 2, 1)).astype(jnp.float32)            # (N, 3, M)

    TM = tm
    if M % TM != 0:
        TM = 128 if M % 128 == 0 else M
    assert M % TM == 0, (M, TM)
    KC = min(kchunk, HW)
    if HW % KC != 0:
        KC = HW
    assert HW % KC == 0, (HW, KC)

    hidden = dec_t['w1t'].shape[0]
    out_dim = dec_t['w2t'].shape[0]

    kernel = functools.partial(_triplane_decoder_kernel, H=H, W=W,
                               inv_planes=INV_PLANES, kchunk=KC)
    out = pl.pallas_call(
        kernel,
        out_shape=jax.ShapeDtypeStruct((N, out_dim, M), jnp.float32),
        grid_spec=pltpu.PrefetchScalarGridSpec(
            num_scalar_prefetch=0,
            grid=(N, M // TM, HW // KC),
            in_specs=[
                pl.BlockSpec((1, 3, TM), lambda b, t, k: (b, 0, t)),
                pl.BlockSpec((1, n_planes, C, KC), lambda b, t, k: (b, 0, 0, k)),
                pl.BlockSpec((hidden, C), lambda b, t, k: (0, 0)),
                pl.BlockSpec((hidden, 1), lambda b, t, k: (0, 0)),
                pl.BlockSpec((out_dim, hidden), lambda b, t, k: (0, 0)),
                pl.BlockSpec((out_dim, 1), lambda b, t, k: (0, 0)),
            ],
            out_specs=pl.BlockSpec((1, out_dim, TM), lambda b, t, k: (b, 0, t)),
            scratch_shapes=[pltpu.VMEM((C, TM), jnp.float32)],
        ),
        compiler_params=pltpu.CompilerParams(
            dimension_semantics=("parallel", "parallel", "arbitrary"),
            vmem_limit_bytes=64 * 1024 * 1024),
    )(coords_t, feat, dec_t['w1t'], dec_t['b1t'], dec_t['w2t'], dec_t['b2t'])

    # TODO(synk): density_noise > 0 branch omitted (options set density_noise=0)
    rgb = jnp.transpose(out[:, 1:, :], (0, 2, 1))      # (N, M, 3)
    sigma = jnp.transpose(out[:, 0:1, :], (0, 2, 1))   # (N, M, 1)
    return {'rgb': rgb, 'sigma': sigma}


# ----------------------------------------------------------------------------
# Kernel 2: MipRayMarcher2  (rays on lanes, grid over (N, R // TR))
# ----------------------------------------------------------------------------
def _raymarch_kernel(colors_ref, dens_ref, depths_ref, clamp_ref,
                     rgb_ref, depth_ref, w_ref):
    colors = colors_ref[0]            # (C, S, TR)
    dens = dens_ref[0]                # (S, TR)
    depths = depths_ref[0]            # (S, TR)
    S = dens.shape[0]
    TR = dens.shape[1]

    deltas = depths[1:, :] - depths[:-1, :]                      # (S-1, TR)
    colors_mid = 0.5 * (colors[:, :-1, :] + colors[:, 1:, :])    # (C, S-1, TR)
    dens_mid = 0.5 * (dens[:-1, :] + dens[1:, :])
    depths_mid = 0.5 * (depths[:-1, :] + depths[1:, :])

    dens_mid = _softplus(dens_mid - 1.0)          # clamp_mode == 'softplus'
    alpha = 1.0 - jnp.exp(-(dens_mid * deltas))   # (S-1, TR)
    shifted = 1.0 - alpha + 1e-10

    # transmittance cumprod, lane-major running product (S is small / static)
    running = jnp.ones((1, TR), jnp.float32)
    w_rows = []
    for s in range(S - 1):
        w_rows.append(alpha[s:s + 1, :] * running)
        running = running * shifted[s:s + 1, :]
    weights = jnp.concatenate(w_rows, axis=0)     # (S-1, TR)

    comp_rgb = jnp.sum(weights[None] * colors_mid, axis=1)             # (C, TR)
    w_total = jnp.sum(weights, axis=0, keepdims=True)                  # (1, TR)
    comp_depth = (jnp.sum(weights * depths_mid, axis=0, keepdims=True)
                  * pl.reciprocal(w_total, approx=True))
    comp_depth = jnp.where(comp_depth != comp_depth, jnp.inf, comp_depth)   # nan -> inf
    comp_depth = jnp.clip(comp_depth, clamp_ref[0], clamp_ref[1])
    comp_rgb = comp_rgb * 2.0 - 1.0               # white_back == False

    rgb_ref[0] = comp_rgb
    depth_ref[0] = comp_depth
    w_ref[0] = weights


def mip_ray_marcher(colors, densities, depths, options):
    assert options['clamp_mode'] == 'softplus'
    N, R, S, C = colors.shape
    TR = R if R < 128 else 128
    assert R % TR == 0, (R, TR)

    colors_t = jnp.transpose(colors, (0, 3, 2, 1)).astype(jnp.float32)         # (N, C, S, R)
    dens_t = jnp.transpose(densities[..., 0], (0, 2, 1)).astype(jnp.float32)   # (N, S, R)
    depths_t = jnp.transpose(depths[..., 0], (0, 2, 1)).astype(jnp.float32)    # (N, S, R)
    clamp = jnp.stack([jnp.min(depths), jnp.max(depths)]).astype(jnp.float32)  # (2,)

    rgb_t, depth_t, w_t = pl.pallas_call(
        _raymarch_kernel,
        out_shape=(jax.ShapeDtypeStruct((N, C, R), jnp.float32),
                   jax.ShapeDtypeStruct((N, 1, R), jnp.float32),
                   jax.ShapeDtypeStruct((N, S - 1, R), jnp.float32)),
        grid_spec=pltpu.PrefetchScalarGridSpec(
            num_scalar_prefetch=0,
            grid=(N, R // TR),
            in_specs=[
                pl.BlockSpec((1, C, S, TR), lambda b, r: (b, 0, 0, r)),
                pl.BlockSpec((1, S, TR), lambda b, r: (b, 0, r)),
                pl.BlockSpec((1, S, TR), lambda b, r: (b, 0, r)),
                pl.BlockSpec(memory_space=pltpu.MemorySpace.SMEM),
            ],
            out_specs=[
                pl.BlockSpec((1, C, TR), lambda b, r: (b, 0, r)),
                pl.BlockSpec((1, 1, TR), lambda b, r: (b, 0, r)),
                pl.BlockSpec((1, S - 1, TR), lambda b, r: (b, 0, r)),
            ],
        ),
        compiler_params=pltpu.CompilerParams(
            dimension_semantics=("parallel", "parallel"),
            vmem_limit_bytes=64 * 1024 * 1024),
    )(colors_t, dens_t, depths_t, clamp)

    rgb = jnp.transpose(rgb_t, (0, 2, 1))                    # (N, R, C)
    depth = jnp.transpose(depth_t, (0, 2, 1))                # (N, R, 1)
    weights = jnp.transpose(w_t, (0, 2, 1))[..., None]       # (N, R, S-1, 1)
    return rgb, depth, weights


# ----------------------------------------------------------------------------
# Sampling helpers (plain JAX glue — data-dependent sort / gather / searchsorted)
# ----------------------------------------------------------------------------
def sample_stratified(key, ray_origins, ray_start, ray_end, depth_resolution,
                      disparity_space_sampling=False):
    # TODO(synk): disparity_space_sampling and tensor-valued ray_start branches unused here
    assert not disparity_space_sampling
    N, M, _ = ray_origins.shape
    t = jnp.linspace(0.0, 1.0, depth_resolution, dtype=jnp.float32)
    depths = ray_start + (ray_end - ray_start) * t                      # traced endpoints OK
    depths = jnp.broadcast_to(depths.reshape(1, 1, depth_resolution, 1),
                              (N, M, depth_resolution, 1))
    depth_delta = (ray_end - ray_start) / (depth_resolution - 1)
    depths = depths + jax.random.uniform(key, (N, M, depth_resolution, 1),
                                         jnp.float32) * depth_delta
    return depths


def sample_pdf(key, bins, weights, N_importance, det=False, eps=1e-5):
    N_rays, N_samples_ = weights.shape
    weights = weights + eps
    pdf = weights / jnp.sum(weights, axis=-1, keepdims=True)
    cdf = jnp.cumsum(pdf, axis=-1)
    cdf = jnp.concatenate([jnp.zeros_like(cdf[:, :1]), cdf], axis=-1)
    if det:
        u = jnp.broadcast_to(jnp.linspace(0.0, 1.0, N_importance, dtype=cdf.dtype),
                             (N_rays, N_importance))
    else:
        u = jax.random.uniform(key, (N_rays, N_importance), cdf.dtype)
    inds = jax.vmap(lambda c, uu: jnp.searchsorted(c, uu, side='right'))(cdf, u)
    below = jnp.maximum(inds - 1, 0)
    above = jnp.minimum(inds, N_samples_)
    inds_sampled = jnp.stack([below, above], axis=-1).reshape(N_rays, 2 * N_importance)
    cdf_g = jnp.take_along_axis(cdf, inds_sampled, axis=1).reshape(N_rays, N_importance, 2)
    bins_g = jnp.take_along_axis(bins, inds_sampled, axis=1).reshape(N_rays, N_importance, 2)
    denom = cdf_g[..., 1] - cdf_g[..., 0]
    denom = jnp.where(denom < eps, 1.0, denom)
    samples = bins_g[..., 0] + (u - cdf_g[..., 0]) / denom * (bins_g[..., 1] - bins_g[..., 0])
    return samples


def sample_importance(key, z_vals, weights, N_importance, det):
    B, R, S, _ = z_vals.shape
    z = z_vals.reshape(B * R, S)
    w = weights.reshape(B * R, -1)                              # (B*R, S-1)
    wp = jnp.pad(w, ((0, 0), (1, 1)), constant_values=-jnp.inf)
    wmax = jnp.maximum(wp[:, :-1], wp[:, 1:])                   # max_pool1d(2,1,pad=1) -> S
    wavg = 0.5 * (wmax[:, :-1] + wmax[:, 1:])                   # avg_pool1d(2,1)      -> S-1
    w = wavg + 0.01
    z_mid = 0.5 * (z[:, :-1] + z[:, 1:])
    samples = sample_pdf(key, z_mid, w[:, 1:-1], N_importance, det=det)
    return samples.reshape(B, R, N_importance, 1)


def unify_samples(d1, c1, s1, d2, c2, s2):
    all_d = jnp.concatenate([d1, d2], axis=-2)
    all_c = jnp.concatenate([c1, c2], axis=-2)
    all_s = jnp.concatenate([s1, s2], axis=-2)
    idx = jnp.argsort(all_d, axis=-2)
    all_d = jnp.take_along_axis(all_d, idx, axis=-2)
    all_c = jnp.take_along_axis(all_c, jnp.broadcast_to(idx, all_c.shape), axis=-2)
    all_s = jnp.take_along_axis(all_s, idx, axis=-2)
    return all_d, all_c, all_s


# ----------------------------------------------------------------------------
# ImportanceRenderer_bsMotion.forward (jit-able end-to-end, no host sync)
# ----------------------------------------------------------------------------
def importance_renderer_forward(planes, decoder, ray_origins, ray_directions, key,
                                rendering_options, evaluation=True):
    N, R, _ = ray_origins.shape
    _, n_planes, C, H, W = planes.shape

    # Hoisted repack: NCHW planes -> (N, 3, C, H*W) channel-first (pure reshape, done once)
    feat = planes.reshape(N, n_planes, C, H * W).astype(jnp.float32)
    dec_t = {
        'w1t': jnp.transpose(decoder['w1']).astype(jnp.float32),      # (hidden, C)
        'b1t': decoder['b1'].reshape(-1, 1).astype(jnp.float32),      # (hidden, 1)
        'w2t': jnp.transpose(decoder['w2']).astype(jnp.float32),      # (out, hidden)
        'b2t': decoder['b2'].reshape(-1, 1).astype(jnp.float32),      # (out, 1)
    }

    dist = jnp.mean(jnp.linalg.norm(ray_origins, axis=-1))            # traced, no .item()
    ray_start = dist - 0.45
    ray_end = dist + 0.6
    k1, k2 = jax.random.split(key)

    S = rendering_options['depth_resolution']
    depths_coarse = sample_stratified(k1, ray_origins, ray_start, ray_end, S,
                                      rendering_options['disparity_space_sampling'])

    sample_coords = (ray_origins[:, :, None, :]
                     + depths_coarse * ray_directions[:, :, None, :]).reshape(N, -1, 3)
    # view directions are ignored by the OSG-style decoder (not passed to the kernel)
    out = run_model(feat, H, W, dec_t, sample_coords, rendering_options)
    colors_coarse = out['rgb'].reshape(N, R, S, -1)
    densities_coarse = out['sigma'].reshape(N, R, S, 1)

    N_importance = rendering_options['depth_resolution_importance']
    if N_importance > 0:
        _, _, weights = mip_ray_marcher(colors_coarse, densities_coarse,
                                        depths_coarse, rendering_options)
        depths_fine = sample_importance(k2, depths_coarse, weights, N_importance,
                                        det=evaluation)
        sample_coords = (ray_origins[:, :, None, :]
                         + depths_fine * ray_directions[:, :, None, :]).reshape(N, -1, 3)
        out = run_model(feat, H, W, dec_t, sample_coords, rendering_options)
        colors_fine = out['rgb'].reshape(N, R, N_importance, -1)
        densities_fine = out['sigma'].reshape(N, R, N_importance, 1)

        all_d, all_c, all_s = unify_samples(depths_coarse, colors_coarse, densities_coarse,
                                            depths_fine, colors_fine, densities_fine)
        rgb_final, depth_final, weights = mip_ray_marcher(all_c, all_s, all_d,
                                                          rendering_options)
    else:
        rgb_final, depth_final, weights = mip_ray_marcher(colors_coarse, densities_coarse,
                                                          depths_coarse, rendering_options)
    return rgb_final, depth_final, weights.sum(axis=2)


# ----------------------------------------------------------------------------
if __name__ == "__main__":
    key = jax.random.PRNGKey(0)
    kp, ko, kd, kw1, kw2, kfwd = jax.random.split(key, 6)

    N, n_planes, C, H, W = 2, 3, 8, 16, 16    # triplane features
    R = 16                                     # rays per batch element
    HIDDEN = 32                                # decoder hidden width

    planes = 0.5 * jax.random.normal(kp, (N, n_planes, C, H, W), jnp.float32)

    cam = jnp.array([0.3, 0.2, 2.65], jnp.float32)
    ray_origins = (jnp.broadcast_to(cam, (N, R, 3))
                   + 0.01 * jax.random.normal(ko, (N, R, 3), jnp.float32))
    d = jnp.concatenate([0.3 * jax.random.normal(kd, (N, R, 2), jnp.float32),
                         -jnp.ones((N, R, 1), jnp.float32)], axis=-1)
    ray_directions = d / jnp.linalg.norm(d, axis=-1, keepdims=True)

    # deterministic synthetic decoder parameters (OSGDecoder-like MLP)
    decoder = {
        'w1': 0.2 * jax.random.normal(kw1, (C, HIDDEN), jnp.float32),
        'b1': jnp.zeros((1, HIDDEN), jnp.float32),
        'w2': 0.2 * jax.random.normal(kw2, (HIDDEN, 1 + RGB_DIM), jnp.float32),
        'b2': jnp.zeros((1, 1 + RGB_DIM), jnp.float32),
    }

    rendering_options = dict(depth_resolution=8, depth_resolution_importance=8,
                             disparity_space_sampling=False, box_warp=2.0,
                             clamp_mode='softplus', density_noise=0, white_back=False)

    fwd = jax.jit(functools.partial(importance_renderer_forward,
                                    rendering_options=rendering_options,
                                    evaluation=True))

    rgb, depth, wsum = fwd(planes, decoder, ray_origins, ray_directions, kfwd)
    jax.block_until_ready((rgb, depth, wsum))

    assert rgb.shape == (N, R, RGB_DIM)
    assert depth.shape == (N, R, 1)
    assert wsum.shape == (N, R, 1)
    assert bool(jnp.all(jnp.isfinite(rgb))) and bool(jnp.all(jnp.isfinite(depth)))
    print("KERNEL_OK")
</pallas_src>

<mosaic_0001>
module attributes {stable_mosaic.version = 11 : i64} {
  func.func private @main(%arg0: i32) attributes {dimension_semantics = [#tpu.dimension_semantics<core_parallel>], iteration_bounds = array<i64: 2>, tpu.core_type = #tpu.core_type<sc_scalar_subcore>, window_params = []} {
    return
  }
}

module attributes {stable_mosaic.version = 11 : i64} {
  func.func private @main(%arg0: i32) attributes {dimension_semantics = [#tpu.dimension_semantics<core_parallel>], iteration_bounds = array<i64: 2>, tpu.core_type = #tpu.core_type<sc_scalar_subcore>, window_params = []} {
    return
  }
}

module attributes {stable_mosaic.version = 11 : i64} {
  func.func @_raymarch_kernel(%arg0: i32, %arg1: i32, %arg2: memref<1x3x8x16xf32, #tpu.memory_space<vmem>>, %arg3: memref<1x8x16xf32, #tpu.memory_space<vmem>>, %arg4: memref<1x8x16xf32, #tpu.memory_space<vmem>>, %arg5: memref<2xf32, #tpu.memory_space<smem>>, %arg6: memref<1x3x16xf32, #tpu.memory_space<vmem>>, %arg7: memref<1x1x16xf32, #tpu.memory_space<vmem>>, %arg8: memref<1x7x16xf32, #tpu.memory_space<vmem>>) attributes {dimension_semantics = [#tpu.dimension_semantics<parallel>, #tpu.dimension_semantics<parallel>], iteration_bounds = array<i64: 2, 1>, scalar_prefetch = 0 : i64, scratch_operands = 0 : i64, tpu.core_type = #tpu.core_type<tc>, window_params = [{transform_indices = @transform_0, window_bounds = array<i64: 1, 3, 8, 16>}, {transform_indices = @transform_1, window_bounds = array<i64: 1, 8, 16>}, {transform_indices = @transform_2, window_bounds = array<i64: 1, 8, 16>}, {transform_indices = @transform_3, window_bounds = array<i64: 2>}, {transform_indices = @transform_4, window_bounds = array<i64: 1, 3, 16>}, {transform_indices = @transform_5, window_bounds = array<i64: 1, 1, 16>}, {transform_indices = @transform_6, window_bounds = array<i64: 1, 7, 16>}]} {
    %c0 = arith.constant 0 : index
    %c0_0 = arith.constant 0 : index
    %c0_1 = arith.constant 0 : index
    %c0_2 = arith.constant 0 : index
    %0 = vector.load %arg2[%c0, %c0_0, %c0_1, %c0_2] : memref<1x3x8x16xf32, #tpu.memory_space<vmem>>, vector<1x3x8x16xf32>
    %1 = vector.shape_cast %0 : vector<1x3x8x16xf32> to vector<3x8x16xf32>
    %c0_3 = arith.constant 0 : index
    %c0_4 = arith.constant 0 : index
    %c0_5 = arith.constant 0 : index
    %2 = vector.load %arg3[%c0_3, %c0_4, %c0_5] : memref<1x8x16xf32, #tpu.memory_space<vmem>>, vector<1x8x16xf32>
    %3 = vector.shape_cast %2 : vector<1x8x16xf32> to vector<8x16xf32>
    %c0_6 = arith.constant 0 : index
    %c0_7 = arith.constant 0 : index
    %c0_8 = arith.constant 0 : index
    %4 = vector.load %arg4[%c0_6, %c0_7, %c0_8] : memref<1x8x16xf32, #tpu.memory_space<vmem>>, vector<1x8x16xf32>
    %5 = vector.shape_cast %4 : vector<1x8x16xf32> to vector<8x16xf32>
    %6 = vector.extract_strided_slice %5 {offsets = [1, 0], sizes = [7, 16], strides = [1, 1]} : vector<8x16xf32> to vector<7x16xf32>
    %7 = vector.extract_strided_slice %5 {offsets = [0, 0], sizes = [7, 16], strides = [1, 1]} : vector<8x16xf32> to vector<7x16xf32>
    %8 = arith.subf %6, %7 : vector<7x16xf32>
    %9 = vector.extract_strided_slice %1 {offsets = [0, 0, 0], sizes = [3, 7, 16], strides = [1, 1, 1]} : vector<3x8x16xf32> to vector<3x7x16xf32>
    %10 = vector.extract_strided_slice %1 {offsets = [0, 1, 0], sizes = [3, 7, 16], strides = [1, 1, 1]} : vector<3x8x16xf32> to vector<3x7x16xf32>
    %11 = arith.addf %9, %10 : vector<3x7x16xf32>
    %cst = arith.constant 5.000000e-01 : f32
    %12 = vector.broadcast %cst : f32 to vector<3x7x16xf32>
    %13 = arith.mulf %12, %11 : vector<3x7x16xf32>
    %14 = vector.extract_strided_slice %3 {offsets = [0, 0], sizes = [7, 16], strides = [1, 1]} : vector<8x16xf32> to vector<7x16xf32>
    %15 = vector.extract_strided_slice %3 {offsets = [1, 0], sizes = [7, 16], strides = [1, 1]} : vector<8x16xf32> to vector<7x16xf32>
    %16 = arith.addf %14, %15 : vector<7x16xf32>
    %cst_9 = arith.constant 5.000000e-01 : f32
    %17 = vector.broadcast %cst_9 : f32 to vector<7x16xf32>
    %18 = arith.mulf %17, %16 : vector<7x16xf32>
    %19 = vector.extract_strided_slice %5 {offsets = [0, 0], sizes = [7, 16], strides = [1, 1]} : vector<8x16xf32> to vector<7x16xf32>
    %20 = vector.extract_strided_slice %5 {offsets = [1, 0], sizes = [7, 16], strides = [1, 1]} : vector<8x16xf32> to vector<7x16xf32>
    %21 = arith.addf %19, %20 : vector<7x16xf32>
    %cst_10 = arith.constant 5.000000e-01 : f32
    %22 = vector.broadcast %cst_10 : f32 to vector<7x16xf32>
    %23 = arith.mulf %22, %21 : vector<7x16xf32>
    %cst_11 = arith.constant 1.000000e+00 : f32
    %24 = vector.broadcast %cst_11 : f32 to vector<7x16xf32>
    %25 = arith.subf %18, %24 : vector<7x16xf32>
    %cst_12 = arith.constant 2.000000e+01 : f32
    %26 = vector.broadcast %cst_12 : f32 to vector<7x16xf32>
    %27 = arith.cmpf ogt, %25, %26 : vector<7x16xf32>
    %cst_13 = arith.constant 2.000000e+01 : f32
    %28 = vector.broadcast %cst_13 : f32 to vector<7x16xf32>
    %29 = arith.minimumf %25, %28 : vector<7x16xf32>
    %30 = math.exp %29 : vector<7x16xf32>
    %cst_14 = arith.constant 1.000000e+00 : f32
    %31 = vector.broadcast %cst_14 : f32 to vector<7x16xf32>
    %32 = arith.addf %31, %30 : vector<7x16xf32>
    %33 = math.log %32 : vector<7x16xf32>
    %34 = arith.select %27, %25, %33 : vector<7x16xi1>, vector<7x16xf32>
    %35 = arith.mulf %34, %8 : vector<7x16xf32>
    %cst_15 = arith.constant 0.000000e+00 : f32
    %36 = vector.broadcast %cst_15 : f32 to vector<7x16xf32>
    %37 = arith.subf %36, %35 : vector<7x16xf32>
    %38 = math.exp %37 : vector<7x16xf32>
    %cst_16 = arith.constant 1.000000e+00 : f32
    %39 = vector.broadcast %cst_16 : f32 to vector<7x16xf32>
    %40 = arith.subf %39, %38 : vector<7x16xf32>
    %cst_17 = arith.constant 1.000000e+00 : f32
    %41 = vector.broadcast %cst_17 : f32 to vector<7x16xf32>
    %42 = arith.subf %41, %40 : vector<7x16xf32>
    %cst_18 = arith.constant 1.000000e-10 : f32
    %43 = vector.broadcast %cst_18 : f32 to vector<7x16xf32>
    %44 = arith.addf %42, %43 : vector<7x16xf32>
    %cst_19 = arith.constant 1.000000e+00 : f32
    %45 = vector.broadcast %cst_19 : f32 to vector<1x16xf32>
    %46 = vector.extract_strided_slice %40 {offsets = [0, 0], sizes = [1, 16], strides = [1, 1]} : vector<7x16xf32> to vector<1x16xf32>
    %47 = arith.mulf %46, %45 : vector<1x16xf32>
    %48 = vector.extract_strided_slice %44 {offsets = [0, 0], sizes = [1, 16], strides = [1, 1]} : vector<7x16xf32> to vector<1x16xf32>
    %49 = arith.mulf %45, %48 : vector<1x16xf32>
    %50 = vector.extract_strided_slice %40 {offsets = [1, 0], sizes = [1, 16], strides = [1, 1]} : vector<7x16xf32> to vector<1x16xf32>
    %51 = arith.mulf %50, %49 : vector<1x16xf32>
    %52 = vector.extract_strided_slice %44 {offsets = [1, 0], sizes = [1, 16], strides = [1, 1]} : vector<7x16xf32> to vector<1x16xf32>
    %53 = arith.mulf %49, %52 : vector<1x16xf32>
    %54 = vector.extract_strided_slice %40 {offsets = [2, 0], sizes = [1, 16], strides = [1, 1]} : vector<7x16xf32> to vector<1x16xf32>
    %55 = arith.mulf %54, %53 : vector<1x16xf32>
    %56 = vector.extract_strided_slice %44 {offsets = [2, 0], sizes = [1, 16], strides = [1, 1]} : vector<7x16xf32> to vector<1x16xf32>
    %57 = arith.mulf %53, %56 : vector<1x16xf32>
    %58 = vector.extract_strided_slice %40 {offsets = [3, 0], sizes = [1, 16], strides = [1, 1]} : vector<7x16xf32> to vector<1x16xf32>
    %59 = arith.mulf %58, %57 : vector<1x16xf32>
    %60 = vector.extract_strided_slice %44 {offsets = [3, 0], sizes = [1, 16], strides = [1, 1]} : vector<7x16xf32> to vector<1x16xf32>
    %61 = arith.mulf %57, %60 : vector<1x16xf32>
    %62 = vector.extract_strided_slice %40 {offsets = [4, 0], sizes = [1, 16], strides = [1, 1]} : vector<7x16xf32> to vector<1x16xf32>
    %63 = arith.mulf %62, %61 : vector<1x16xf32>
    %64 = vector.extract_strided_slice %44 {offsets = [4, 0], sizes = [1, 16], strides = [1, 1]} : vector<7x16xf32> to vector<1x16xf32>
    %65 = arith.mulf %61, %64 : vector<1x16xf32>
    %66 = vector.extract_strided_slice %40 {offsets = [5, 0], sizes = [1, 16], strides = [1, 1]} : vector<7x16xf32> to vector<1x16xf32>
    %67 = arith.mulf %66, %65 : vector<1x16xf32>
    %68 = vector.extract_strided_slice %44 {offsets = [5, 0], sizes = [1, 16], strides = [1, 1]} : vector<7x16xf32> to vector<1x16xf32>
    %69 = arith.mulf %65, %68 : vector<1x16xf32>
    %70 = vector.extract_strided_slice %40 {offsets = [6, 0], sizes = [1, 16], strides = [1, 1]} : vector<7x16xf32> to vector<1x16xf32>
    %71 = arith.mulf %70, %69 : vector<1x16xf32>
    %72 = tpu.concatenate %47, %51, %55, %59, %63, %67, %71 in 0 : vector<1x16xf32>, vector<1x16xf32>, vector<1x16xf32>, vector<1x16xf32>, vector<1x16xf32>, vector<1x16xf32>, vector<1x16xf32> -> vector<7x16xf32>
    %73 = vector.shape_cast %72 : vector<7x16xf32> to vector<1x7x16xf32>
    %74 = vector.broadcast %73 : vector<1x7x16xf32> to vector<3x7x16xf32>
    %75 = arith.mulf %74, %13 : vector<3x7x16xf32>
    %cst_20 = arith.constant dense<0.000000e+00> : vector<3x16xf32>
    %76 = vector.multi_reduction <add>, %75, %cst_20 [1] : vector<3x7x16xf32> to vector<3x16xf32>
    %cst_21 = arith.constant dense<0.000000e+00> : vector<16xf32>
    %77 = vector.multi_reduction <add>, %72, %cst_21 [0] : vector<7x16xf32> to vector<16xf32>
    %78 = vector.shape_cast %77 : vector<16xf32> to vector<1x16xf32>
    %79 = arith.mulf %72, %23 : vector<7x16xf32>
    %cst_22 = arith.constant dense<0.000000e+00> : vector<16xf32>
    %80 = vector.multi_reduction <add>, %79, %cst_22 [0] : vector<7x16xf32> to vector<16xf32>
    %81 = vector.shape_cast %80 : vector<16xf32> to vector<1x16xf32>
    %82 = tpu.reciprocal %78 {approx = true} : vector<1x16xf32> -> vector<1x16xf32>
    %83 = arith.mulf %81, %82 : vector<1x16xf32>
    %84 = arith.cmpf one, %83, %83 : vector<1x16xf32>
    %cst_23 = arith.constant 0x7F800000 : f32
    %85 = vector.broadcast %cst_23 : f32 to vector<1x16xf32>
    %86 = arith.select %84, %85, %83 : vector<1x16xi1>, vector<1x16xf32>
    %c0_24 = arith.constant 0 : index
    %87 = memref.load %arg5[%c0_24] : memref<2xf32, #tpu.memory_space<smem>>
    %c1 = arith.constant 1 : index
    %88 = memref.load %arg5[%c1] : memref<2xf32, #tpu.memory_space<smem>>
    %89 = vector.broadcast %87 : f32 to vector<1x16xf32>
    %90 = arith.maximumf %89, %86 : vector<1x16xf32>
    %91 = vector.broadcast %88 : f32 to vector<1x16xf32>
    %92 = arith.minimumf %91, %90 : vector<1x16xf32>
    %cst_25 = arith.constant 2.000000e+00 : f32
    %93 = vector.broadcast %cst_25 : f32 to vector<3x16xf32>
    %94 = arith.mulf %76, %93 : vector<3x16xf32>
    %cst_26 = arith.constant 1.000000e+00 : f32
    %95 = vector.broadcast %cst_26 : f32 to vector<3x16xf32>
    %96 = arith.subf %94, %95 : vector<3x16xf32>
    %c0_27 = arith.constant 0 : index
    %c0_28 = arith.constant 0 : index
    %c0_29 = arith.constant 0 : index
    %97 = vector.load %arg6[%c0_27, %c0_28, %c0_29] : memref<1x3x16xf32, #tpu.memory_space<vmem>>, vector<1x3x16xf32>
    %98 = vector.shape_cast %97 : vector<1x3x16xf32> to vector<3x16xf32>
    %99 = vector.shape_cast %96 : vector<3x16xf32> to vector<1x3x16xf32>
    tpu.vector_store %arg6[%c0_27, %c0_28, %c0_29], %99 {strides = array<i32>} : memref<1x3x16xf32, #tpu.memory_space<vmem>>, vector<1x3x16xf32>,
    %c0_30 = arith.constant 0 : index
    %c0_31 = arith.constant 0 : index
    %c0_32 = arith.constant 0 : index
    %100 = vector.load %arg7[%c0_30, %c0_31, %c0_32] : memref<1x1x16xf32, #tpu.memory_space<vmem>>, vector<1x1x16xf32>
    %101 = vector.shape_cast %100 : vector<1x1x16xf32> to vector<1x16xf32>
    %102 = vector.shape_cast %92 : vector<1x16xf32> to vector<1x1x16xf32>
    tpu.vector_store %arg7[%c0_30, %c0_31, %c0_32], %102 {strides = array<i32>} : memref<1x1x16xf32, #tpu.memory_space<vmem>>, vector<1x1x16xf32>,
    %c0_33 = arith.constant 0 : index
    %c0_34 = arith.constant 0 : index
    %c0_35 = arith.constant 0 : index
    %103 = vector.load %arg8[%c0_33, %c0_34, %c0_35] : memref<1x7x16xf32, #tpu.memory_space<vmem>>, vector<1x7x16xf32>
    %104 = vector.shape_cast %103 : vector<1x7x16xf32> to vector<7x16xf32>
    %105 = vector.shape_cast %72 : vector<7x16xf32> to vector<1x7x16xf32>
    tpu.vector_store %arg8[%c0_33, %c0_34, %c0_35], %105 {strides = array<i32>} : memref<1x7x16xf32, #tpu.memory_space<vmem>>, vector<1x7x16xf32>,
    return
  }
  func.func @transform_0(%arg0: i32, %arg1: i32) -> (i32, i32, i32, i32) {
    %c0_i32 = arith.constant 0 : i32
    %c0_i32_0 = arith.constant 0 : i32
    %c0_i32_1 = arith.constant 0 : i32
    return %arg0, %c0_i32, %c0_i32_0, %arg1 : i32, i32, i32, i32
  }
  func.func @transform_1(%arg0: i32, %arg1: i32) -> (i32, i32, i32) {
    %c0_i32 = arith.constant 0 : i32
    %c0_i32_0 = arith.constant 0 : i32
    return %arg0, %c0_i32, %arg1 : i32, i32, i32
  }
  func.func @transform_2(%arg0: i32, %arg1: i32) -> (i32, i32, i32) {
    %c0_i32 = arith.constant 0 : i32
    %c0_i32_0 = arith.constant 0 : i32
    return %arg0, %c0_i32, %arg1 : i32, i32, i32
  }
  func.func @transform_3(%arg0: i32, %arg1: i32) -> i32 {
    %c0_i32 = arith.constant 0 : i32
    %c0_i32_0 = arith.constant 0 : i32
    return %c0_i32 : i32
  }
  func.func @transform_4(%arg0: i32, %arg1: i32) -> (i32, i32, i32) {
    %c0_i32 = arith.constant 0 : i32
    %c0_i32_0 = arith.constant 0 : i32
    return %arg0, %c0_i32, %arg1 : i32, i32, i32
  }
  func.func @transform_5(%arg0: i32, %arg1: i32) -> (i32, i32, i32) {
    %c0_i32 = arith.constant 0 : i32
    %c0_i32_0 = arith.constant 0 : i32
    return %arg0, %c0_i32, %arg1 : i32, i32, i32
  }
  func.func @transform_6(%arg0: i32, %arg1: i32) -> (i32, i32, i32) {
    %c0_i32 = arith.constant 0 : i32
    %c0_i32_0 = arith.constant 0 : i32
    return %arg0, %c0_i32, %arg1 : i32, i32, i32
  }
}

module attributes {stable_mosaic.version = 11 : i64} {
  func.func @_triplane_decoder_kernel(%arg0: i32, %arg1: i32, %arg2: i32, %arg3: memref<1x3x128xf32, #tpu.memory_space<vmem>>, %arg4: memref<1x3x8x256xf32, #tpu.memory_space<vmem>>, %arg5: memref<32x8xf32, #tpu.memory_space<vmem>>, %arg6: memref<32x1xf32, #tpu.memory_space<vmem>>, %arg7: memref<4x32xf32, #tpu.memory_space<vmem>>, %arg8: memref<4x1xf32, #tpu.memory_space<vmem>>, %arg9: memref<1x4x128xf32, #tpu.memory_space<vmem>>, %arg10: memref<8x128xf32, #tpu.memory_space<vmem>>) attributes {dimension_semantics = [#tpu.dimension_semantics<parallel>, #tpu.dimension_semantics<parallel>, #tpu.dimension_semantics<arbitrary>], iteration_bounds = array<i64: 2, 1, 1>, scalar_prefetch = 0 : i64, scratch_operands = 1 : i64, tpu.core_type = #tpu.core_type<tc>, window_params = [{transform_indices = @transform_0, window_bounds = array<i64: 1, 3, 128>}, {transform_indices = @transform_1, window_bounds = array<i64: 1, 3, 8, 256>}, {pipeline_mode = #tpu.pipeline_mode<synchronous>, transform_indices = @transform_2, window_bounds = array<i64: 32, 8>}, {pipeline_mode = #tpu.pipeline_mode<synchronous>, transform_indices = @transform_3, window_bounds = array<i64: 32, 1>}, {pipeline_mode = #tpu.pipeline_mode<synchronous>, transform_indices = @transform_4, window_bounds = array<i64: 4, 32>}, {pipeline_mode = #tpu.pipeline_mode<synchronous>, transform_indices = @transform_5, window_bounds = array<i64: 4, 1>}, {transform_indices = @transform_6, window_bounds = array<i64: 1, 4, 128>}]} {
    %c0_i32 = arith.constant 0 : i32
    %0 = arith.cmpi eq, %arg2, %c0_i32 : i32
    %1 = arith.extui %0 : i1 to i32
    %c0_i32_0 = arith.constant 0 : i32
    %2 = arith.cmpi ne, %1, %c0_i32_0 : i32
    scf.if %2 {
      %cst_158 = arith.constant 0.000000e+00 : f32
      %468 = vector.broadcast %cst_158 : f32 to vector<8x128xf32>
      %c0_159 = arith.constant 0 : index
      %c0_160 = arith.constant 0 : index
      %469 = vector.load %arg10[%c0_159, %c0_160] : memref<8x128xf32, #tpu.memory_space<vmem>>, vector<8x128xf32>
      tpu.vector_store %arg10[%c0_159, %c0_160], %468 {strides = array<i32>} : memref<8x128xf32, #tpu.memory_space<vmem>>, vector<8x128xf32>,
    } else {
    }
    %c0 = arith.constant 0 : index
    %c0_1 = arith.constant 0 : index
    %c0_2 = arith.constant 0 : index
    %3 = vector.load %arg3[%c0, %c0_1, %c0_2] : memref<1x3x128xf32, #tpu.memory_space<vmem>>, vector<1x3x128xf32>
    %4 = vector.shape_cast %3 : vector<1x3x128xf32> to vector<3x128xf32>
    %5 = vector.extract_strided_slice %4 {offsets = [0, 0], sizes = [1, 128], strides = [1, 1]} : vector<3x128xf32> to vector<1x128xf32>
    %6 = vector.extract_strided_slice %4 {offsets = [1, 0], sizes = [1, 128], strides = [1, 1]} : vector<3x128xf32> to vector<1x128xf32>
    %7 = vector.extract_strided_slice %4 {offsets = [2, 0], sizes = [1, 128], strides = [1, 1]} : vector<3x128xf32> to vector<1x128xf32>
    %c256_i32 = arith.constant 256 : i32
    %8 = arith.muli %arg2, %c256_i32 : i32
    %9 = tpu.iota {dimensions = array<i32: 0>} : vector<256x128xi32>
    %10 = vector.broadcast %8 : i32 to vector<256x128xi32>
    %11 = arith.addi %9, %10 : vector<256x128xi32>
    %cst = arith.constant 1.000000e+00 : f32
    %12 = vector.broadcast %cst : f32 to vector<1x128xf32>
    %13 = arith.mulf %5, %12 : vector<1x128xf32>
    %cst_3 = arith.constant 0.000000e+00 : f32
    %14 = vector.broadcast %cst_3 : f32 to vector<1x128xf32>
    %15 = arith.mulf %6, %14 : vector<1x128xf32>
    %16 = arith.addf %13, %15 : vector<1x128xf32>
    %cst_4 = arith.constant 0.000000e+00 : f32
    %17 = vector.broadcast %cst_4 : f32 to vector<1x128xf32>
    %18 = arith.mulf %7, %17 : vector<1x128xf32>
    %19 = arith.addf %16, %18 : vector<1x128xf32>
    %cst_5 = arith.constant 0.000000e+00 : f32
    %20 = vector.broadcast %cst_5 : f32 to vector<1x128xf32>
    %21 = arith.mulf %5, %20 : vector<1x128xf32>
    %cst_6 = arith.constant 1.000000e+00 : f32
    %22 = vector.broadcast %cst_6 : f32 to vector<1x128xf32>
    %23 = arith.mulf %6, %22 : vector<1x128xf32>
    %24 = arith.addf %21, %23 : vector<1x128xf32>
    %cst_7 = arith.constant 0.000000e+00 : f32
    %25 = vector.broadcast %cst_7 : f32 to vector<1x128xf32>
    %26 = arith.mulf %7, %25 : vector<1x128xf32>
    %27 = arith.addf %24, %26 : vector<1x128xf32>
    %cst_8 = arith.constant 1.000000e+00 : f32
    %28 = vector.broadcast %cst_8 : f32 to vector<1x128xf32>
    %29 = arith.addf %19, %28 : vector<1x128xf32>
    %cst_9 = arith.constant 1.600000e+01 : f32
    %30 = vector.broadcast %cst_9 : f32 to vector<1x128xf32>
    %31 = arith.mulf %29, %30 : vector<1x128xf32>
    %cst_10 = arith.constant 1.000000e+00 : f32
    %32 = vector.broadcast %cst_10 : f32 to vector<1x128xf32>
    %33 = arith.subf %31, %32 : vector<1x128xf32>
    %cst_11 = arith.constant 5.000000e-01 : f32
    %34 = vector.broadcast %cst_11 : f32 to vector<1x128xf32>
    %35 = arith.mulf %33, %34 : vector<1x128xf32>
    %cst_12 = arith.constant 1.000000e+00 : f32
    %36 = vector.broadcast %cst_12 : f32 to vector<1x128xf32>
    %37 = arith.addf %27, %36 : vector<1x128xf32>
    %cst_13 = arith.constant 1.600000e+01 : f32
    %38 = vector.broadcast %cst_13 : f32 to vector<1x128xf32>
    %39 = arith.mulf %37, %38 : vector<1x128xf32>
    %cst_14 = arith.constant 1.000000e+00 : f32
    %40 = vector.broadcast %cst_14 : f32 to vector<1x128xf32>
    %41 = arith.subf %39, %40 : vector<1x128xf32>
    %cst_15 = arith.constant 5.000000e-01 : f32
    %42 = vector.broadcast %cst_15 : f32 to vector<1x128xf32>
    %43 = arith.mulf %41, %42 : vector<1x128xf32>
    %44 = math.floor %35 : vector<1x128xf32>
    %45 = math.floor %43 : vector<1x128xf32>
    %cst_16 = arith.constant 1.000000e+00 : f32
    %46 = vector.broadcast %cst_16 : f32 to vector<1x128xf32>
    %47 = arith.addf %44, %46 : vector<1x128xf32>
    %cst_17 = arith.constant 1.000000e+00 : f32
    %48 = vector.broadcast %cst_17 : f32 to vector<1x128xf32>
    %49 = arith.addf %45, %48 : vector<1x128xf32>
    %50 = arith.subf %35, %44 : vector<1x128xf32>
    %cst_18 = arith.constant 1.000000e+00 : f32
    %51 = vector.broadcast %cst_18 : f32 to vector<1x128xf32>
    %52 = arith.subf %51, %50 : vector<1x128xf32>
    %53 = arith.subf %43, %45 : vector<1x128xf32>
    %cst_19 = arith.constant 1.000000e+00 : f32
    %54 = vector.broadcast %cst_19 : f32 to vector<1x128xf32>
    %55 = arith.subf %54, %53 : vector<1x128xf32>
    %cst_20 = arith.constant 0.000000e+00 : f32
    %56 = vector.broadcast %cst_20 : f32 to vector<256x128xf32>
    %57 = arith.mulf %55, %52 : vector<1x128xf32>
    %58 = arith.mulf %55, %50 : vector<1x128xf32>
    %59 = arith.mulf %53, %52 : vector<1x128xf32>
    %60 = arith.mulf %53, %50 : vector<1x128xf32>
    %cst_21 = arith.constant 0.000000e+00 : f32
    %61 = vector.broadcast %cst_21 : f32 to vector<1x128xf32>
    %62 = arith.cmpf oge, %44, %61 : vector<1x128xf32>
    %cst_22 = arith.constant 1.500000e+01 : f32
    %63 = vector.broadcast %cst_22 : f32 to vector<1x128xf32>
    %64 = arith.cmpf ole, %44, %63 : vector<1x128xf32>
    %65 = arith.andi %62, %64 : vector<1x128xi1>
    %cst_23 = arith.constant 0.000000e+00 : f32
    %66 = vector.broadcast %cst_23 : f32 to vector<1x128xf32>
    %67 = arith.cmpf oge, %45, %66 : vector<1x128xf32>
    %68 = arith.andi %65, %67 : vector<1x128xi1>
    %cst_24 = arith.constant 1.500000e+01 : f32
    %69 = vector.broadcast %cst_24 : f32 to vector<1x128xf32>
    %70 = arith.cmpf ole, %45, %69 : vector<1x128xf32>
    %71 = arith.andi %68, %70 : vector<1x128xi1>
    %cst_25 = arith.constant 1.600000e+01 : f32
    %72 = vector.broadcast %cst_25 : f32 to vector<1x128xf32>
    %73 = arith.mulf %45, %72 : vector<1x128xf32>
    %74 = arith.addf %73, %44 : vector<1x128xf32>
    %75 = arith.fptosi %74 : vector<1x128xf32> to vector<1x128xi32>
    %76 = vector.broadcast %75 : vector<1x128xi32> to vector<256x128xi32>
    %77 = arith.cmpi eq, %11, %76 : vector<256x128xi32>
    %78 = vector.broadcast %71 : vector<1x128xi1> to vector<256x128xi1>
    %79 = arith.andi %77, %78 : vector<256x128xi1>
    %cst_26 = arith.constant 0.000000e+00 : f32
    %80 = vector.shape_cast %57 : vector<1x128xf32> to vector<1x128xf32>
    %81 = vector.broadcast %80 : vector<1x128xf32> to vector<256x128xf32>
    %82 = vector.broadcast %cst_26 : f32 to vector<256x128xf32>
    %83 = arith.select %79, %81, %82 : vector<256x128xi1>, vector<256x128xf32>
    %84 = arith.addf %56, %83 : vector<256x128xf32>
    %cst_27 = arith.constant 0.000000e+00 : f32
    %85 = vector.broadcast %cst_27 : f32 to vector<1x128xf32>
    %86 = arith.cmpf oge, %47, %85 : vector<1x128xf32>
    %cst_28 = arith.constant 1.500000e+01 : f32
    %87 = vector.broadcast %cst_28 : f32 to vector<1x128xf32>
    %88 = arith.cmpf ole, %47, %87 : vector<1x128xf32>
    %89 = arith.andi %86, %88 : vector<1x128xi1>
    %cst_29 = arith.constant 0.000000e+00 : f32
    %90 = vector.broadcast %cst_29 : f32 to vector<1x128xf32>
    %91 = arith.cmpf oge, %45, %90 : vector<1x128xf32>
    %92 = arith.andi %89, %91 : vector<1x128xi1>
    %cst_30 = arith.constant 1.500000e+01 : f32
    %93 = vector.broadcast %cst_30 : f32 to vector<1x128xf32>
    %94 = arith.cmpf ole, %45, %93 : vector<1x128xf32>
    %95 = arith.andi %92, %94 : vector<1x128xi1>
    %cst_31 = arith.constant 1.600000e+01 : f32
    %96 = vector.broadcast %cst_31 : f32 to vector<1x128xf32>
    %97 = arith.mulf %45, %96 : vector<1x128xf32>
    %98 = arith.addf %97, %47 : vector<1x128xf32>
    %99 = arith.fptosi %98 : vector<1x128xf32> to vector<1x128xi32>
    %100 = vector.broadcast %99 : vector<1x128xi32> to vector<256x128xi32>
    %101 = arith.cmpi eq, %11, %100 : vector<256x128xi32>
    %102 = vector.broadcast %95 : vector<1x128xi1> to vector<256x128xi1>
    %103 = arith.andi %101, %102 : vector<256x128xi1>
    %cst_32 = arith.constant 0.000000e+00 : f32
    %104 = vector.shape_cast %58 : vector<1x128xf32> to vector<1x128xf32>
    %105 = vector.broadcast %104 : vector<1x128xf32> to vector<256x128xf32>
    %106 = vector.broadcast %cst_32 : f32 to vector<256x128xf32>
    %107 = arith.select %103, %105, %106 : vector<256x128xi1>, vector<256x128xf32>
    %108 = arith.addf %84, %107 : vector<256x128xf32>
    %cst_33 = arith.constant 0.000000e+00 : f32
    %109 = vector.broadcast %cst_33 : f32 to vector<1x128xf32>
    %110 = arith.cmpf oge, %44, %109 : vector<1x128xf32>
    %cst_34 = arith.constant 1.500000e+01 : f32
    %111 = vector.broadcast %cst_34 : f32 to vector<1x128xf32>
    %112 = arith.cmpf ole, %44, %111 : vector<1x128xf32>
    %113 = arith.andi %110, %112 : vector<1x128xi1>
    %cst_35 = arith.constant 0.000000e+00 : f32
    %114 = vector.broadcast %cst_35 : f32 to vector<1x128xf32>
    %115 = arith.cmpf oge, %49, %114 : vector<1x128xf32>
    %116 = arith.andi %113, %115 : vector<1x128xi1>
    %cst_36 = arith.constant 1.500000e+01 : f32
    %117 = vector.broadcast %cst_36 : f32 to vector<1x128xf32>
    %118 = arith.cmpf ole, %49, %117 : vector<1x128xf32>
    %119 = arith.andi %116, %118 : vector<1x128xi1>
    %cst_37 = arith.constant 1.600000e+01 : f32
    %120 = vector.broadcast %cst_37 : f32 to vector<1x128xf32>
    %121 = arith.mulf %49, %120 : vector<1x128xf32>
    %122 = arith.addf %121, %44 : vector<1x128xf32>
    %123 = arith.fptosi %122 : vector<1x128xf32> to vector<1x128xi32>
    %124 = vector.broadcast %123 : vector<1x128xi32> to vector<256x128xi32>
    %125 = arith.cmpi eq, %11, %124 : vector<256x128xi32>
    %126 = vector.broadcast %119 : vector<1x128xi1> to vector<256x128xi1>
    %127 = arith.andi %125, %126 : vector<256x128xi1>
    %cst_38 = arith.constant 0.000000e+00 : f32
    %128 = vector.shape_cast %59 : vector<1x128xf32> to vector<1x128xf32>
    %129 = vector.broadcast %128 : vector<1x128xf32> to vector<256x128xf32>
    %130 = vector.broadcast %cst_38 : f32 to vector<256x128xf32>
    %131 = arith.select %127, %129, %130 : vector<256x128xi1>, vector<256x128xf32>
    %132 = arith.addf %108, %131 : vector<256x128xf32>
    %cst_39 = arith.constant 0.000000e+00 : f32
    %133 = vector.broadcast %cst_39 : f32 to vector<1x128xf32>
    %134 = arith.cmpf oge, %47, %133 : vector<1x128xf32>
    %cst_40 = arith.constant 1.500000e+01 : f32
    %135 = vector.broadcast %cst_40 : f32 to vector<1x128xf32>
    %136 = arith.cmpf ole, %47, %135 : vector<1x128xf32>
    %137 = arith.andi %134, %136 : vector<1x128xi1>
    %cst_41 = arith.constant 0.000000e+00 : f32
    %138 = vector.broadcast %cst_41 : f32 to vector<1x128xf32>
    %139 = arith.cmpf oge, %49, %138 : vector<1x128xf32>
    %140 = arith.andi %137, %139 : vector<1x128xi1>
    %cst_42 = arith.constant 1.500000e+01 : f32
    %141 = vector.broadcast %cst_42 : f32 to vector<1x128xf32>
    %142 = arith.cmpf ole, %49, %141 : vector<1x128xf32>
    %143 = arith.andi %140, %142 : vector<1x128xi1>
    %cst_43 = arith.constant 1.600000e+01 : f32
    %144 = vector.broadcast %cst_43 : f32 to vector<1x128xf32>
    %145 = arith.mulf %49, %144 : vector<1x128xf32>
    %146 = arith.addf %145, %47 : vector<1x128xf32>
    %147 = arith.fptosi %146 : vector<1x128xf32> to vector<1x128xi32>
    %148 = vector.broadcast %147 : vector<1x128xi32> to vector<256x128xi32>
    %149 = arith.cmpi eq, %11, %148 : vector<256x128xi32>
    %150 = vector.broadcast %143 : vector<1x128xi1> to vector<256x128xi1>
    %151 = arith.andi %149, %150 : vector<256x128xi1>
    %cst_44 = arith.constant 0.000000e+00 : f32
    %152 = vector.shape_cast %60 : vector<1x128xf32> to vector<1x128xf32>
    %153 = vector.broadcast %152 : vector<1x128xf32> to vector<256x128xf32>
    %154 = vector.broadcast %cst_44 : f32 to vector<256x128xf32>
    %155 = arith.select %151, %153, %154 : vector<256x128xi1>, vector<256x128xf32>
    %156 = arith.addf %132, %155 : vector<256x128xf32>
    %c0_45 = arith.constant 0 : index
    %c0_46 = arith.constant 0 : index
    %157 = vector.load %arg10[%c0_45, %c0_46] : memref<8x128xf32, #tpu.memory_space<vmem>>, vector<8x128xf32>
    %c0_47 = arith.constant 0 : index
    %c0_48 = arith.constant 0 : index
    %c0_49 = arith.constant 0 : index
    %c0_50 = arith.constant 0 : index
    %158 = vector.load %arg4[%c0_47, %c0_48, %c0_49, %c0_50] : memref<1x3x8x256xf32, #tpu.memory_space<vmem>>, vector<1x1x8x256xf32>
    %159 = vector.shape_cast %158 : vector<1x1x8x256xf32> to vector<8x256xf32>
    %cst_51 = arith.constant dense<0.000000e+00> : vector<8x128xf32>
    %160 = tpu.matmul %159, %156, %cst_51 {dimension_numbers = #tpu.dot_dimension_numbers<[1], [0], [0], [1], [0, 0, 1, 1], [], []>} : vector<8x256xf32>, vector<256x128xf32>, vector<8x128xf32> -> vector<8x128xf32>
    %161 = arith.addf %157, %160 : vector<8x128xf32>
    %c0_52 = arith.constant 0 : index
    %c0_53 = arith.constant 0 : index
    %162 = vector.load %arg10[%c0_52, %c0_53] : memref<8x128xf32, #tpu.memory_space<vmem>>, vector<8x128xf32>
    tpu.vector_store %arg10[%c0_52, %c0_53], %161 {strides = array<i32>} : memref<8x128xf32, #tpu.memory_space<vmem>>, vector<8x128xf32>,
    %cst_54 = arith.constant 1.000000e+00 : f32
    %163 = vector.broadcast %cst_54 : f32 to vector<1x128xf32>
    %164 = arith.mulf %5, %163 : vector<1x128xf32>
    %cst_55 = arith.constant 0.000000e+00 : f32
    %165 = vector.broadcast %cst_55 : f32 to vector<1x128xf32>
    %166 = arith.mulf %6, %165 : vector<1x128xf32>
    %167 = arith.addf %164, %166 : vector<1x128xf32>
    %cst_56 = arith.constant 0.000000e+00 : f32
    %168 = vector.broadcast %cst_56 : f32 to vector<1x128xf32>
    %169 = arith.mulf %7, %168 : vector<1x128xf32>
    %170 = arith.addf %167, %169 : vector<1x128xf32>
    %cst_57 = arith.constant 0.000000e+00 : f32
    %171 = vector.broadcast %cst_57 : f32 to vector<1x128xf32>
    %172 = arith.mulf %5, %171 : vector<1x128xf32>
    %cst_58 = arith.constant 0.000000e+00 : f32
    %173 = vector.broadcast %cst_58 : f32 to vector<1x128xf32>
    %174 = arith.mulf %6, %173 : vector<1x128xf32>
    %175 = arith.addf %172, %174 : vector<1x128xf32>
    %cst_59 = arith.constant 1.000000e+00 : f32
    %176 = vector.broadcast %cst_59 : f32 to vector<1x128xf32>
    %177 = arith.mulf %7, %176 : vector<1x128xf32>
    %178 = arith.addf %175, %177 : vector<1x128xf32>
    %cst_60 = arith.constant 1.000000e+00 : f32
    %179 = vector.broadcast %cst_60 : f32 to vector<1x128xf32>
    %180 = arith.addf %170, %179 : vector<1x128xf32>
    %cst_61 = arith.constant 1.600000e+01 : f32
    %181 = vector.broadcast %cst_61 : f32 to vector<1x128xf32>
    %182 = arith.mulf %180, %181 : vector<1x128xf32>
    %cst_62 = arith.constant 1.000000e+00 : f32
    %183 = vector.broadcast %cst_62 : f32 to vector<1x128xf32>
    %184 = arith.subf %182, %183 : vector<1x128xf32>
    %cst_63 = arith.constant 5.000000e-01 : f32
    %185 = vector.broadcast %cst_63 : f32 to vector<1x128xf32>
    %186 = arith.mulf %184, %185 : vector<1x128xf32>
    %cst_64 = arith.constant 1.000000e+00 : f32
    %187 = vector.broadcast %cst_64 : f32 to vector<1x128xf32>
    %188 = arith.addf %178, %187 : vector<1x128xf32>
    %cst_65 = arith.constant 1.600000e+01 : f32
    %189 = vector.broadcast %cst_65 : f32 to vector<1x128xf32>
    %190 = arith.mulf %188, %189 : vector<1x128xf32>
    %cst_66 = arith.constant 1.000000e+00 : f32
    %191 = vector.broadcast %cst_66 : f32 to vector<1x128xf32>
    %192 = arith.subf %190, %191 : vector<1x128xf32>
    %cst_67 = arith.constant 5.000000e-01 : f32
    %193 = vector.broadcast %cst_67 : f32 to vector<1x128xf32>
    %194 = arith.mulf %192, %193 : vector<1x128xf32>
    %195 = math.floor %186 : vector<1x128xf32>
    %196 = math.floor %194 : vector<1x128xf32>
    %cst_68 = arith.constant 1.000000e+00 : f32
    %197 = vector.broadcast %cst_68 : f32 to vector<1x128xf32>
    %198 = arith.addf %195, %197 : vector<1x128xf32>
    %cst_69 = arith.constant 1.000000e+00 : f32
    %199 = vector.broadcast %cst_69 : f32 to vector<1x128xf32>
    %200 = arith.addf %196, %199 : vector<1x128xf32>
    %201 = arith.subf %186, %195 : vector<1x128xf32>
    %cst_70 = arith.constant 1.000000e+00 : f32
    %202 = vector.broadcast %cst_70 : f32 to vector<1x128xf32>
    %203 = arith.subf %202, %201 : vector<1x128xf32>
    %204 = arith.subf %194, %196 : vector<1x128xf32>
    %cst_71 = arith.constant 1.000000e+00 : f32
    %205 = vector.broadcast %cst_71 : f32 to vector<1x128xf32>
    %206 = arith.subf %205, %204 : vector<1x128xf32>
    %cst_72 = arith.constant 0.000000e+00 : f32
    %207 = vector.broadcast %cst_72 : f32 to vector<256x128xf32>
    %208 = arith.mulf %206, %203 : vector<1x128xf32>
    %209 = arith.mulf %206, %201 : vector<1x128xf32>
    %210 = arith.mulf %204, %203 : vector<1x128xf32>
    %211 = arith.mulf %204, %201 : vector<1x128xf32>
    %cst_73 = arith.constant 0.000000e+00 : f32
    %212 = vector.broadcast %cst_73 : f32 to vector<1x128xf32>
    %213 = arith.cmpf oge, %195, %212 : vector<1x128xf32>
    %cst_74 = arith.constant 1.500000e+01 : f32
    %214 = vector.broadcast %cst_74 : f32 to vector<1x128xf32>
    %215 = arith.cmpf ole, %195, %214 : vector<1x128xf32>
    %216 = arith.andi %213, %215 : vector<1x128xi1>
    %cst_75 = arith.constant 0.000000e+00 : f32
    %217 = vector.broadcast %cst_75 : f32 to vector<1x128xf32>
    %218 = arith.cmpf oge, %196, %217 : vector<1x128xf32>
    %219 = arith.andi %216, %218 : vector<1x128xi1>
    %cst_76 = arith.constant 1.500000e+01 : f32
    %220 = vector.broadcast %cst_76 : f32 to vector<1x128xf32>
    %221 = arith.cmpf ole, %196, %220 : vector<1x128xf32>
    %222 = arith.andi %219, %221 : vector<1x128xi1>
    %cst_77 = arith.constant 1.600000e+01 : f32
    %223 = vector.broadcast %cst_77 : f32 to vector<1x128xf32>
    %224 = arith.mulf %196, %223 : vector<1x128xf32>
    %225 = arith.addf %224, %195 : vector<1x128xf32>
    %226 = arith.fptosi %225 : vector<1x128xf32> to vector<1x128xi32>
    %227 = vector.broadcast %226 : vector<1x128xi32> to vector<256x128xi32>
    %228 = arith.cmpi eq, %11, %227 : vector<256x128xi32>
    %229 = vector.broadcast %222 : vector<1x128xi1> to vector<256x128xi1>
    %230 = arith.andi %228, %229 : vector<256x128xi1>
    %cst_78 = arith.constant 0.000000e+00 : f32
    %231 = vector.shape_cast %208 : vector<1x128xf32> to vector<1x128xf32>
    %232 = vector.broadcast %231 : vector<1x128xf32> to vector<256x128xf32>
    %233 = vector.broadcast %cst_78 : f32 to vector<256x128xf32>
    %234 = arith.select %230, %232, %233 : vector<256x128xi1>, vector<256x128xf32>
    %235 = arith.addf %207, %234 : vector<256x128xf32>
    %cst_79 = arith.constant 0.000000e+00 : f32
    %236 = vector.broadcast %cst_79 : f32 to vector<1x128xf32>
    %237 = arith.cmpf oge, %198, %236 : vector<1x128xf32>
    %cst_80 = arith.constant 1.500000e+01 : f32
    %238 = vector.broadcast %cst_80 : f32 to vector<1x128xf32>
    %239 = arith.cmpf ole, %198, %238 : vector<1x128xf32>
    %240 = arith.andi %237, %239 : vector<1x128xi1>
    %cst_81 = arith.constant 0.000000e+00 : f32
    %241 = vector.broadcast %cst_81 : f32 to vector<1x128xf32>
    %242 = arith.cmpf oge, %196, %241 : vector<1x128xf32>
    %243 = arith.andi %240, %242 : vector<1x128xi1>
    %cst_82 = arith.constant 1.500000e+01 : f32
    %244 = vector.broadcast %cst_82 : f32 to vector<1x128xf32>
    %245 = arith.cmpf ole, %196, %244 : vector<1x128xf32>
    %246 = arith.andi %243, %245 : vector<1x128xi1>
    %cst_83 = arith.constant 1.600000e+01 : f32
    %247 = vector.broadcast %cst_83 : f32 to vector<1x128xf32>
    %248 = arith.mulf %196, %247 : vector<1x128xf32>
    %249 = arith.addf %248, %198 : vector<1x128xf32>
    %250 = arith.fptosi %249 : vector<1x128xf32> to vector<1x128xi32>
    %251 = vector.broadcast %250 : vector<1x128xi32> to vector<256x128xi32>
    %252 = arith.cmpi eq, %11, %251 : vector<256x128xi32>
    %253 = vector.broadcast %246 : vector<1x128xi1> to vector<256x128xi1>
    %254 = arith.andi %252, %253 : vector<256x128xi1>
    %cst_84 = arith.constant 0.000000e+00 : f32
    %255 = vector.shape_cast %209 : vector<1x128xf32> to vector<1x128xf32>
    %256 = vector.broadcast %255 : vector<1x128xf32> to vector<256x128xf32>
    %257 = vector.broadcast %cst_84 : f32 to vector<256x128xf32>
    %258 = arith.select %254, %256, %257 : vector<256x128xi1>, vector<256x128xf32>
    %259 = arith.addf %235, %258 : vector<256x128xf32>
    %cst_85 = arith.constant 0.000000e+00 : f32
    %260 = vector.broadcast %cst_85 : f32 to vector<1x128xf32>
    %261 = arith.cmpf oge, %195, %260 : vector<1x128xf32>
    %cst_86 = arith.constant 1.500000e+01 : f32
    %262 = vector.broadcast %cst_86 : f32 to vector<1x128xf32>
    %263 = arith.cmpf ole, %195, %262 : vector<1x128xf32>
    %264 = arith.andi %261, %263 : vector<1x128xi1>
    %cst_87 = arith.constant 0.000000e+00 : f32
    %265 = vector.broadcast %cst_87 : f32 to vector<1x128xf32>
    %266 = arith.cmpf oge, %200, %265 : vector<1x128xf32>
    %267 = arith.andi %264, %266 : vector<1x128xi1>
    %cst_88 = arith.constant 1.500000e+01 : f32
    %268 = vector.broadcast %cst_88 : f32 to vector<1x128xf32>
    %269 = arith.cmpf ole, %200, %268 : vector<1x128xf32>
    %270 = arith.andi %267, %269 : vector<1x128xi1>
    %cst_89 = arith.constant 1.600000e+01 : f32
    %271 = vector.broadcast %cst_89 : f32 to vector<1x128xf32>
    %272 = arith.mulf %200, %271 : vector<1x128xf32>
    %273 = arith.addf %272, %195 : vector<1x128xf32>
    %274 = arith.fptosi %273 : vector<1x128xf32> to vector<1x128xi32>
    %275 = vector.broadcast %274 : vector<1x128xi32> to vector<256x128xi32>
    %276 = arith.cmpi eq, %11, %275 : vector<256x128xi32>
    %277 = vector.broadcast %270 : vector<1x128xi1> to vector<256x128xi1>
    %278 = arith.andi %276, %277 : vector<256x128xi1>
    %cst_90 = arith.constant 0.000000e+00 : f32
    %279 = vector.shape_cast %210 : vector<1x128xf32> to vector<1x128xf32>
    %280 = vector.broadcast %279 : vector<1x128xf32> to vector<256x128xf32>
    %281 = vector.broadcast %cst_90 : f32 to vector<256x128xf32>
    %282 = arith.select %278, %280, %281 : vector<256x128xi1>, vector<256x128xf32>
    %283 = arith.addf %259, %282 : vector<256x128xf32>
    %cst_91 = arith.constant 0.000000e+00 : f32
    %284 = vector.broadcast %cst_91 : f32 to vector<1x128xf32>
    %285 = arith.cmpf oge, %198, %284 : vector<1x128xf32>
    %cst_92 = arith.constant 1.500000e+01 : f32
    %286 = vector.broadcast %cst_92 : f32 to vector<1x128xf32>
    %287 = arith.cmpf ole, %198, %286 : vector<1x128xf32>
    %288 = arith.andi %285, %287 : vector<1x128xi1>
    %cst_93 = arith.constant 0.000000e+00 : f32
    %289 = vector.broadcast %cst_93 : f32 to vector<1x128xf32>
    %290 = arith.cmpf oge, %200, %289 : vector<1x128xf32>
    %291 = arith.andi %288, %290 : vector<1x128xi1>
    %cst_94 = arith.constant 1.500000e+01 : f32
    %292 = vector.broadcast %cst_94 : f32 to vector<1x128xf32>
    %293 = arith.cmpf ole, %200, %292 : vector<1x128xf32>
    %294 = arith.andi %291, %293 : vector<1x128xi1>
    %cst_95 = arith.constant 1.600000e+01 : f32
    %295 = vector.broadcast %cst_95 : f32 to vector<1x128xf32>
    %296 = arith.mulf %200, %295 : vector<1x128xf32>
    %297 = arith.addf %296, %198 : vector<1x128xf32>
    %298 = arith.fptosi %297 : vector<1x128xf32> to vector<1x128xi32>
    %299 = vector.broadcast %298 : vector<1x128xi32> to vector<256x128xi32>
    %300 = arith.cmpi eq, %11, %299 : vector<256x128xi32>
    %301 = vector.broadcast %294 : vector<1x128xi1> to vector<256x128xi1>
    %302 = arith.andi %300, %301 : vector<256x128xi1>
    %cst_96 = arith.constant 0.000000e+00 : f32
    %303 = vector.shape_cast %211 : vector<1x128xf32> to vector<1x128xf32>
    %304 = vector.broadcast %303 : vector<1x128xf32> to vector<256x128xf32>
    %305 = vector.broadcast %cst_96 : f32 to vector<256x128xf32>
    %306 = arith.select %302, %304, %305 : vector<256x128xi1>, vector<256x128xf32>
    %307 = arith.addf %283, %306 : vector<256x128xf32>
    %c0_97 = arith.constant 0 : index
    %c0_98 = arith.constant 0 : index
    %308 = vector.load %arg10[%c0_97, %c0_98] : memref<8x128xf32, #tpu.memory_space<vmem>>, vector<8x128xf32>
    %c0_99 = arith.constant 0 : index
    %c1 = arith.constant 1 : index
    %c0_100 = arith.constant 0 : index
    %c0_101 = arith.constant 0 : index
    %309 = vector.load %arg4[%c0_99, %c1, %c0_100, %c0_101] : memref<1x3x8x256xf32, #tpu.memory_space<vmem>>, vector<1x1x8x256xf32>
    %310 = vector.shape_cast %309 : vector<1x1x8x256xf32> to vector<8x256xf32>
    %cst_102 = arith.constant dense<0.000000e+00> : vector<8x128xf32>
    %311 = tpu.matmul %310, %307, %cst_102 {dimension_numbers = #tpu.dot_dimension_numbers<[1], [0], [0], [1], [0, 0, 1, 1], [], []>} : vector<8x256xf32>, vector<256x128xf32>, vector<8x128xf32> -> vector<8x128xf32>
    %312 = arith.addf %308, %311 : vector<8x128xf32>
    %c0_103 = arith.constant 0 : index
    %c0_104 = arith.constant 0 : index
    %313 = vector.load %arg10[%c0_103, %c0_104] : memref<8x128xf32, #tpu.memory_space<vmem>>, vector<8x128xf32>
    tpu.vector_store %arg10[%c0_103, %c0_104], %312 {strides = array<i32>} : memref<8x128xf32, #tpu.memory_space<vmem>>, vector<8x128xf32>,
    %cst_105 = arith.constant 0.000000e+00 : f32
    %314 = vector.broadcast %cst_105 : f32 to vector<1x128xf32>
    %315 = arith.mulf %5, %314 : vector<1x128xf32>
    %cst_106 = arith.constant 0.000000e+00 : f32
    %316 = vector.broadcast %cst_106 : f32 to vector<1x128xf32>
    %317 = arith.mulf %6, %316 : vector<1x128xf32>
    %318 = arith.addf %315, %317 : vector<1x128xf32>
    %cst_107 = arith.constant 1.000000e+00 : f32
    %319 = vector.broadcast %cst_107 : f32 to vector<1x128xf32>
    %320 = arith.mulf %7, %319 : vector<1x128xf32>
    %321 = arith.addf %318, %320 : vector<1x128xf32>
    %cst_108 = arith.constant 1.000000e+00 : f32
    %322 = vector.broadcast %cst_108 : f32 to vector<1x128xf32>
    %323 = arith.mulf %5, %322 : vector<1x128xf32>
    %cst_109 = arith.constant 0.000000e+00 : f32
    %324 = vector.broadcast %cst_109 : f32 to vector<1x128xf32>
    %325 = arith.mulf %6, %324 : vector<1x128xf32>
    %326 = arith.addf %323, %325 : vector<1x128xf32>
    %cst_110 = arith.constant 0.000000e+00 : f32
    %327 = vector.broadcast %cst_110 : f32 to vector<1x128xf32>
    %328 = arith.mulf %7, %327 : vector<1x128xf32>
    %329 = arith.addf %326, %328 : vector<1x128xf32>
    %cst_111 = arith.constant 1.000000e+00 : f32
    %330 = vector.broadcast %cst_111 : f32 to vector<1x128xf32>
    %331 = arith.addf %321, %330 : vector<1x128xf32>
    %cst_112 = arith.constant 1.600000e+01 : f32
    %332 = vector.broadcast %cst_112 : f32 to vector<1x128xf32>
    %333 = arith.mulf %331, %332 : vector<1x128xf32>
    %cst_113 = arith.constant 1.000000e+00 : f32
    %334 = vector.broadcast %cst_113 : f32 to vector<1x128xf32>
    %335 = arith.subf %333, %334 : vector<1x128xf32>
    %cst_114 = arith.constant 5.000000e-01 : f32
    %336 = vector.broadcast %cst_114 : f32 to vector<1x128xf32>
    %337 = arith.mulf %335, %336 : vector<1x128xf32>
    %cst_115 = arith.constant 1.000000e+00 : f32
    %338 = vector.broadcast %cst_115 : f32 to vector<1x128xf32>
    %339 = arith.addf %329, %338 : vector<1x128xf32>
    %cst_116 = arith.constant 1.600000e+01 : f32
    %340 = vector.broadcast %cst_116 : f32 to vector<1x128xf32>
    %341 = arith.mulf %339, %340 : vector<1x128xf32>
    %cst_117 = arith.constant 1.000000e+00 : f32
    %342 = vector.broadcast %cst_117 : f32 to vector<1x128xf32>
    %343 = arith.subf %341, %342 : vector<1x128xf32>
    %cst_118 = arith.constant 5.000000e-01 : f32
    %344 = vector.broadcast %cst_118 : f32 to vector<1x128xf32>
    %345 = arith.mulf %343, %344 : vector<1x128xf32>
    %346 = math.floor %337 : vector<1x128xf32>
    %347 = math.floor %345 : vector<1x128xf32>
    %cst_119 = arith.constant 1.000000e+00 : f32
    %348 = vector.broadcast %cst_119 : f32 to vector<1x128xf32>
    %349 = arith.addf %346, %348 : vector<1x128xf32>
    %cst_120 = arith.constant 1.000000e+00 : f32
    %350 = vector.broadcast %cst_120 : f32 to vector<1x128xf32>
    %351 = arith.addf %347, %350 : vector<1x128xf32>
    %352 = arith.subf %337, %346 : vector<1x128xf32>
    %cst_121 = arith.constant 1.000000e+00 : f32
    %353 = vector.broadcast %cst_121 : f32 to vector<1x128xf32>
    %354 = arith.subf %353, %352 : vector<1x128xf32>
    %355 = arith.subf %345, %347 : vector<1x128xf32>
    %cst_122 = arith.constant 1.000000e+00 : f32
    %356 = vector.broadcast %cst_122 : f32 to vector<1x128xf32>
    %357 = arith.subf %356, %355 : vector<1x128xf32>
    %cst_123 = arith.constant 0.000000e+00 : f32
    %358 = vector.broadcast %cst_123 : f32 to vector<256x128xf32>
    %359 = arith.mulf %357, %354 : vector<1x128xf32>
    %360 = arith.mulf %357, %352 : vector<1x128xf32>
    %361 = arith.mulf %355, %354 : vector<1x128xf32>
    %362 = arith.mulf %355, %352 : vector<1x128xf32>
    %cst_124 = arith.constant 0.000000e+00 : f32
    %363 = vector.broadcast %cst_124 : f32 to vector<1x128xf32>
    %364 = arith.cmpf oge, %346, %363 : vector<1x128xf32>
    %cst_125 = arith.constant 1.500000e+01 : f32
    %365 = vector.broadcast %cst_125 : f32 to vector<1x128xf32>
    %366 = arith.cmpf ole, %346, %365 : vector<1x128xf32>
    %367 = arith.andi %364, %366 : vector<1x128xi1>
    %cst_126 = arith.constant 0.000000e+00 : f32
    %368 = vector.broadcast %cst_126 : f32 to vector<1x128xf32>
    %369 = arith.cmpf oge, %347, %368 : vector<1x128xf32>
    %370 = arith.andi %367, %369 : vector<1x128xi1>
    %cst_127 = arith.constant 1.500000e+01 : f32
    %371 = vector.broadcast %cst_127 : f32 to vector<1x128xf32>
    %372 = arith.cmpf ole, %347, %371 : vector<1x128xf32>
    %373 = arith.andi %370, %372 : vector<1x128xi1>
    %cst_128 = arith.constant 1.600000e+01 : f32
    %374 = vector.broadcast %cst_128 : f32 to vector<1x128xf32>
    %375 = arith.mulf %347, %374 : vector<1x128xf32>
    %376 = arith.addf %375, %346 : vector<1x128xf32>
    %377 = arith.fptosi %376 : vector<1x128xf32> to vector<1x128xi32>
    %378 = vector.broadcast %377 : vector<1x128xi32> to vector<256x128xi32>
    %379 = arith.cmpi eq, %11, %378 : vector<256x128xi32>
    %380 = vector.broadcast %373 : vector<1x128xi1> to vector<256x128xi1>
    %381 = arith.andi %379, %380 : vector<256x128xi1>
    %cst_129 = arith.constant 0.000000e+00 : f32
    %382 = vector.shape_cast %359 : vector<1x128xf32> to vector<1x128xf32>
    %383 = vector.broadcast %382 : vector<1x128xf32> to vector<256x128xf32>
    %384 = vector.broadcast %cst_129 : f32 to vector<256x128xf32>
    %385 = arith.select %381, %383, %384 : vector<256x128xi1>, vector<256x128xf32>
    %386 = arith.addf %358, %385 : vector<256x128xf32>
    %cst_130 = arith.constant 0.000000e+00 : f32
    %387 = vector.broadcast %cst_130 : f32 to vector<1x128xf32>
    %388 = arith.cmpf oge, %349, %387 : vector<1x128xf32>
    %cst_131 = arith.constant 1.500000e+01 : f32
    %389 = vector.broadcast %cst_131 : f32 to vector<1x128xf32>
    %390 = arith.cmpf ole, %349, %389 : vector<1x128xf32>
    %391 = arith.andi %388, %390 : vector<1x128xi1>
    %cst_132 = arith.constant 0.000000e+00 : f32
    %392 = vector.broadcast %cst_132 : f32 to vector<1x128xf32>
    %393 = arith.cmpf oge, %347, %392 : vector<1x128xf32>
    %394 = arith.andi %391, %393 : vector<1x128xi1>
    %cst_133 = arith.constant 1.500000e+01 : f32
    %395 = vector.broadcast %cst_133 : f32 to vector<1x128xf32>
    %396 = arith.cmpf ole, %347, %395 : vector<1x128xf32>
    %397 = arith.andi %394, %396 : vector<1x128xi1>
    %cst_134 = arith.constant 1.600000e+01 : f32
    %398 = vector.broadcast %cst_134 : f32 to vector<1x128xf32>
    %399 = arith.mulf %347, %398 : vector<1x128xf32>
    %400 = arith.addf %399, %349 : vector<1x128xf32>
    %401 = arith.fptosi %400 : vector<1x128xf32> to vector<1x128xi32>
    %402 = vector.broadcast %401 : vector<1x128xi32> to vector<256x128xi32>
    %403 = arith.cmpi eq, %11, %402 : vector<256x128xi32>
    %404 = vector.broadcast %397 : vector<1x128xi1> to vector<256x128xi1>
    %405 = arith.andi %403, %404 : vector<256x128xi1>
    %cst_135 = arith.constant 0.000000e+00 : f32
    %406 = vector.shape_cast %360 : vector<1x128xf32> to vector<1x128xf32>
    %407 = vector.broadcast %406 : vector<1x128xf32> to vector<256x128xf32>
    %408 = vector.broadcast %cst_135 : f32 to vector<256x128xf32>
    %409 = arith.select %405, %407, %408 : vector<256x128xi1>, vector<256x128xf32>
    %410 = arith.addf %386, %409 : vector<256x128xf32>
    %cst_136 = arith.constant 0.000000e+00 : f32
    %411 = vector.broadcast %cst_136 : f32 to vector<1x128xf32>
    %412 = arith.cmpf oge, %346, %411 : vector<1x128xf32>
    %cst_137 = arith.constant 1.500000e+01 : f32
    %413 = vector.broadcast %cst_137 : f32 to vector<1x128xf32>
    %414 = arith.cmpf ole, %346, %413 : vector<1x128xf32>
    %415 = arith.andi %412, %414 : vector<1x128xi1>
    %cst_138 = arith.constant 0.000000e+00 : f32
    %416 = vector.broadcast %cst_138 : f32 to vector<1x128xf32>
    %417 = arith.cmpf oge, %351, %416 : vector<1x128xf32>
    %418 = arith.andi %415, %417 : vector<1x128xi1>
    %cst_139 = arith.constant 1.500000e+01 : f32
    %419 = vector.broadcast %cst_139 : f32 to vector<1x128xf32>
    %420 = arith.cmpf ole, %351, %419 : vector<1x128xf32>
    %421 = arith.andi %418, %420 : vector<1x128xi1>
    %cst_140 = arith.constant 1.600000e+01 : f32
    %422 = vector.broadcast %cst_140 : f32 to vector<1x128xf32>
    %423 = arith.mulf %351, %422 : vector<1x128xf32>
    %424 = arith.addf %423, %346 : vector<1x128xf32>
    %425 = arith.fptosi %424 : vector<1x128xf32> to vector<1x128xi32>
    %426 = vector.broadcast %425 : vector<1x128xi32> to vector<256x128xi32>
    %427 = arith.cmpi eq, %11, %426 : vector<256x128xi32>
    %428 = vector.broadcast %421 : vector<1x128xi1> to vector<256x128xi1>
    %429 = arith.andi %427, %428 : vector<256x128xi1>
    %cst_141 = arith.constant 0.000000e+00 : f32
    %430 = vector.shape_cast %361 : vector<1x128xf32> to vector<1x128xf32>
    %431 = vector.broadcast %430 : vector<1x128xf32> to vector<256x128xf32>
    %432 = vector.broadcast %cst_141 : f32 to vector<256x128xf32>
    %433 = arith.select %429, %431, %432 : vector<256x128xi1>, vector<256x128xf32>
    %434 = arith.addf %410, %433 : vector<256x128xf32>
    %cst_142 = arith.constant 0.000000e+00 : f32
    %435 = vector.broadcast %cst_142 : f32 to vector<1x128xf32>
    %436 = arith.cmpf oge, %349, %435 : vector<1x128xf32>
    %cst_143 = arith.constant 1.500000e+01 : f32
    %437 = vector.broadcast %cst_143 : f32 to vector<1x128xf32>
    %438 = arith.cmpf ole, %349, %437 : vector<1x128xf32>
    %439 = arith.andi %436, %438 : vector<1x128xi1>
    %cst_144 = arith.constant 0.000000e+00 : f32
    %440 = vector.broadcast %cst_144 : f32 to vector<1x128xf32>
    %441 = arith.cmpf oge, %351, %440 : vector<1x128xf32>
    %442 = arith.andi %439, %441 : vector<1x128xi1>
    %cst_145 = arith.constant 1.500000e+01 : f32
    %443 = vector.broadcast %cst_145 : f32 to vector<1x128xf32>
    %444 = arith.cmpf ole, %351, %443 : vector<1x128xf32>
    %445 = arith.andi %442, %444 : vector<1x128xi1>
    %cst_146 = arith.constant 1.600000e+01 : f32
    %446 = vector.broadcast %cst_146 : f32 to vector<1x128xf32>
    %447 = arith.mulf %351, %446 : vector<1x128xf32>
    %448 = arith.addf %447, %349 : vector<1x128xf32>
    %449 = arith.fptosi %448 : vector<1x128xf32> to vector<1x128xi32>
    %450 = vector.broadcast %449 : vector<1x128xi32> to vector<256x128xi32>
    %451 = arith.cmpi eq, %11, %450 : vector<256x128xi32>
    %452 = vector.broadcast %445 : vector<1x128xi1> to vector<256x128xi1>
    %453 = arith.andi %451, %452 : vector<256x128xi1>
    %cst_147 = arith.constant 0.000000e+00 : f32
    %454 = vector.shape_cast %362 : vector<1x128xf32> to vector<1x128xf32>
    %455 = vector.broadcast %454 : vector<1x128xf32> to vector<256x128xf32>
    %456 = vector.broadcast %cst_147 : f32 to vector<256x128xf32>
    %457 = arith.select %453, %455, %456 : vector<256x128xi1>, vector<256x128xf32>
    %458 = arith.addf %434, %457 : vector<256x128xf32>
    %c0_148 = arith.constant 0 : index
    %c0_149 = arith.constant 0 : index
    %459 = vector.load %arg10[%c0_148, %c0_149] : memref<8x128xf32, #tpu.memory_space<vmem>>, vector<8x128xf32>
    %c0_150 = arith.constant 0 : index
    %c2 = arith.constant 2 : index
    %c0_151 = arith.constant 0 : index
    %c0_152 = arith.constant 0 : index
    %460 = vector.load %arg4[%c0_150, %c2, %c0_151, %c0_152] : memref<1x3x8x256xf32, #tpu.memory_space<vmem>>, vector<1x1x8x256xf32>
    %461 = vector.shape_cast %460 : vector<1x1x8x256xf32> to vector<8x256xf32>
    %cst_153 = arith.constant dense<0.000000e+00> : vector<8x128xf32>
    %462 = tpu.matmul %461, %458, %cst_153 {dimension_numbers = #tpu.dot_dimension_numbers<[1], [0], [0], [1], [0, 0, 1, 1], [], []>} : vector<8x256xf32>, vector<256x128xf32>, vector<8x128xf32> -> vector<8x128xf32>
    %463 = arith.addf %459, %462 : vector<8x128xf32>
    %c0_154 = arith.constant 0 : index
    %c0_155 = arith.constant 0 : index
    %464 = vector.load %arg10[%c0_154, %c0_155] : memref<8x128xf32, #tpu.memory_space<vmem>>, vector<8x128xf32>
    tpu.vector_store %arg10[%c0_154, %c0_155], %463 {strides = array<i32>} : memref<8x128xf32, #tpu.memory_space<vmem>>, vector<8x128xf32>,
    %c0_i32_156 = arith.constant 0 : i32
    %465 = arith.cmpi eq, %arg2, %c0_i32_156 : i32
    %466 = arith.extui %465 : i1 to i32
    %c0_i32_157 = arith.constant 0 : i32
    %467 = arith.cmpi ne, %466, %c0_i32_157 : i32
    scf.if %467 {
      %c0_158 = arith.constant 0 : index
      %c0_159 = arith.constant 0 : index
      %468 = vector.load %arg10[%c0_158, %c0_159] : memref<8x128xf32, #tpu.memory_space<vmem>>, vector<8x128xf32>
      %cst_160 = arith.constant 0.333333343 : f32
      %469 = vector.broadcast %cst_160 : f32 to vector<8x128xf32>
      %470 = arith.mulf %468, %469 : vector<8x128xf32>
      %c0_161 = arith.constant 0 : index
      %c0_162 = arith.constant 0 : index
      %471 = vector.load %arg5[%c0_161, %c0_162] : memref<32x8xf32, #tpu.memory_space<vmem>>, vector<32x8xf32>
      %cst_163 = arith.constant dense<0.000000e+00> : vector<32x128xf32>
      %472 = tpu.matmul %471, %470, %cst_163 {dimension_numbers = #tpu.dot_dimension_numbers<[1], [0], [0], [1], [0, 0, 1, 1], [], []>} : vector<32x8xf32>, vector<8x128xf32>, vector<32x128xf32> -> vector<32x128xf32>
      %c0_164 = arith.constant 0 : index
      %c0_165 = arith.constant 0 : index
      %473 = vector.load %arg6[%c0_164, %c0_165] : memref<32x1xf32, #tpu.memory_space<vmem>>, vector<32x1xf32>
      %474 = vector.broadcast %473 : vector<32x1xf32> to vector<32x128xf32>
      %475 = arith.addf %472, %474 : vector<32x128xf32>
      %cst_166 = arith.constant 2.000000e+01 : f32
      %476 = vector.broadcast %cst_166 : f32 to vector<32x128xf32>
      %477 = arith.cmpf ogt, %475, %476 : vector<32x128xf32>
      %cst_167 = arith.constant 2.000000e+01 : f32
      %478 = vector.broadcast %cst_167 : f32 to vector<32x128xf32>
      %479 = arith.minimumf %475, %478 : vector<32x128xf32>
      %480 = math.exp %479 : vector<32x128xf32>
      %cst_168 = arith.constant 1.000000e+00 : f32
      %481 = vector.broadcast %cst_168 : f32 to vector<32x128xf32>
      %482 = arith.addf %481, %480 : vector<32x128xf32>
      %483 = math.log %482 : vector<32x128xf32>
      %484 = arith.select %477, %475, %483 : vector<32x128xi1>, vector<32x128xf32>
      %c0_169 = arith.constant 0 : index
      %c0_170 = arith.constant 0 : index
      %485 = vector.load %arg7[%c0_169, %c0_170] : memref<4x32xf32, #tpu.memory_space<vmem>>, vector<4x32xf32>
      %cst_171 = arith.constant dense<0.000000e+00> : vector<4x128xf32>
      %486 = tpu.matmul %485, %484, %cst_171 {dimension_numbers = #tpu.dot_dimension_numbers<[1], [0], [0], [1], [0, 0, 1, 1], [], []>} : vector<4x32xf32>, vector<32x128xf32>, vector<4x128xf32> -> vector<4x128xf32>
      %c0_172 = arith.constant 0 : index
      %c0_173 = arith.constant 0 : index
      %487 = vector.load %arg8[%c0_172, %c0_173] : memref<4x1xf32, #tpu.memory_space<vmem>>, vector<4x1xf32>
      %488 = vector.broadcast %487 : vector<4x1xf32> to vector<4x128xf32>
      %489 = arith.addf %486, %488 : vector<4x128xf32>
      %490 = vector.extract_strided_slice %489 {offsets = [0, 0], sizes = [1, 128], strides = [1, 1]} : vector<4x128xf32> to vector<1x128xf32>
      %491 = vector.extract_strided_slice %489 {offsets = [1, 0], sizes = [3, 128], strides = [1, 1]} : vector<4x128xf32> to vector<3x128xf32>
      %cst_174 = arith.constant 0.000000e+00 : f32
      %492 = vector.broadcast %cst_174 : f32 to vector<3x128xf32>
      %493 = arith.subf %492, %491 : vector<3x128xf32>
      %494 = math.exp %493 : vector<3x128xf32>
      %cst_175 = arith.constant 1.000000e+00 : f32
      %495 = vector.broadcast %cst_175 : f32 to vector<3x128xf32>
      %496 = arith.addf %495, %494 : vector<3x128xf32>
      %497 = tpu.reciprocal %496 {approx = true} : vector<3x128xf32> -> vector<3x128xf32>
      %cst_176 = arith.constant 1.002000e+00 : f32
      %498 = vector.broadcast %cst_176 : f32 to vector<3x128xf32>
      %499 = arith.mulf %497, %498 : vector<3x128xf32>
      %cst_177 = arith.constant 1.000000e-03 : f32
      %500 = vector.broadcast %cst_177 : f32 to vector<3x128xf32>
      %501 = arith.subf %499, %500 : vector<3x128xf32>
      %502 = tpu.concatenate %490, %501 in 0 : vector<1x128xf32>, vector<3x128xf32> -> vector<4x128xf32>
      %c0_178 = arith.constant 0 : index
      %c0_179 = arith.constant 0 : index
      %c0_180 = arith.constant 0 : index
      %503 = vector.load %arg9[%c0_178, %c0_179, %c0_180] : memref<1x4x128xf32, #tpu.memory_space<vmem>>, vector<1x4x128xf32>
      %504 = vector.shape_cast %503 : vector<1x4x128xf32> to vector<4x128xf32>
      %505 = vector.shape_cast %502 : vector<4x128xf32> to vector<1x4x128xf32>
      tpu.vector_store %arg9[%c0_178, %c0_179, %c0_180], %505 {strides = array<i32>} : memref<1x4x128xf32, #tpu.memory_space<vmem>>, vector<1x4x128xf32>,
    } else {
    }
    return
  }
  func.func @transform_0(%arg0: i32, %arg1: i32, %arg2: i32) -> (i32, i32, i32) {
    %c0_i32 = arith.constant 0 : i32
    %c0_i32_0 = arith.constant 0 : i32
    return %arg0, %c0_i32, %arg1 : i32, i32, i32
  }
  func.func @transform_1(%arg0: i32, %arg1: i32, %arg2: i32) -> (i32, i32, i32, i32) {
    %c0_i32 = arith.constant 0 : i32
    %c0_i32_0 = arith.constant 0 : i32
    %c0_i32_1 = arith.constant 0 : i32
    return %arg0, %c0_i32, %c0_i32_0, %arg2 : i32, i32, i32, i32
  }
  func.func @transform_2(%arg0: i32, %arg1: i32, %arg2: i32) -> (i32, i32) {
    %c0_i32 = arith.constant 0 : i32
    %c0_i32_0 = arith.constant 0 : i32
    %c0_i32_1 = arith.constant 0 : i32
    return %c0_i32, %c0_i32_0 : i32, i32
  }
  func.func @transform_3(%arg0: i32, %arg1: i32, %arg2: i32) -> (i32, i32) {
    %c0_i32 = arith.constant 0 : i32
    %c0_i32_0 = arith.constant 0 : i32
    %c0_i32_1 = arith.constant 0 : i32
    return %c0_i32, %c0_i32_0 : i32, i32
  }
  func.func @transform_4(%arg0: i32, %arg1: i32, %arg2: i32) -> (i32, i32) {
    %c0_i32 = arith.constant 0 : i32
    %c0_i32_0 = arith.constant 0 : i32
    %c0_i32_1 = arith.constant 0 : i32
    return %c0_i32, %c0_i32_0 : i32, i32
  }
  func.func @transform_5(%arg0: i32, %arg1: i32, %arg2: i32) -> (i32, i32) {
    %c0_i32 = arith.constant 0 : i32
    %c0_i32_0 = arith.constant 0 : i32
    %c0_i32_1 = arith.constant 0 : i32
    return %c0_i32, %c0_i32_0 : i32, i32
  }
  func.func @transform_6(%arg0: i32, %arg1: i32, %arg2: i32) -> (i32, i32, i32) {
    %c0_i32 = arith.constant 0 : i32
    %c0_i32_0 = arith.constant 0 : i32
    return %arg0, %c0_i32, %arg1 : i32, i32, i32
  }
}

module attributes {stable_mosaic.version = 11 : i64} {
  func.func @_raymarch_kernel(%arg0: i32, %arg1: i32, %arg2: memref<1x3x16x16xf32, #tpu.memory_space<vmem>>, %arg3: memref<1x16x16xf32, #tpu.memory_space<vmem>>, %arg4: memref<1x16x16xf32, #tpu.memory_space<vmem>>, %arg5: memref<2xf32, #tpu.memory_space<smem>>, %arg6: memref<1x3x16xf32, #tpu.memory_space<vmem>>, %arg7: memref<1x1x16xf32, #tpu.memory_space<vmem>>, %arg8: memref<1x15x16xf32, #tpu.memory_space<vmem>>) attributes {dimension_semantics = [#tpu.dimension_semantics<parallel>, #tpu.dimension_semantics<parallel>], iteration_bounds = array<i64: 2, 1>, scalar_prefetch = 0 : i64, scratch_operands = 0 : i64, tpu.core_type = #tpu.core_type<tc>, window_params = [{transform_indices = @transform_0, window_bounds = array<i64: 1, 3, 16, 16>}, {transform_indices = @transform_1, window_bounds = array<i64: 1, 16, 16>}, {transform_indices = @transform_2, window_bounds = array<i64: 1, 16, 16>}, {transform_indices = @transform_3, window_bounds = array<i64: 2>}, {transform_indices = @transform_4, window_bounds = array<i64: 1, 3, 16>}, {transform_indices = @transform_5, window_bounds = array<i64: 1, 1, 16>}, {transform_indices = @transform_6, window_bounds = array<i64: 1, 15, 16>}]} {
    %c0 = arith.constant 0 : index
    %c0_0 = arith.constant 0 : index
    %c0_1 = arith.constant 0 : index
    %c0_2 = arith.constant 0 : index
    %0 = vector.load %arg2[%c0, %c0_0, %c0_1, %c0_2] : memref<1x3x16x16xf32, #tpu.memory_space<vmem>>, vector<1x3x16x16xf32>
    %1 = vector.shape_cast %0 : vector<1x3x16x16xf32> to vector<3x16x16xf32>
    %c0_3 = arith.constant 0 : index
    %c0_4 = arith.constant 0 : index
    %c0_5 = arith.constant 0 : index
    %2 = vector.load %arg3[%c0_3, %c0_4, %c0_5] : memref<1x16x16xf32, #tpu.memory_space<vmem>>, vector<1x16x16xf32>
    %3 = vector.shape_cast %2 : vector<1x16x16xf32> to vector<16x16xf32>
    %c0_6 = arith.constant 0 : index
    %c0_7 = arith.constant 0 : index
    %c0_8 = arith.constant 0 : index
    %4 = vector.load %arg4[%c0_6, %c0_7, %c0_8] : memref<1x16x16xf32, #tpu.memory_space<vmem>>, vector<1x16x16xf32>
    %5 = vector.shape_cast %4 : vector<1x16x16xf32> to vector<16x16xf32>
    %6 = vector.extract_strided_slice %5 {offsets = [1, 0], sizes = [15, 16], strides = [1, 1]} : vector<16x16xf32> to vector<15x16xf32>
    %7 = vector.extract_strided_slice %5 {offsets = [0, 0], sizes = [15, 16], strides = [1, 1]} : vector<16x16xf32> to vector<15x16xf32>
    %8 = arith.subf %6, %7 : vector<15x16xf32>
    %9 = vector.extract_strided_slice %1 {offsets = [0, 0, 0], sizes = [3, 15, 16], strides = [1, 1, 1]} : vector<3x16x16xf32> to vector<3x15x16xf32>
    %10 = vector.extract_strided_slice %1 {offsets = [0, 1, 0], sizes = [3, 15, 16], strides = [1, 1, 1]} : vector<3x16x16xf32> to vector<3x15x16xf32>
    %11 = arith.addf %9, %10 : vector<3x15x16xf32>
    %cst = arith.constant 5.000000e-01 : f32
    %12 = vector.broadcast %cst : f32 to vector<3x15x16xf32>
    %13 = arith.mulf %12, %11 : vector<3x15x16xf32>
    %14 = vector.extract_strided_slice %3 {offsets = [0, 0], sizes = [15, 16], strides = [1, 1]} : vector<16x16xf32> to vector<15x16xf32>
    %15 = vector.extract_strided_slice %3 {offsets = [1, 0], sizes = [15, 16], strides = [1, 1]} : vector<16x16xf32> to vector<15x16xf32>
    %16 = arith.addf %14, %15 : vector<15x16xf32>
    %cst_9 = arith.constant 5.000000e-01 : f32
    %17 = vector.broadcast %cst_9 : f32 to vector<15x16xf32>
    %18 = arith.mulf %17, %16 : vector<15x16xf32>
    %19 = vector.extract_strided_slice %5 {offsets = [0, 0], sizes = [15, 16], strides = [1, 1]} : vector<16x16xf32> to vector<15x16xf32>
    %20 = vector.extract_strided_slice %5 {offsets = [1, 0], sizes = [15, 16], strides = [1, 1]} : vector<16x16xf32> to vector<15x16xf32>
    %21 = arith.addf %19, %20 : vector<15x16xf32>
    %cst_10 = arith.constant 5.000000e-01 : f32
    %22 = vector.broadcast %cst_10 : f32 to vector<15x16xf32>
    %23 = arith.mulf %22, %21 : vector<15x16xf32>
    %cst_11 = arith.constant 1.000000e+00 : f32
    %24 = vector.broadcast %cst_11 : f32 to vector<15x16xf32>
    %25 = arith.subf %18, %24 : vector<15x16xf32>
    %cst_12 = arith.constant 2.000000e+01 : f32
    %26 = vector.broadcast %cst_12 : f32 to vector<15x16xf32>
    %27 = arith.cmpf ogt, %25, %26 : vector<15x16xf32>
    %cst_13 = arith.constant 2.000000e+01 : f32
    %28 = vector.broadcast %cst_13 : f32 to vector<15x16xf32>
    %29 = arith.minimumf %25, %28 : vector<15x16xf32>
    %30 = math.exp %29 : vector<15x16xf32>
    %cst_14 = arith.constant 1.000000e+00 : f32
    %31 = vector.broadcast %cst_14 : f32 to vector<15x16xf32>
    %32 = arith.addf %31, %30 : vector<15x16xf32>
    %33 = math.log %32 : vector<15x16xf32>
    %34 = arith.select %27, %25, %33 : vector<15x16xi1>, vector<15x16xf32>
    %35 = arith.mulf %34, %8 : vector<15x16xf32>
    %cst_15 = arith.constant 0.000000e+00 : f32
    %36 = vector.broadcast %cst_15 : f32 to vector<15x16xf32>
    %37 = arith.subf %36, %35 : vector<15x16xf32>
    %38 = math.exp %37 : vector<15x16xf32>
    %cst_16 = arith.constant 1.000000e+00 : f32
    %39 = vector.broadcast %cst_16 : f32 to vector<15x16xf32>
    %40 = arith.subf %39, %38 : vector<15x16xf32>
    %cst_17 = arith.constant 1.000000e+00 : f32
    %41 = vector.broadcast %cst_17 : f32 to vector<15x16xf32>
    %42 = arith.subf %41, %40 : vector<15x16xf32>
    %cst_18 = arith.constant 1.000000e-10 : f32
    %43 = vector.broadcast %cst_18 : f32 to vector<15x16xf32>
    %44 = arith.addf %42, %43 : vector<15x16xf32>
    %cst_19 = arith.constant 1.000000e+00 : f32
    %45 = vector.broadcast %cst_19 : f32 to vector<1x16xf32>
    %46 = vector.extract_strided_slice %40 {offsets = [0, 0], sizes = [1, 16], strides = [1, 1]} : vector<15x16xf32> to vector<1x16xf32>
    %47 = arith.mulf %46, %45 : vector<1x16xf32>
    %48 = vector.extract_strided_slice %44 {offsets = [0, 0], sizes = [1, 16], strides = [1, 1]} : vector<15x16xf32> to vector<1x16xf32>
    %49 = arith.mulf %45, %48 : vector<1x16xf32>
    %50 = vector.extract_strided_slice %40 {offsets = [1, 0], sizes = [1, 16], strides = [1, 1]} : vector<15x16xf32> to vector<1x16xf32>
    %51 = arith.mulf %50, %49 : vector<1x16xf32>
    %52 = vector.extract_strided_slice %44 {offsets = [1, 0], sizes = [1, 16], strides = [1, 1]} : vector<15x16xf32> to vector<1x16xf32>
    %53 = arith.mulf %49, %52 : vector<1x16xf32>
    %54 = vector.extract_strided_slice %40 {offsets = [2, 0], sizes = [1, 16], strides = [1, 1]} : vector<15x16xf32> to vector<1x16xf32>
    %55 = arith.mulf %54, %53 : vector<1x16xf32>
    %56 = vector.extract_strided_slice %44 {offsets = [2, 0], sizes = [1, 16], strides = [1, 1]} : vector<15x16xf32> to vector<1x16xf32>
    %57 = arith.mulf %53, %56 : vector<1x16xf32>
    %58 = vector.extract_strided_slice %40 {offsets = [3, 0], sizes = [1, 16], strides = [1, 1]} : vector<15x16xf32> to vector<1x16xf32>
    %59 = arith.mulf %58, %57 : vector<1x16xf32>
    %60 = vector.extract_strided_slice %44 {offsets = [3, 0], sizes = [1, 16], strides = [1, 1]} : vector<15x16xf32> to vector<1x16xf32>
    %61 = arith.mulf %57, %60 : vector<1x16xf32>
    %62 = vector.extract_strided_slice %40 {offsets = [4, 0], sizes = [1, 16], strides = [1, 1]} : vector<15x16xf32> to vector<1x16xf32>
    %63 = arith.mulf %62, %61 : vector<1x16xf32>
    %64 = vector.extract_strided_slice %44 {offsets = [4, 0], sizes = [1, 16], strides = [1, 1]} : vector<15x16xf32> to vector<1x16xf32>
    %65 = arith.mulf %61, %64 : vector<1x16xf32>
    %66 = vector.extract_strided_slice %40 {offsets = [5, 0], sizes = [1, 16], strides = [1, 1]} : vector<15x16xf32> to vector<1x16xf32>
    %67 = arith.mulf %66, %65 : vector<1x16xf32>
    %68 = vector.extract_strided_slice %44 {offsets = [5, 0], sizes = [1, 16], strides = [1, 1]} : vector<15x16xf32> to vector<1x16xf32>
    %69 = arith.mulf %65, %68 : vector<1x16xf32>
    %70 = vector.extract_strided_slice %40 {offsets = [6, 0], sizes = [1, 16], strides = [1, 1]} : vector<15x16xf32> to vector<1x16xf32>
    %71 = arith.mulf %70, %69 : vector<1x16xf32>
    %72 = vector.extract_strided_slice %44 {offsets = [6, 0], sizes = [1, 16], strides = [1, 1]} : vector<15x16xf32> to vector<1x16xf32>
    %73 = arith.mulf %69, %72 : vector<1x16xf32>
    %74 = vector.extract_strided_slice %40 {offsets = [7, 0], sizes = [1, 16], strides = [1, 1]} : vector<15x16xf32> to vector<1x16xf32>
    %75 = arith.mulf %74, %73 : vector<1x16xf32>
    %76 = vector.extract_strided_slice %44 {offsets = [7, 0], sizes = [1, 16], strides = [1, 1]} : vector<15x16xf32> to vector<1x16xf32>
    %77 = arith.mulf %73, %76 : vector<1x16xf32>
    %78 = vector.extract_strided_slice %40 {offsets = [8, 0], sizes = [1, 16], strides = [1, 1]} : vector<15x16xf32> to vector<1x16xf32>
    %79 = arith.mulf %78, %77 : vector<1x16xf32>
    %80 = vector.extract_strided_slice %44 {offsets = [8, 0], sizes = [1, 16], strides = [1, 1]} : vector<15x16xf32> to vector<1x16xf32>
    %81 = arith.mulf %77, %80 : vector<1x16xf32>
    %82 = vector.extract_strided_slice %40 {offsets = [9, 0], sizes = [1, 16], strides = [1, 1]} : vector<15x16xf32> to vector<1x16xf32>
    %83 = arith.mulf %82, %81 : vector<1x16xf32>
    %84 = vector.extract_strided_slice %44 {offsets = [9, 0], sizes = [1, 16], strides = [1, 1]} : vector<15x16xf32> to vector<1x16xf32>
    %85 = arith.mulf %81, %84 : vector<1x16xf32>
    %86 = vector.extract_strided_slice %40 {offsets = [10, 0], sizes = [1, 16], strides = [1, 1]} : vector<15x16xf32> to vector<1x16xf32>
    %87 = arith.mulf %86, %85 : vector<1x16xf32>
    %88 = vector.extract_strided_slice %44 {offsets = [10, 0], sizes = [1, 16], strides = [1, 1]} : vector<15x16xf32> to vector<1x16xf32>
    %89 = arith.mulf %85, %88 : vector<1x16xf32>
    %90 = vector.extract_strided_slice %40 {offsets = [11, 0], sizes = [1, 16], strides = [1, 1]} : vector<15x16xf32> to vector<1x16xf32>
    %91 = arith.mulf %90, %89 : vector<1x16xf32>
    %92 = vector.extract_strided_slice %44 {offsets = [11, 0], sizes = [1, 16], strides = [1, 1]} : vector<15x16xf32> to vector<1x16xf32>
    %93 = arith.mulf %89, %92 : vector<1x16xf32>
    %94 = vector.extract_strided_slice %40 {offsets = [12, 0], sizes = [1, 16], strides = [1, 1]} : vector<15x16xf32> to vector<1x16xf32>
    %95 = arith.mulf %94, %93 : vector<1x16xf32>
    %96 = vector.extract_strided_slice %44 {offsets = [12, 0], sizes = [1, 16], strides = [1, 1]} : vector<15x16xf32> to vector<1x16xf32>
    %97 = arith.mulf %93, %96 : vector<1x16xf32>
    %98 = vector.extract_strided_slice %40 {offsets = [13, 0], sizes = [1, 16], strides = [1, 1]} : vector<15x16xf32> to vector<1x16xf32>
    %99 = arith.mulf %98, %97 : vector<1x16xf32>
    %100 = vector.extract_strided_slice %44 {offsets = [13, 0], sizes = [1, 16], strides = [1, 1]} : vector<15x16xf32> to vector<1x16xf32>
    %101 = arith.mulf %97, %100 : vector<1x16xf32>
    %102 = vector.extract_strided_slice %40 {offsets = [14, 0], sizes = [1, 16], strides = [1, 1]} : vector<15x16xf32> to vector<1x16xf32>
    %103 = arith.mulf %102, %101 : vector<1x16xf32>
    %104 = tpu.concatenate %47, %51, %55, %59, %63, %67, %71, %75, %79, %83, %87, %91, %95, %99, %103 in 0 : vector<1x16xf32>, vector<1x16xf32>, vector<1x16xf32>, vector<1x16xf32>, vector<1x16xf32>, vector<1x16xf32>, vector<1x16xf32>, vector<1x16xf32>, vector<1x16xf32>, vector<1x16xf32>, vector<1x16xf32>, vector<1x16xf32>, vector<1x16xf32>, vector<1x16xf32>, vector<1x16xf32> -> vector<15x16xf32>
    %105 = vector.shape_cast %104 : vector<15x16xf32> to vector<1x15x16xf32>
    %106 = vector.broadcast %105 : vector<1x15x16xf32> to vector<3x15x16xf32>
    %107 = arith.mulf %106, %13 : vector<3x15x16xf32>
    %cst_20 = arith.constant dense<0.000000e+00> : vector<3x16xf32>
    %108 = vector.multi_reduction <add>, %107, %cst_20 [1] : vector<3x15x16xf32> to vector<3x16xf32>
    %cst_21 = arith.constant dense<0.000000e+00> : vector<16xf32>
    %109 = vector.multi_reduction <add>, %104, %cst_21 [0] : vector<15x16xf32> to vector<16xf32>
    %110 = vector.shape_cast %109 : vector<16xf32> to vector<1x16xf32>
    %111 = arith.mulf %104, %23 : vector<15x16xf32>
    %cst_22 = arith.constant dense<0.000000e+00> : vector<16xf32>
    %112 = vector.multi_reduction <add>, %111, %cst_22 [0] : vector<15x16xf32> to vector<16xf32>
    %113 = vector.shape_cast %112 : vector<16xf32> to vector<1x16xf32>
    %114 = tpu.reciprocal %110 {approx = true} : vector<1x16xf32> -> vector<1x16xf32>
    %115 = arith.mulf %113, %114 : vector<1x16xf32>
    %116 = arith.cmpf one, %115, %115 : vector<1x16xf32>
    %cst_23 = arith.constant 0x7F800000 : f32
    %117 = vector.broadcast %cst_23 : f32 to vector<1x16xf32>
    %118 = arith.select %116, %117, %115 : vector<1x16xi1>, vector<1x16xf32>
    %c0_24 = arith.constant 0 : index
    %119 = memref.load %arg5[%c0_24] : memref<2xf32, #tpu.memory_space<smem>>
    %c1 = arith.constant 1 : index
    %120 = memref.load %arg5[%c1] : memref<2xf32, #tpu.memory_space<smem>>
    %121 = vector.broadcast %119 : f32 to vector<1x16xf32>
    %122 = arith.maximumf %121, %118 : vector<1x16xf32>
    %123 = vector.broadcast %120 : f32 to vector<1x16xf32>
    %124 = arith.minimumf %123, %122 : vector<1x16xf32>
    %cst_25 = arith.constant 2.000000e+00 : f32
    %125 = vector.broadcast %cst_25 : f32 to vector<3x16xf32>
    %126 = arith.mulf %108, %125 : vector<3x16xf32>
    %cst_26 = arith.constant 1.000000e+00 : f32
    %127 = vector.broadcast %cst_26 : f32 to vector<3x16xf32>
    %128 = arith.subf %126, %127 : vector<3x16xf32>
    %c0_27 = arith.constant 0 : index
    %c0_28 = arith.constant 0 : index
    %c0_29 = arith.constant 0 : index
    %129 = vector.load %arg6[%c0_27, %c0_28, %c0_29] : memref<1x3x16xf32, #tpu.memory_space<vmem>>, vector<1x3x16xf32>
    %130 = vector.shape_cast %129 : vector<1x3x16xf32> to vector<3x16xf32>
    %131 = vector.shape_cast %128 : vector<3x16xf32> to vector<1x3x16xf32>
    tpu.vector_store %arg6[%c0_27, %c0_28, %c0_29], %131 {strides = array<i32>} : memref<1x3x16xf32, #tpu.memory_space<vmem>>, vector<1x3x16xf32>,
    %c0_30 = arith.constant 0 : index
    %c0_31 = arith.constant 0 : index
    %c0_32 = arith.constant 0 : index
    %132 = vector.load %arg7[%c0_30, %c0_31, %c0_32] : memref<1x1x16xf32, #tpu.memory_space<vmem>>, vector<1x1x16xf32>
    %133 = vector.shape_cast %132 : vector<1x1x16xf32> to vector<1x16xf32>
    %134 = vector.shape_cast %124 : vector<1x16xf32> to vector<1x1x16xf32>
    tpu.vector_store %arg7[%c0_30, %c0_31, %c0_32], %134 {strides = array<i32>} : memref<1x1x16xf32, #tpu.memory_space<vmem>>, vector<1x1x16xf32>,
    %c0_33 = arith.constant 0 : index
    %c0_34 = arith.constant 0 : index
    %c0_35 = arith.constant 0 : index
    %135 = vector.load %arg8[%c0_33, %c0_34, %c0_35] : memref<1x15x16xf32, #tpu.memory_space<vmem>>, vector<1x15x16xf32>
    %136 = vector.shape_cast %135 : vector<1x15x16xf32> to vector<15x16xf32>
    %137 = vector.shape_cast %104 : vector<15x16xf32> to vector<1x15x16xf32>
    tpu.vector_store %arg8[%c0_33, %c0_34, %c0_35], %137 {strides = array<i32>} : memref<1x15x16xf32, #tpu.memory_space<vmem>>, vector<1x15x16xf32>,
    return
  }
  func.func @transform_0(%arg0: i32, %arg1: i32) -> (i32, i32, i32, i32) {
    %c0_i32 = arith.constant 0 : i32
    %c0_i32_0 = arith.constant 0 : i32
    %c0_i32_1 = arith.constant 0 : i32
    return %arg0, %c0_i32, %c0_i32_0, %arg1 : i32, i32, i32, i32
  }
  func.func @transform_1(%arg0: i32, %arg1: i32) -> (i32, i32, i32) {
    %c0_i32 = arith.constant 0 : i32
    %c0_i32_0 = arith.constant 0 : i32
    return %arg0, %c0_i32, %arg1 : i32, i32, i32
  }
  func.func @transform_2(%arg0: i32, %arg1: i32) -> (i32, i32, i32) {
    %c0_i32 = arith.constant 0 : i32
    %c0_i32_0 = arith.constant 0 : i32
    return %arg0, %c0_i32, %arg1 : i32, i32, i32
  }
  func.func @transform_3(%arg0: i32, %arg1: i32) -> i32 {
    %c0_i32 = arith.constant 0 : i32
    %c0_i32_0 = arith.constant 0 : i32
    return %c0_i32 : i32
  }
  func.func @transform_4(%arg0: i32, %arg1: i32) -> (i32, i32, i32) {
    %c0_i32 = arith.constant 0 : i32
    %c0_i32_0 = arith.constant 0 : i32
    return %arg0, %c0_i32, %arg1 : i32, i32, i32
  }
  func.func @transform_5(%arg0: i32, %arg1: i32) -> (i32, i32, i32) {
    %c0_i32 = arith.constant 0 : i32
    %c0_i32_0 = arith.constant 0 : i32
    return %arg0, %c0_i32, %arg1 : i32, i32, i32
  }
  func.func @transform_6(%arg0: i32, %arg1: i32) -> (i32, i32, i32) {
    %c0_i32 = arith.constant 0 : i32
    %c0_i32_0 = arith.constant 0 : i32
    return %arg0, %c0_i32, %arg1 : i32, i32, i32
  }
}

</mosaic_0001>

<llo_original>
// kernel: custom-call.12
$region0: #{custom-call.12}
  %s0 = inlined_call_operand.hbm [shape: u32[32,8], index: 0, kind: output, shape index: {}]

// kernel: squeeze.10
$region0: #{squeeze.10}
  %s0 = inlined_call_operand.vmem [shape: f32[256], index: 0, kind: input, shape index: {}]
  %s1 = inlined_call_operand.vmem [shape: f32[32,8], index: 1, kind: output, shape index: {}]
  $region1: #{squeeze.10} parent=0
    #allocation0 [shape = 'u8[4096]{0}', space=vmem, size = 0x1000, scoped, tag = 'scoped mem for input reshape']
    %s3 = sshllo.u32 0, 2
    %v4 = vld [vmem:[%s0] sm:%s3]
    %5 = vst [vmem:[#allocation0] sm:%s3] %v4
    %v6 = vld [vmem:[#allocation0] sm:$0x3]
    %vm7 = vcmask 64512
    %8 = vst.msk [vmem:[%s1] ss:$16 sm:$0x3] %vm7, %v6
    %v9 = vld [vmem:[#allocation0] sm:$0x3]
    %10 = vrot.lane.b32.xlu0 %v9, 120
    %v11 = vpop.permute.xlu0 %10
    %vm12 = vcmask 64512
    %s13 = scalar_lea.vmem %s1, 1
    %14 = vst.msk [vmem:[%s13] ss:$16 sm:$0x3] %vm12, %v11
    %v15 = vld [vmem:[#allocation0] sm:$0x3]
    %16 = vrot.lane.b32.xlu0 %v15, 112
    %v17 = vpop.permute.xlu0 %16
    %vm18 = vcmask 64512
    %s19 = scalar_lea.vmem %s1, 2
    %20 = vst.msk [vmem:[%s19] ss:$16 sm:$0x3] %vm18, %v17
    %v21 = vld [vmem:[#allocation0] sm:$0x3]
    %22 = vrot.lane.b32.xlu0 %v21, 104
    %v23 = vpop.permute.xlu0 %22
    %vm24 = vcmask 64512
    %s25 = scalar_lea.vmem %s1, 3
    %26 = vst.msk [vmem:[%s25] ss:$16 sm:$0x3] %vm24, %v23
    %v27 = vld [vmem:[#allocation0] sm:$0x3]
    %28 = vrot.lane.b32.xlu0 %v27, 96
    %v29 = vpop.permute.xlu0 %28
    %vm30 = vcmask 64512
    %s31 = scalar_lea.vmem %s1, 4
    %32 = vst.msk [vmem:[%s31] ss:$16 sm:$0x3] %vm30, %v29
    %v33 = vld [vmem:[#allocation0] sm:$0x3]
    %34 = vrot.lane.b32.xlu0 %v33, 88
    %v35 = vpop.permute.xlu0 %34
    %vm36 = vcmask 64512
    %s37 = scalar_lea.vmem %s1, 5
    %38 = vst.msk [vmem:[%s37] ss:$16 sm:$0x3] %vm36, %v35
    %v39 = vld [vmem:[#allocation0] sm:$0x3]
    %40 = vrot.lane.b32.xlu0 %v39, 80
    %v41 = vpop.permute.xlu0 %40
    %vm42 = vcmask 64512
    %s43 = scalar_lea.vmem %s1, 6
    %44 = vst.msk [vmem:[%s43] ss:$16 sm:$0x3] %vm42, %v41
    %v45 = vld [vmem:[#allocation0] sm:$0x3]
    %46 = vrot.lane.b32.xlu0 %v45, 72
    %v47 = vpop.permute.xlu0 %46
    %vm48 = vcmask 64512
    %s49 = scalar_lea.vmem %s1, 7
    %50 = vst.msk [vmem:[%s49] ss:$16 sm:$0x3] %vm48, %v47
    %v51 = vld [vmem:[#allocation0] sm:$0x3]
    %52 = vrot.lane.b32.xlu0 %v51, 64
    %v53 = vpop.permute.xlu0 %52
    %vm54 = vcmask 64512
    %s55 = scalar_lea.vmem %s1, 8
    %56 = vst.msk [vmem:[%s55] ss:$16 sm:$0x3] %vm54, %v53
    %v57 = vld [vmem:[#allocation0] sm:$0x3]
    %58 = vrot.lane.b32.xlu0 %v57, 56
    %v59 = vpop.permute.xlu0 %58
    %vm60 = vcmask 64512
    %s61 = scalar_lea.vmem %s1, 9
    %62 = vst.msk [vmem:[%s61] ss:$16 sm:$0x3] %vm60, %v59
    %v63 = vld [vmem:[#allocation0] sm:$0x3]
    %64 = vrot.lane.b32.xlu0 %v63, 48
    %v65 = vpop.permute.xlu0 %64
    %vm66 = vcmask 64512
    %s67 = scalar_lea.vmem %s1, 10
    %68 = vst.msk [vmem:[%s67] ss:$16 sm:$0x3] %vm66, %v65
    %v69 = vld [vmem:[#allocation0] sm:$0x3]
    %70 = vrot.lane.b32.xlu0 %v69, 40
    %v71 = vpop.permute.xlu0 %70
    %vm72 = vcmask 64512
    %s73 = scalar_lea.vmem %s1, 11
    %74 = vst.msk [vmem:[%s73] ss:$16 sm:$0x3] %vm72, %v71
    %v75 = vld [vmem:[#allocation0] sm:$0x3]
    %76 = vrot.lane.b32.xlu0 %v75, 32
    %v77 = vpop.permute.xlu0 %76
    %vm78 = vcmask 64512
    %s79 = scalar_lea.vmem %s1, 12
    %80 = vst.msk [vmem:[%s79] ss:$16 sm:$0x3] %vm78, %v77
    %v81 = vld [vmem:[#allocation0] sm:$0x3]
    %82 = vrot.lane.b32.xlu0 %v81, 24
    %v83 = vpop.permute.xlu0 %82
    %vm84 = vcmask 64512
    %s85 = scalar_lea.vmem %s1, 13
    %86 = vst.msk [vmem:[%s85] ss:$16 sm:$0x3] %vm84, %v83
    %v87 = vld [vmem:[#allocation0] sm:$0x3]
    %88 = vrot.lane.b32.xlu0 %v87, 16
    %v89 = vpop.permute.xlu0 %88
    %vm90 = vcmask 64512
    %s91 = scalar_lea.vmem %s1, 14
    %92 = vst.msk [vmem:[%s91] ss:$16 sm:$0x3] %vm90, %v89
    %v93 = vld [vmem:[#allocation0] sm:$0x3]
    %94 = vrot.lane.b32.xlu0 %v93, 8
    %v95 = vpop.permute.xlu0 %94
    %vm96 = vcmask 64512
    %s97 = scalar_lea.vmem %s1, 15
    %98 = vst.msk [vmem:[%s97] ss:$16 sm:$0x3] %vm96, %v95

// kernel: importance_renderer_forward.7
$region0: #{importance_renderer_forward.7}
  #allocation0 [shape = 'u32[]', space=smem, size = 0x4, offset = 0x4, fixed_abs, tag = 'smem constant byte address 0x4 - core index']
  #allocation1 [shape = 'u32[144,128]{1,0:T(1,128)}', space=vmem, size = 0x12000, scoped, tag = 'internal scratch']
  %s0 = inlined_call_operand.hbm [shape: f32[2,3,8,16], index: 0, kind: input, shape index: {}]
  %s1 = inlined_call_operand.hbm [shape: f32[2,8,16], index: 1, kind: input, shape index: {}]
  %s2 = inlined_call_operand.hbm [shape: f32[2,8,16], index: 2, kind: input, shape index: {}]
  %s3 = inlined_call_operand.hbm [shape: f32[2], index: 3, kind: input, shape index: {}]
  %s4 = inlined_call_operand.hbm [shape: f32[2,3,16], index: 4, kind: output, shape index: {0}]
  %s5 = inlined_call_operand.hbm [shape: f32[2,1,16], index: 5, kind: output, shape index: {1}]
  %s6 = inlined_call_operand.hbm [shape: f32[2,7,16], index: 6, kind: output, shape index: {2}]
  %7 = xla_tuple %s4, %s5, %s6
  %s8 = sld [smem:[#allocation0]]
  $region81: #{importance_renderer_forward.7} parent=0
    _
  %s10 = ssub.s32 1, %s8
  %s11 = scalar_select 0, %s10, %s8
  $region1: #{importance_renderer_forward.7} parent=0
    #allocation2 [shape = 'u8[24576]{0}', space=vmem, size = 0x6000, scoped, tag = 'input window, operand 0']
    #allocation3 [shape = 's32[2]{0}', space=sflag, size = 0x8, scoped, tag = 'scoped memory for importance_renderer_forward.7']
    #allocation4 [shape = 's32[2]{0}', space=sflag, size = 0x8, scoped, tag = 'scoped memory for importance_renderer_forward.7']
    #allocation5 [shape = 's32[2]{0}', space=sflag, size = 0x8, scoped, tag = 'scoped memory for importance_renderer_forward.7']
    #allocation6 [shape = 'u8[8192]{0}', space=vmem, size = 0x2000, scoped, tag = 'input window, operand 1']
    #allocation7 [shape = 's32[2]{0}', space=sflag, size = 0x8, scoped, tag = 'scoped memory for importance_renderer_forward.7']
    #allocation8 [shape = 'u8[8192]{0}', space=vmem, size = 0x2000, scoped, tag = 'input window, operand 2']
    #allocation9 [shape = 'u8[512]{0}', space=smem, size = 0x200, scoped, tag = 'input window, operand 3, single buffered']
    #allocation10 [shape = 'u8[4096]{0}', space=vmem, size = 0x1000, scoped, tag = 'output window, operand 0']
    #allocation11 [shape = 'u8[1024]{0}', space=vmem, size = 0x400, scoped, tag = 'output window, operand 1']
    #allocation12 [shape = 's32[2]{0}', space=sflag, size = 0x8, scoped, tag = 'scoped memory for importance_renderer_forward.7']
    #allocation13 [shape = 'u8[8192]{0}', space=vmem, size = 0x2000, scoped, tag = 'output window, operand 2']
    %12 = vsyncpa [#allocation3], 0
    %s13 = scalar_lea.sflag [#allocation3], 1
    %14 = vsyncpa %s13, 0
    %15 = vsyncpa [#allocation7], 0
    %s16 = scalar_lea.sflag [#allocation7], 1
    %17 = vsyncpa %s16, 0
    %18 = vsyncpa [#allocation5], 0
    %19 = vsyncpa [#allocation4], 0
    %s20 = scalar_lea.sflag [#allocation4], 1
    %21 = vsyncpa %s20, 0
    %22 = vsyncpa [#allocation12], 0
    %s23 = scalar_lea.sflag [#allocation12], 1
    %24 = vsyncpa %s23, 0
    loop: start=0, step=1, limit=4
    $region2: #{importance_renderer_forward.7} parent=1 // loop_pre_header
      _
    $region3: #{importance_renderer_forward.7} parent=1 // loop_header
      %s26 = sphi 0, %s30
      %p27 = scmp.ge.s32.totalorder %s26, 4
      %s33 = sphi 0, %s45
      %s34 = sphi 0, %s41
      %s35 = sphi 0, %s33
      %s36 = sphi 0, %s34
      %s37 = sphi 0, %s35
      %s38 = sphi 0, %s36
      %s50 = sphi 0, %s52
      %s53 = sphi 0, %s50
      %s54 = sphi 0, %s53
      %s70 = sphi 0, %s54
      %s78 = sphi 0, %s80
      %s81 = sphi 0, %s78
      %s82 = sphi 0, %s81
      %s98 = sphi 0, %s82
      %s106 = sphi 0, %s108
      %s109 = sphi 0, %s106
      %s110 = sphi 0, %s109
      %s126 = sphi 0, %s110
      %s130 = sphi 0, %s130
      %s132 = sphi 0, %s130
      %s133 = sphi 0, %s132
      %s147 = sphi 0, %s133
      %s155 = sphi 0, %s157
      %s158 = sphi 0, %s155
      %s159 = sphi 0, %s158
      %s175 = sphi 0, %s159
      %s183 = sphi 0, %s185
      %s186 = sphi 0, %s183
      %s187 = sphi 0, %s186
      %s203 = sphi 0, %s187
      %s211 = sphi 0, %s213
      %s214 = sphi 0, %s211
      %s215 = sphi 0, %s214
      %s231 = sphi 0, %s215
    $region4: #{importance_renderer_forward.7} parent=1 // loop_header_branch
      %29 = sbr.rel (%p27) target = $region8
    $region5: #{importance_renderer_forward.7} parent=1 // loop_body
      %s31 = ssub.s32 %s26, 1
      %s32 = ssub.s32 %s26, 2
      %s39 = sadd.s32 1, %s34
      %p40 = scmp.ge.s32.totalorder %s39, 1
      %s41 = scalar_select %p40, 0, %s39
      %s42 = sadd.s32 1, %s33
      %s43 = scalar_select %p40, %s42, %s33
      %p44 = scmp.ge.s32.totalorder %s43, 2
      %s45 = scalar_select %p44, 0, %s43
      %s46 = ssub.s32 %s33, %s45
      %s47 = ssub.s32 %s34, %s41
      %s48 = sor.u32 %s46, %s47
      %p49 = scmp.eq.s32.totalorder %s48, 0
      %s51 = sadd.s32 %s50, 1
      %s52 = scalar_select %p49, %s50, %s51
      %p55 = pneg %p49
      %p56 = scmp.eq.s32.totalorder %s26, 1
      %p57 = por %p55, %p56
      %p58 = scmp.ne.s32.totalorder %s50, %s53
      %p59 = scmp.eq.s32.totalorder %s26, 0
      %p60 = por %p58, %p59
      %p61 = scmp.ne.s32.totalorder %s50, %s53
      %p62 = scmp.eq.s32.totalorder %s31, 1
      %p63 = por %p61, %p62
      %p64 = scmp.ne.s32.totalorder %s53, %s54
      %p65 = scmp.eq.s32.totalorder %s31, 0
      %p66 = por %p64, %p65
      %p67 = scmp.ne.s32.totalorder %s53, %s54
      %p68 = scmp.eq.s32.totalorder %s32, 1
      %p69 = por %p67, %p68
      %p71 = scmp.ne.s32.totalorder %s54, %s70
      %p72 = scmp.eq.s32.totalorder %s32, 0
      %p73 = por %p71, %p72
      %s74 = ssub.s32 %s33, %s45
      %s75 = ssub.s32 %s34, %s41
      %s76 = sor.u32 %s74, %s75
      %p77 = scmp.eq.s32.totalorder %s76, 0
      %s79 = sadd.s32 %s78, 1
      %s80 = scalar_select %p77, %s78, %s79
      %p83 = pneg %p77
      %p84 = scmp.eq.s32.totalorder %s26, 1
      %p85 = por %p83, %p84
      %p86 = scmp.ne.s32.totalorder %s78, %s81
      %p87 = scmp.eq.s32.totalorder %s26, 0
      %p88 = por %p86, %p87
      %p89 = scmp.ne.s32.totalorder %s78, %s81
      %p90 = scmp.eq.s32.totalorder %s31, 1
      %p91 = por %p89, %p90
      %p92 = scmp.ne.s32.totalorder %s81, %s82
      %p93 = scmp.eq.s32.totalorder %s31, 0
      %p94 = por %p92, %p93
      %p95 = scmp.ne.s32.totalorder %s81, %s82
      %p96 = scmp.eq.s32.totalorder %s32, 1
      %p97 = por %p95, %p96
      %p99 = scmp.ne.s32.totalorder %s82, %s98
      %p100 = scmp.eq.s32.totalorder %s32, 0
      %p101 = por %p99, %p100
      %s102 = ssub.s32 %s33, %s45
      %s103 = ssub.s32 %s34, %s41
      %s104 = sor.u32 %s102, %s103
      %p105 = scmp.eq.s32.totalorder %s104, 0
      %s107 = sadd.s32 %s106, 1
      %s108 = scalar_select %p105, %s106, %s107
      %p111 = pneg %p105
      %p112 = scmp.eq.s32.totalorder %s26, 1
      %p113 = por %p111, %p112
      %p114 = scmp.ne.s32.totalorder %s106, %s109
      %p115 = scmp.eq.s32.totalorder %s26, 0
      %p116 = por %p114, %p115
      %p117 = scmp.ne.s32.totalorder %s106, %s109
      %p118 = scmp.eq.s32.totalorder %s31, 1
      %p119 = por %p117, %p118
      %p120 = scmp.ne.s32.totalorder %s109, %s110
      %p121 = scmp.eq.s32.totalorder %s31, 0
      %p122 = por %p120, %p121
      %p123 = scmp.ne.s32.totalorder %s109, %s110
      %p124 = scmp.eq.s32.totalorder %s32, 1
      %p125 = por %p123, %p124
      %p127 = scmp.ne.s32.totalorder %s110, %s126
      %p128 = scmp.eq.s32.totalorder %s32, 0
      %p129 = por %p127, %p128
      %s131 = sadd.s32 %s130, 1
      %p134 = scmp.eq.s32.totalorder %s26, 1
      %p135 = scmp.ne.s32.totalorder %s130, %s132
      %p136 = scmp.eq.s32.totalorder %s26, 0
      %p137 = por %p135, %p136
      %p138 = scmp.ne.s32.totalorder %s130, %s132
      %p139 = scmp.eq.s32.totalorder %s31, 1
      %p140 = por %p138, %p139
      %p141 = scmp.ne.s32.totalorder %s132, %s133
      %p142 = scmp.eq.s32.totalorder %s31, 0
      %p143 = por %p141, %p142
      %p144 = scmp.ne.s32.totalorder %s132, %s133
      %p145 = scmp.eq.s32.totalorder %s32, 1
      %p146 = por %p144, %p145
      %p148 = scmp.ne.s32.totalorder %s133, %s147
      %p149 = scmp.eq.s32.totalorder %s32, 0
      %p150 = por %p148, %p149
      %s151 = ssub.s32 %s33, %s45
      %s152 = ssub.s32 %s34, %s41
      %s153 = sor.u32 %s151, %s152
      %p154 = scmp.eq.s32.totalorder %s153, 0
      %s156 = sadd.s32 %s155, 1
      %s157 = scalar_select %p154, %s155, %s156
      %p160 = pneg %p154
      %p161 = scmp.eq.s32.totalorder %s26, 1
      %p162 = por %p160, %p161
      %p163 = scmp.ne.s32.totalorder %s155, %s158
      %p164 = scmp.eq.s32.totalorder %s26, 0
      %p165 = por %p163, %p164
      %p166 = scmp.ne.s32.totalorder %s155, %s158
      %p167 = scmp.eq.s32.totalorder %s31, 1
      %p168 = por %p166, %p167
      %p169 = scmp.ne.s32.totalorder %s158, %s159
      %p170 = scmp.eq.s32.totalorder %s31, 0
      %p171 = por %p169, %p170
      %p172 = scmp.ne.s32.totalorder %s158, %s159
      %p173 = scmp.eq.s32.totalorder %s32, 1
      %p174 = por %p172, %p173
      %p176 = scmp.ne.s32.totalorder %s159, %s175
      %p177 = scmp.eq.s32.totalorder %s32, 0
      %p178 = por %p176, %p177
      %s179 = ssub.s32 %s33, %s45
      %s180 = ssub.s32 %s34, %s41
      %s181 = sor.u32 %s179, %s180
      %p182 = scmp.eq.s32.totalorder %s181, 0
      %s184 = sadd.s32 %s183, 1
      %s185 = scalar_select %p182, %s183, %s184
      %p188 = pneg %p182
      %p189 = scmp.eq.s32.totalorder %s26, 1
      %p190 = por %p188, %p189
      %p191 = scmp.ne.s32.totalorder %s183, %s186
      %p192 = scmp.eq.s32.totalorder %s26, 0
      %p193 = por %p191, %p192
      %p194 = scmp.ne.s32.totalorder %s183, %s186
      %p195 = scmp.eq.s32.totalorder %s31, 1
      %p196 = por %p194, %p195
      %p197 = scmp.ne.s32.totalorder %s186, %s187
      %p198 = scmp.eq.s32.totalorder %s31, 0
      %p199 = por %p197, %p198
      %p200 = scmp.ne.s32.totalorder %s186, %s187
      %p201 = scmp.eq.s32.totalorder %s32, 1
      %p202 = por %p200, %p201
      %p204 = scmp.ne.s32.totalorder %s187, %s203
      %p205 = scmp.eq.s32.totalorder %s32, 0
      %p206 = por %p204, %p205
      %s207 = ssub.s32 %s33, %s45
      %s208 = ssub.s32 %s34, %s41
      %s209 = sor.u32 %s207, %s208
      %p210 = scmp.eq.s32.totalorder %s209, 0
      %s212 = sadd.s32 %s211, 1
      %s213 = scalar_select %p210, %s211, %s212
      %p216 = pneg %p210
      %p217 = scmp.eq.s32.totalorder %s26, 1
      %p218 = por %p216, %p217
      %p219 = scmp.ne.s32.totalorder %s211, %s214
      %p220 = scmp.eq.s32.totalorder %s26, 0
      %p221 = por %p219, %p220
      %p222 = scmp.ne.s32.totalorder %s211, %s214
      %p223 = scmp.eq.s32.totalorder %s31, 1
      %p224 = por %p222, %p223
      %p225 = scmp.ne.s32.totalorder %s214, %s215
      %p226 = scmp.eq.s32.totalorder %s31, 0
      %p227 = por %p225, %p226
      %p228 = scmp.ne.s32.totalorder %s214, %s215
      %p229 = scmp.eq.s32.totalorder %s32, 1
      %p230 = por %p228, %p229
      %p232 = scmp.ne.s32.totalorder %s215, %s231
      %p233 = scmp.eq.s32.totalorder %s32, 0
      %p234 = por %p232, %p233
      %p235 = scmp.le.s32.totalorder 1, %s26
      %p236 = scmp.lt.s32.totalorder %s26, 3
      %p237 = pnand %p235, %p236
      %p238 = pneg %p237
      // Predicated region
      $region9: #{importance_renderer_forward.7} parent=5 // pred_check
        _
      $region10: #{importance_renderer_forward.7} parent=5 // pred_check_branch
        %240 = sbr.rel (%p237) target = $region12
      $region11: #{importance_renderer_forward.7} parent=5 // pred_region
        %s241 = ssub.s32 %s26, 1
        // Predicated region
        $region13: #{importance_renderer_forward.7} parent=11 // pred_check
          %p242 = pneg %p143
        $region14: #{importance_renderer_forward.7} parent=11 // pred_check_branch
          %244 = sbr.rel (%p242) target = $region16
        $region15: #{importance_renderer_forward.7} parent=11 // pred_region
          %s246 = ssub.s32 16, 16
          %247 = vsyncadd [#allocation5], %s246
          %250 = dma.hbm_to_smem %s3, 16, [#allocation9], [#allocation5]
        $region16: #{importance_renderer_forward.7} parent=11 // pred_fallthru
          _
      $region12: #{importance_renderer_forward.7} parent=5 // pred_fallthru
        _
      %p251 = scmp.lt.s32.totalorder %s26, 2
      // Predicated region
      $region17: #{importance_renderer_forward.7} parent=5 // pred_check
        %p252 = pneg %p251
      $region18: #{importance_renderer_forward.7} parent=5 // pred_check_branch
        %254 = sbr.rel (%p252) target = $region20
      $region19: #{importance_renderer_forward.7} parent=5 // pred_region
        // Predicated region
        $region21: #{importance_renderer_forward.7} parent=19 // pred_check
          %p255 = pneg %p60
        $region22: #{importance_renderer_forward.7} parent=19 // pred_check_branch
          %257 = sbr.rel (%p255) target = $region24
        $region23: #{importance_renderer_forward.7} parent=19 // pred_region
          %s258 = sand.u32 %s50, 1
          %s259 = scalar_lea.sflag [#allocation3], %s258
          %s260 = sand.u32 %s50, 1
          %s261 = smul.addr %s260, 24
          %s262 = scalar_lea.vmem [#allocation2], %s261
          %s264 = ssub.s32 384, 384
          %265 = vsyncadd %s259, %s264
          %s266 = smul.addr %s33, 3
          %s267 = sadd.s32 %s34, %s266
          %s268 = smul.addr %s267, 128
          %s269 = scalar_lea.hbm %s0, %s268
          %s270 = sshll.u32 %s262, 4
          %s271 = int_to_ptr.vmem [resolvable:$true] %s270
          %276 = dma.hbm_to_vmem [thread:$0]  %s269, 384, %s271, %s259, 128, 128, 8
        $region24: #{importance_renderer_forward.7} parent=19 // pred_fallthru
          _
        // Predicated region
        $region25: #{importance_renderer_forward.7} parent=19 // pred_check
          %p277 = pneg %p88
        $region26: #{importance_renderer_forward.7} parent=19 // pred_check_branch
          %279 = sbr.rel (%p277) target = $region28
        $region27: #{importance_renderer_forward.7} parent=19 // pred_region
          %s280 = sand.u32 %s26, 1
          %s281 = scalar_lea.sflag [#allocation7], %s280
          %s282 = sand.u32 %s78, 1
          %s283 = smul.addr %s282, 8
          %s284 = scalar_lea.vmem [#allocation6], %s283
          %s286 = ssub.s32 128, 128
          %287 = vsyncadd %s281, %s286
          %s288 = sadd.s32 %s34, %s33
          %s289 = smul.addr %s288, 128
          %s290 = scalar_lea.hbm %s1, %s289
          %s292 = sshll.u32 %s284, 4
          %s293 = int_to_ptr.vmem [resolvable:$true] %s292
          %295 = dma.hbm_to_vmem [thread:$0]  %s290, 128, %s293, %s281
        $region28: #{importance_renderer_forward.7} parent=19 // pred_fallthru
          _
        // Predicated region
        $region29: #{importance_renderer_forward.7} parent=19 // pred_check
          %p296 = pneg %p116
        $region30: #{importance_renderer_forward.7} parent=19 // pred_check_branch
          %298 = sbr.rel (%p296) target = $region32
        $region31: #{importance_renderer_forward.7} parent=19 // pred_region
          %s299 = sand.u32 %s26, 1
          %s300 = scalar_lea.sflag [#allocation7], %s299
          %s301 = sand.u32 %s106, 1
          %s302 = smul.addr %s301, 8
          %s303 = scalar_lea.vmem [#allocation8], %s302
          %s305 = ssub.s32 128, 128
          %306 = vsyncadd %s300, %s305
          %s307 = sadd.s32 %s34, %s33
          %s308 = smul.addr %s307, 128
          %s309 = scalar_lea.hbm %s2, %s308
          %s311 = sshll.u32 %s303, 4
          %s312 = int_to_ptr.vmem [resolvable:$true] %s311
          %314 = dma.hbm_to_vmem [thread:$0]  %s309, 128, %s312, %s300
        $region32: #{importance_renderer_forward.7} parent=19 // pred_fallthru
          _
      $region20: #{importance_renderer_forward.7} parent=5 // pred_fallthru
        _
      %p315 = scmp.le.s32.totalorder 1, %s26
      %p316 = scmp.lt.s32.totalorder %s26, 3
      %p317 = pnand %p315, %p316
      %p318 = pneg %p317
      // Predicated region
      $region33: #{importance_renderer_forward.7} parent=5 // pred_check
        _
      $region34: #{importance_renderer_forward.7} parent=5 // pred_check_branch
        %320 = sbr.rel (%p317) target = $region36
      $region35: #{importance_renderer_forward.7} parent=5 // pred_region
        %s321 = ssub.s32 %s26, 1
        %s322 = sand.u32 %s53, 1
        %s323 = scalar_lea.sflag [#allocation3], %s322
        %s324 = sand.u32 %s53, 1
        %s325 = smul.addr %s324, 24
        %s326 = scalar_lea.vmem [#allocation2], %s325
        // Predicated region
        $region37: #{importance_renderer_forward.7} parent=35 // pred_check
          %p327 = pneg %p66
        $region38: #{importance_renderer_forward.7} parent=35 // pred_check_branch
          %329 = sbr.rel (%p327) target = $region40
        $region39: #{importance_renderer_forward.7} parent=35 // pred_region
          %330 = dma.done %s323, 384
        $region40: #{importance_renderer_forward.7} parent=35 // pred_fallthru
          _
        %s331 = sand.u32 %s31, 1
        %s332 = scalar_lea.sflag [#allocation7], %s331
        %s333 = sand.u32 %s81, 1
        %s334 = smul.addr %s333, 8
        %s335 = scalar_lea.vmem [#allocation6], %s334
        // Predicated region
        $region41: #{importance_renderer_forward.7} parent=35 // pred_check
          %p336 = pneg %p94
        $region42: #{importance_renderer_forward.7} parent=35 // pred_check_branch
          %338 = sbr.rel (%p336) target = $region44
        $region43: #{importance_renderer_forward.7} parent=35 // pred_region
          %339 = dma.done %s332, 128
        $region44: #{importance_renderer_forward.7} parent=35 // pred_fallthru
          _
        %s340 = sand.u32 %s31, 1
        %s341 = scalar_lea.sflag [#allocation7], %s340
        %s342 = sand.u32 %s109, 1
        %s343 = smul.addr %s342, 8
        %s344 = scalar_lea.vmem [#allocation8], %s343
        // Predicated region
        $region45: #{importance_renderer_forward.7} parent=35 // pred_check
          %p345 = pneg %p122
        $region46: #{importance_renderer_forward.7} parent=35 // pred_check_branch
          %347 = sbr.rel (%p345) target = $region48
        $region47: #{importance_renderer_forward.7} parent=35 // pred_region
          %348 = dma.done %s341, 128
        $region48: #{importance_renderer_forward.7} parent=35 // pred_fallthru
          _
        // Predicated region
        $region49: #{importance_renderer_forward.7} parent=35 // pred_check
          %p349 = pneg %p143
        $region50: #{importance_renderer_forward.7} parent=35 // pred_check_branch
          %351 = sbr.rel (%p349) target = $region52
        $region51: #{importance_renderer_forward.7} parent=35 // pred_region
          %352 = dma.done [#allocation5], 16
        $region52: #{importance_renderer_forward.7} parent=35 // pred_fallthru
          _
        %353 = sfence
        %s354 = sand.u32 %s53, 1
        %s355 = scalar_lea.sflag [#allocation3], %s354
        %s356 = sand.u32 %s53, 1
        %s357 = smul.addr %s356, 24
        %s358 = scalar_lea.vmem [#allocation2], %s357
        %p359 = pneg %p66
        %p360 = pneg %p63
        %s361 = sand.u32 %s31, 1
        %s362 = scalar_lea.sflag [#allocation7], %s361
        %s363 = sand.u32 %s81, 1
        %s364 = smul.addr %s363, 8
        %s365 = scalar_lea.vmem [#allocation6], %s364
        %p366 = pneg %p94
        %p367 = pneg %p91
        %s368 = sand.u32 %s31, 1
        %s369 = scalar_lea.sflag [#allocation7], %s368
        %s370 = sand.u32 %s109, 1
        %s371 = smul.addr %s370, 8
        %s372 = scalar_lea.vmem [#allocation8], %s371
        %p373 = pneg %p122
        %p374 = pneg %p119
        %p375 = pneg %p143
        %p376 = pneg %p140
        %p377 = pneg %p171
        %p378 = pneg %p168
        %s379 = sand.u32 %s158, 1
        %s380 = scalar_lea.sflag [#allocation4], %s379
        %s381 = sand.u32 %s158, 1
        %s382 = smul.addr %s381, 4
        %s383 = scalar_lea.vmem [#allocation10], %s382
        %p384 = pneg %p199
        %p385 = pneg %p196
        %s386 = sand.u32 %s31, 1
        %s387 = scalar_lea.sflag [#allocation12], %s386
        %s388 = sand.u32 %s186, 1
        %s389 = scalar_lea.vmem [#allocation11], %s388
        %p390 = pneg %p227
        %p391 = pneg %p224
        %s392 = sand.u32 %s31, 1
        %s393 = scalar_lea.sflag [#allocation12], %s392
        %s394 = sand.u32 %s214, 1
        %s395 = smul.addr %s394, 8
        %s396 = scalar_lea.vmem [#allocation13], %s395
        %v397 = vld [vmem:[%s326] sm:$0xff]
        %v398 = vld [vmem:[%s326 + $0x8] sm:$0xff]
        %v399 = vld [vmem:[%s326 + $0x10] sm:$0xff]
        %v400 = vld [vmem:[%s335] sm:$0xff]
        %v401 = vld [vmem:[%s344] sm:$0xff]
        %v403 = vrot.slane %v401, 7
        %v405 = vsub.f32 %v401, %v403
        %v409 = vrot.slane %v397, 1
        %v410 = vrot.slane %v398, 1
        %v411 = vrot.slane %v399, 1
        %v415 = vadd.f32 %v397, %v409
        %v416 = vadd.f32 %v398, %v410
        %v417 = vadd.f32 %v399, %v411
        %v418 = vmul.f32 %v415, 0.5
        %v419 = vmul.f32 %v416, 0.5
        %v420 = vmul.f32 %v417, 0.5
        %v422 = vrot.slane %v400, 1
        %v424 = vadd.f32 %v400, %v422
        %v425 = vmul.f32 %v424, 0.5
        %v426 = vrot.slane %v401, 1
        %v428 = vadd.f32 %v401, %v426
        %v429 = vmul.f32 %v428, 0.5
        %v430 = vsub.f32 %v425, 1.0
        %vm431 = vcmp.gt.f32.partialorder %v430, 20.0
        %v432 = vmin.f32 %v430, 20.0
        %v433 = vmul.f32 %v432, 1.442695
        %v434 = vpow.pop %v433
        %v435 = vadd.f32 %v434, 1.0
        %v436 = vlog2.pop %v435
        %v437 = vmul.f32 %v436, 0.6931472
        %v438 = vsel %vm431, %v430, %v437
        %v440 = vrot.slane %v405, 1
        %v442 = vmul.f32 %v438, %v440
        %v443 = vsub.f32 0.0, %v442
        %v444 = vmul.f32 %v443, 1.442695
        %v445 = vpow.pop %v444
        %v446 = vsub.f32 1.0, %v445
        %v447 = vsub.f32 1.0, %v446
        %v448 = vadd.f32 %v447, 1e-10
        %v450 = vrot.slane %v448, 7
        %v452 = vmul.f32 %v446, %v450
        %v453 = vrot.slane %v448, 1
        %v455 = vmul.f32 %v448, %v453
        %v457 = vrot.slane %v455, 6
        %v459 = vmul.f32 %v446, %v457
        %v460 = vrot.slane %v448, 2
        %v462 = vmul.f32 %v455, %v460
        %v464 = vrot.slane %v462, 5
        %v466 = vmul.f32 %v446, %v464
        %v467 = vrot.slane %v448, 3
        %v469 = vmul.f32 %v462, %v467
        %v471 = vrot.slane %v469, 4
        %v473 = vmul.f32 %v446, %v471
        %v474 = vrot.slane %v448, 4
        %v476 = vmul.f32 %v469, %v474
        %v478 = vrot.slane %v476, 3
        %v480 = vmul.f32 %v446, %v478
        %v481 = vrot.slane %v448, 5
        %v483 = vmul.f32 %v476, %v481
        %v485 = vrot.slane %v483, 2
        %v487 = vmul.f32 %v446, %v485
        %vm488 = vcmask 1040384
        %v489 = vsel %vm488, %v446, %v452
        %vm490 = vcmask 1041408
        %v491 = vsel %vm490, %v489, %v459
        %vm492 = vcmask 1042432
        %v493 = vsel %vm492, %v491, %v466
        %vm494 = vcmask 1043456
        %v495 = vsel %vm494, %v493, %v473
        %vm496 = vcmask 1044480
        %v497 = vsel %vm496, %v495, %v480
        %vm498 = vcmask 1045504
        %v499 = vsel %vm498, %v497, %v487
        %v500 = vmul.f32 %v499, %v418
        %v501 = vmul.f32 %v499, %v419
        %v502 = vmul.f32 %v499, %v420
        %vm503 = vcmask 129024
        %v504 = vsel %vm503, %v500, 0.0
        %v505 = vrot.slane %v504, 4
        %v506 = vadd.f32 %v504, %v505
        %v507 = vrot.slane %v506, 2
        %v508 = vadd.f32 %v506, %v507
        %v509 = vrot.slane %v508, 1
        %v510 = vadd.f32 %v508, %v509
        %v511 = vsel %vm503, %v501, 0.0
        %v512 = vrot.slane %v511, 4
        %v513 = vadd.f32 %v511, %v512
        %v514 = vrot.slane %v513, 2
        %v515 = vadd.f32 %v513, %v514
        %v516 = vrot.slane %v515, 1
        %v517 = vadd.f32 %v515, %v516
        %v518 = vsel %vm503, %v502, 0.0
        %v519 = vrot.slane %v518, 4
        %v520 = vadd.f32 %v518, %v519
        %v521 = vrot.slane %v520, 2
        %v522 = vadd.f32 %v520, %v521
        %v523 = vrot.slane %v522, 1
        %v524 = vadd.f32 %v522, %v523
        %v525 = vsel %vm503, %v499, 0.0
        %v526 = vrot.slane %v525, 4
        %v527 = vadd.f32 %v525, %v526
        %v528 = vrot.slane %v527, 2
        %v529 = vadd.f32 %v527, %v528
        %v530 = vrot.slane %v529, 1
        %v531 = vadd.f32 %v529, %v530
        %v532 = vmul.f32 %v499, %v429
        %v533 = vsel %vm503, %v532, 0.0
        %v534 = vrot.slane %v533, 4
        %v535 = vadd.f32 %v533, %v534
        %v536 = vrot.slane %v535, 2
        %v537 = vadd.f32 %v535, %v536
        %v538 = vrot.slane %v537, 1
        %v539 = vadd.f32 %v537, %v538
        %v540 = vrcp.pop %v531
        %v541 = vmul.f32 %v539, %v540
        %vm542 = vcmp.ne.f32.partialorder %v541, %v541
        %v543 = vsel %vm542, inf, %v541
        %s544 = sld [smem:[#allocation9]]
        %s545 = sld [smem:[#allocation9 + $0x1]]
        %v546 = vstv %s544
        %v547 = vmax.f32 %v546, %v543
        %v548 = vstv %s545
        %v549 = vmin.f32 %v548, %v547
        %v550 = vmul.f32 %v510, 2.0
        %v551 = vmul.f32 %v517, 2.0
        %v552 = vmul.f32 %v524, 2.0
        %v553 = vsub.f32 %v550, 1.0
        %v554 = vsub.f32 %v551, 1.0
        %v555 = vsub.f32 %v552, 1.0
        %vm559 = vcmask 1041409
        %v560 = vsel %vm559, %v554, %v553
        %vm561 = vcmask 1042434
        %v562 = vsel %vm561, %v555, %v560
        %vm564 = vcmask 124928
        %565 = vst.msk [vmem:[%s383] sm:$0x7] %vm564, %v562
        %vm566 = vcmask 122880
        %567 = vst.msk [vmem:[%s389] sm:$0x1] %vm566, %v549
        %568 = vst.msk [vmem:[%s396] sm:$0x7f] %vm503, %v499
        %s569 = sand.u32 %s158, 1
        %s570 = scalar_lea.sflag [#allocation4], %s569
        %s571 = sand.u32 %s158, 1
        %s572 = smul.addr %s571, 4
        %s573 = scalar_lea.vmem [#allocation10], %s572
        %s574 = sand.u32 %s31, 1
        %s575 = scalar_lea.sflag [#allocation12], %s574
        %s576 = sand.u32 %s186, 1
        %s577 = scalar_lea.vmem [#allocation11], %s576
        %s578 = sand.u32 %s31, 1
        %s579 = scalar_lea.sflag [#allocation12], %s578
        %s580 = sand.u32 %s214, 1
        %s581 = smul.addr %s580, 8
        %s582 = scalar_lea.vmem [#allocation13], %s581
        // Predicated region
        $region53: #{importance_renderer_forward.7} parent=35 // pred_check
          %p583 = pneg %p168
        $region54: #{importance_renderer_forward.7} parent=35 // pred_check_branch
          %585 = sbr.rel (%p583) target = $region56
        $region55: #{importance_renderer_forward.7} parent=35 // pred_region
          %s587 = ssub.s32 64, 64
          %588 = vsyncadd %s570, %s587
          %s589 = sadd.s32 %s36, %s35
          %s590 = smul.addr %s589, 64
          %s591 = scalar_lea.hbm %s4, %s590
          %s593 = sshll.u32 %s573, 4
          %s594 = int_to_ptr.vmem [resolvable:$true] %s593
          %596 = dma.vmem_to_hbm [thread:$0]  %s594, 64, %s591, %s570
        $region56: #{importance_renderer_forward.7} parent=35 // pred_fallthru
          _
        // Predicated region
        $region57: #{importance_renderer_forward.7} parent=35 // pred_check
          %p597 = pneg %p196
        $region58: #{importance_renderer_forward.7} parent=35 // pred_check_branch
          %599 = sbr.rel (%p597) target = $region60
        $region59: #{importance_renderer_forward.7} parent=35 // pred_region
          %s601 = ssub.s32 16, 16
          %602 = vsyncadd %s575, %s601
          %s603 = sadd.s32 %s36, %s35
          %s604 = smul.addr %s603, 16
          %s605 = scalar_lea.hbm %s5, %s604
          %s607 = sshll.u32 %s577, 4
          %s608 = int_to_ptr.vmem [resolvable:$true] %s607
          %610 = dma.vmem_to_hbm [thread:$0]  %s608, 16, %s605, %s575
        $region60: #{importance_renderer_forward.7} parent=35 // pred_fallthru
          _
        // Predicated region
        $region61: #{importance_renderer_forward.7} parent=35 // pred_check
          %p611 = pneg %p224
        $region62: #{importance_renderer_forward.7} parent=35 // pred_check_branch
          %613 = sbr.rel (%p611) target = $region64
        $region63: #{importance_renderer_forward.7} parent=35 // pred_region
          %s615 = ssub.s32 128, 128
          %616 = vsyncadd %s579, %s615
          %s617 = sadd.s32 %s36, %s35
          %s618 = smul.addr %s617, 128
          %s619 = scalar_lea.hbm %s6, %s618
          %s621 = sshll.u32 %s582, 4
          %s622 = int_to_ptr.vmem [resolvable:$true] %s621
          %624 = dma.vmem_to_hbm [thread:$0]  %s622, 128, %s619, %s579
        $region64: #{importance_renderer_forward.7} parent=35 // pred_fallthru
          _
      $region36: #{importance_renderer_forward.7} parent=5 // pred_fallthru
        _
      %p625 = scmp.le.s32.totalorder 2, %s26
      // Predicated region
      $region65: #{importance_renderer_forward.7} parent=5 // pred_check
        %p626 = pneg %p625
      $region66: #{importance_renderer_forward.7} parent=5 // pred_check_branch
        %628 = sbr.rel (%p626) target = $region68
      $region67: #{importance_renderer_forward.7} parent=5 // pred_region
        %s629 = ssub.s32 %s26, 2
        // Predicated region
        $region69: #{importance_renderer_forward.7} parent=67 // pred_check
          %p630 = pneg %p174
        $region70: #{importance_renderer_forward.7} parent=67 // pred_check_branch
          %632 = sbr.rel (%p630) target = $region72
        $region71: #{importance_renderer_forward.7} parent=67 // pred_region
          %s633 = sand.u32 %s159, 1
          %s634 = scalar_lea.sflag [#allocation4], %s633
          %s635 = sand.u32 %s159, 1
          %s636 = smul.addr %s635, 4
          %s637 = scalar_lea.vmem [#allocation10], %s636
          %638 = dma.done %s634, 64
        $region72: #{importance_renderer_forward.7} parent=67 // pred_fallthru
          _
        // Predicated region
        $region73: #{importance_renderer_forward.7} parent=67 // pred_check
          %p639 = pneg %p202
        $region74: #{importance_renderer_forward.7} parent=67 // pred_check_branch
          %641 = sbr.rel (%p639) target = $region76
        $region75: #{importance_renderer_forward.7} parent=67 // pred_region
          %s642 = sand.u32 %s32, 1
          %s643 = scalar_lea.sflag [#allocation12], %s642
          %s644 = sand.u32 %s187, 1
          %s645 = scalar_lea.vmem [#allocation11], %s644
          %646 = dma.done %s643, 16
        $region76: #{importance_renderer_forward.7} parent=67 // pred_fallthru
          _
        // Predicated region
        $region77: #{importance_renderer_forward.7} parent=67 // pred_check
          %p647 = pneg %p230
        $region78: #{importance_renderer_forward.7} parent=67 // pred_check_branch
          %649 = sbr.rel (%p647) target = $region80
        $region79: #{importance_renderer_forward.7} parent=67 // pred_region
          %s650 = sand.u32 %s32, 1
          %s651 = scalar_lea.sflag [#allocation12], %s650
          %s652 = sand.u32 %s215, 1
          %s653 = smul.addr %s652, 8
          %s654 = scalar_lea.vmem [#allocation13], %s653
          %655 = dma.done %s651, 128
        $region80: #{importance_renderer_forward.7} parent=67 // pred_fallthru
          _
      $region68: #{importance_renderer_forward.7} parent=5 // pred_fallthru
        _
    $region6: #{importance_renderer_forward.7} parent=1 // loop_footer
      %s30 = sadd.s32 1, %s26
    $region7: #{importance_renderer_forward.7} parent=1 // loop_footer_branch
      %25 = sbr.rel target = $region3
    $region8: #{importance_renderer_forward.7} parent=1 // loop_exit
      _
    %656 = vsyncpa [#allocation3], 1
    %s657 = scalar_lea.sflag [#allocation3], 1
    %658 = vsyncpa %s657, 1
    %659 = vsyncpa [#allocation7], 1
    %s660 = scalar_lea.sflag [#allocation7], 1
    %661 = vsyncpa %s660, 1
    %662 = vsyncpa [#allocation4], 1
    %s663 = scalar_lea.sflag [#allocation4], 1
    %664 = vsyncpa %s663, 1
    %665 = vsyncpa [#allocation12], 1
    %s666 = scalar_lea.sflag [#allocation12], 1
    %667 = vsyncpa %s666, 1
    %668 = vsyncpa [#allocation5], 1
    %s669 = scalar_lea.sflag [#allocation5], 1
    %670 = vsyncpa %s669, 1

// kernel: importance_renderer_forward.6
$region0: #{importance_renderer_forward.6}
  #allocation0 [shape = 'u32[]', space=smem, size = 0x4, offset = 0x4, fixed_abs, tag = 'smem constant byte address 0x4 - core index']
  #allocation1 [shape = 'u32[144,128]{1,0:T(1,128)}', space=vmem, size = 0x12000, scoped, tag = 'internal scratch']
  #allocation2 [shape = 'f32[8,128]{1,0:T(8,128)}', space=vmem, size = 0x1000, scoped, tag = 'scratch operand']
  %s0 = inlined_call_operand.hbm [shape: f32[2,3,128], index: 0, kind: input, shape index: {}]
  %s1 = inlined_call_operand.hbm [shape: f32[2,3,8,256], index: 1, kind: input, shape index: {}]
  %s2 = inlined_call_operand.hbm [shape: f32[32,8], index: 2, kind: input, shape index: {}]
  %s3 = inlined_call_operand.hbm [shape: f32[32,1], index: 3, kind: input, shape index: {}]
  %s4 = inlined_call_operand.hbm [shape: f32[4,32], index: 4, kind: input, shape index: {}]
  %s5 = inlined_call_operand.hbm [shape: f32[4,1], index: 5, kind: input, shape index: {}]
  %s6 = inlined_call_operand.hbm [shape: f32[2,4,128], index: 6, kind: output, shape index: {}]
  %s7 = sld [smem:[#allocation0]]
  $region89: #{importance_renderer_forward.6} parent=0
    _
  %s9 = ssub.s32 1, %s7
  %s10 = scalar_select 0, %s9, %s7
  $region1: #{importance_renderer_forward.6} parent=0
    #allocation3 [shape = 'u8[4096]{0}', space=vmem, size = 0x1000, scoped, tag = 'input window, operand 0']
    #allocation4 [shape = 's32[2]{0}', space=sflag, size = 0x8, scoped, tag = 'scoped memory for importance_renderer_forward.6']
    #allocation5 [shape = 's32[2]{0}', space=sflag, size = 0x8, scoped, tag = 'scoped memory for importance_renderer_forward.6']
    #allocation6 [shape = 'u8[49152]{0}', space=vmem, size = 0xc000, scoped, tag = 'input window, operand 1']
    #allocation7 [shape = 's32[2]{0}', space=sflag, size = 0x8, scoped, tag = 'scoped memory for importance_renderer_forward.6']
    #allocation8 [shape = 'u8[16384]{0}', space=vmem, size = 0x4000, scoped, tag = 'input window, operand 2, single buffered']
    #allocation9 [shape = 'u8[16384]{0}', space=vmem, size = 0x4000, scoped, tag = 'input window, operand 3, single buffered']
    #allocation10 [shape = 's32[1]{0}', space=sflag, size = 0x4, scoped, tag = 'scoped memory for importance_renderer_forward.6']
    #allocation11 [shape = 'u8[2048]{0}', space=vmem, size = 0x800, scoped, tag = 'input window, operand 4, single buffered']
    #allocation12 [shape = 'u8[2048]{0}', space=vmem, size = 0x800, scoped, tag = 'input window, operand 5, single buffered']
    #allocation13 [shape = 's32[1]{0}', space=sflag, size = 0x4, scoped, tag = 'scoped memory for importance_renderer_forward.6']
    #allocation14 [shape = 'u8[4096]{0}', space=vmem, size = 0x1000, scoped, tag = 'output window, operand 0']
    %11 = vsyncpa [#allocation4], 0
    %s12 = scalar_lea.sflag [#allocation4], 1
    %13 = vsyncpa %s12, 0
    %14 = vsyncpa [#allocation7], 0
    %s15 = scalar_lea.sflag [#allocation7], 1
    %16 = vsyncpa %s15, 0
    %17 = vsyncpa [#allocation10], 0
    %18 = vsyncpa [#allocation13], 0
    %19 = vsyncpa [#allocation5], 0
    %s20 = scalar_lea.sflag [#allocation5], 1
    %21 = vsyncpa %s20, 0
    loop: start=0, step=1, limit=4
    $region2: #{importance_renderer_forward.6} parent=1 // loop_pre_header
      _
    $region3: #{importance_renderer_forward.6} parent=1 // loop_header
      %s23 = sphi 0, %s27
      %p24 = scmp.ge.s32.totalorder %s23, 4
      %s30 = sphi 0, %s49
      %s31 = sphi 0, %s45
      %s32 = sphi 0, %s41
      %s33 = sphi 0, %s30
      %s34 = sphi 0, %s31
      %s35 = sphi 0, %s32
      %s36 = sphi 0, %s33
      %s37 = sphi 0, %s34
      %s38 = sphi 0, %s35
      %s54 = sphi 0, %s56
      %s57 = sphi 0, %s54
      %s58 = sphi 0, %s57
      %s74 = sphi 0, %s58
      %s82 = sphi 0, %s84
      %s85 = sphi 0, %s82
      %s86 = sphi 0, %s85
      %s102 = sphi 0, %s86
      %s106 = sphi 0, %s106
      %s108 = sphi 0, %s106
      %s109 = sphi 0, %s108
      %s123 = sphi 0, %s109
      %s127 = sphi 0, %s127
      %s129 = sphi 0, %s127
      %s130 = sphi 0, %s129
      %s144 = sphi 0, %s130
      %s148 = sphi 0, %s148
      %s150 = sphi 0, %s148
      %s151 = sphi 0, %s150
      %s165 = sphi 0, %s151
      %s169 = sphi 0, %s169
      %s171 = sphi 0, %s169
      %s172 = sphi 0, %s171
      %s186 = sphi 0, %s172
      %s194 = sphi 0, %s196
      %s197 = sphi 0, %s194
      %s198 = sphi 0, %s197
      %s214 = sphi 0, %s198
    $region4: #{importance_renderer_forward.6} parent=1 // loop_header_branch
      %26 = sbr.rel (%p24) target = $region8
    $region5: #{importance_renderer_forward.6} parent=1 // loop_body
      %s28 = ssub.s32 %s23, 1
      %s29 = ssub.s32 %s23, 2
      %s39 = sadd.s32 1, %s32
      %p40 = scmp.ge.s32.totalorder %s39, 1
      %s41 = scalar_select %p40, 0, %s39
      %s42 = sadd.s32 1, %s31
      %s43 = scalar_select %p40, %s42, %s31
      %p44 = scmp.ge.s32.totalorder %s43, 1
      %s45 = scalar_select %p44, 0, %s43
      %s46 = sadd.s32 1, %s30
      %s47 = scalar_select %p44, %s46, %s30
      %p48 = scmp.ge.s32.totalorder %s47, 2
      %s49 = scalar_select %p48, 0, %s47
      %s50 = ssub.s32 %s30, %s49
      %s51 = ssub.s32 %s31, %s45
      %s52 = sor.u32 %s50, %s51
      %p53 = scmp.eq.s32.totalorder %s52, 0
      %s55 = sadd.s32 %s54, 1
      %s56 = scalar_select %p53, %s54, %s55
      %p59 = pneg %p53
      %p60 = scmp.eq.s32.totalorder %s23, 1
      %p61 = por %p59, %p60
      %p62 = scmp.ne.s32.totalorder %s54, %s57
      %p63 = scmp.eq.s32.totalorder %s23, 0
      %p64 = por %p62, %p63
      %p65 = scmp.ne.s32.totalorder %s54, %s57
      %p66 = scmp.eq.s32.totalorder %s28, 1
      %p67 = por %p65, %p66
      %p68 = scmp.ne.s32.totalorder %s57, %s58
      %p69 = scmp.eq.s32.totalorder %s28, 0
      %p70 = por %p68, %p69
      %p71 = scmp.ne.s32.totalorder %s57, %s58
      %p72 = scmp.eq.s32.totalorder %s29, 1
      %p73 = por %p71, %p72
      %p75 = scmp.ne.s32.totalorder %s58, %s74
      %p76 = scmp.eq.s32.totalorder %s29, 0
      %p77 = por %p75, %p76
      %s78 = ssub.s32 %s30, %s49
      %s79 = ssub.s32 %s32, %s41
      %s80 = sor.u32 %s78, %s79
      %p81 = scmp.eq.s32.totalorder %s80, 0
      %s83 = sadd.s32 %s82, 1
      %s84 = scalar_select %p81, %s82, %s83
      %p87 = pneg %p81
      %p88 = scmp.eq.s32.totalorder %s23, 1
      %p89 = por %p87, %p88
      %p90 = scmp.ne.s32.totalorder %s82, %s85
      %p91 = scmp.eq.s32.totalorder %s23, 0
      %p92 = por %p90, %p91
      %p93 = scmp.ne.s32.totalorder %s82, %s85
      %p94 = scmp.eq.s32.totalorder %s28, 1
      %p95 = por %p93, %p94
      %p96 = scmp.ne.s32.totalorder %s85, %s86
      %p97 = scmp.eq.s32.totalorder %s28, 0
      %p98 = por %p96, %p97
      %p99 = scmp.ne.s32.totalorder %s85, %s86
      %p100 = scmp.eq.s32.totalorder %s29, 1
      %p101 = por %p99, %p100
      %p103 = scmp.ne.s32.totalorder %s86, %s102
      %p104 = scmp.eq.s32.totalorder %s29, 0
      %p105 = por %p103, %p104
      %s107 = sadd.s32 %s106, 1
      %p110 = scmp.eq.s32.totalorder %s23, 1
      %p111 = scmp.ne.s32.totalorder %s106, %s108
      %p112 = scmp.eq.s32.totalorder %s23, 0
      %p113 = por %p111, %p112
      %p114 = scmp.ne.s32.totalorder %s106, %s108
      %p115 = scmp.eq.s32.totalorder %s28, 1
      %p116 = por %p114, %p115
      %p117 = scmp.ne.s32.totalorder %s108, %s109
      %p118 = scmp.eq.s32.totalorder %s28, 0
      %p119 = por %p117, %p118
      %p120 = scmp.ne.s32.totalorder %s108, %s109
      %p121 = scmp.eq.s32.totalorder %s29, 1
      %p122 = por %p120, %p121
      %p124 = scmp.ne.s32.totalorder %s109, %s123
      %p125 = scmp.eq.s32.totalorder %s29, 0
      %p126 = por %p124, %p125
      %s128 = sadd.s32 %s127, 1
      %p131 = scmp.eq.s32.totalorder %s23, 1
      %p132 = scmp.ne.s32.totalorder %s127, %s129
      %p133 = scmp.eq.s32.totalorder %s23, 0
      %p134 = por %p132, %p133
      %p135 = scmp.ne.s32.totalorder %s127, %s129
      %p136 = scmp.eq.s32.totalorder %s28, 1
      %p137 = por %p135, %p136
      %p138 = scmp.ne.s32.totalorder %s129, %s130
      %p139 = scmp.eq.s32.totalorder %s28, 0
      %p140 = por %p138, %p139
      %p141 = scmp.ne.s32.totalorder %s129, %s130
      %p142 = scmp.eq.s32.totalorder %s29, 1
      %p143 = por %p141, %p142
      %p145 = scmp.ne.s32.totalorder %s130, %s144
      %p146 = scmp.eq.s32.totalorder %s29, 0
      %p147 = por %p145, %p146
      %s149 = sadd.s32 %s148, 1
      %p152 = scmp.eq.s32.totalorder %s23, 1
      %p153 = scmp.ne.s32.totalorder %s148, %s150
      %p154 = scmp.eq.s32.totalorder %s23, 0
      %p155 = por %p153, %p154
      %p156 = scmp.ne.s32.totalorder %s148, %s150
      %p157 = scmp.eq.s32.totalorder %s28, 1
      %p158 = por %p156, %p157
      %p159 = scmp.ne.s32.totalorder %s150, %s151
      %p160 = scmp.eq.s32.totalorder %s28, 0
      %p161 = por %p159, %p160
      %p162 = scmp.ne.s32.totalorder %s150, %s151
      %p163 = scmp.eq.s32.totalorder %s29, 1
      %p164 = por %p162, %p163
      %p166 = scmp.ne.s32.totalorder %s151, %s165
      %p167 = scmp.eq.s32.totalorder %s29, 0
      %p168 = por %p166, %p167
      %s170 = sadd.s32 %s169, 1
      %p173 = scmp.eq.s32.totalorder %s23, 1
      %p174 = scmp.ne.s32.totalorder %s169, %s171
      %p175 = scmp.eq.s32.totalorder %s23, 0
      %p176 = por %p174, %p175
      %p177 = scmp.ne.s32.totalorder %s169, %s171
      %p178 = scmp.eq.s32.totalorder %s28, 1
      %p179 = por %p177, %p178
      %p180 = scmp.ne.s32.totalorder %s171, %s172
      %p181 = scmp.eq.s32.totalorder %s28, 0
      %p182 = por %p180, %p181
      %p183 = scmp.ne.s32.totalorder %s171, %s172
      %p184 = scmp.eq.s32.totalorder %s29, 1
      %p185 = por %p183, %p184
      %p187 = scmp.ne.s32.totalorder %s172, %s186
      %p188 = scmp.eq.s32.totalorder %s29, 0
      %p189 = por %p187, %p188
      %s190 = ssub.s32 %s30, %s49
      %s191 = ssub.s32 %s31, %s45
      %s192 = sor.u32 %s190, %s191
      %p193 = scmp.eq.s32.totalorder %s192, 0
      %s195 = sadd.s32 %s194, 1
      %s196 = scalar_select %p193, %s194, %s195
      %p199 = pneg %p193
      %p200 = scmp.eq.s32.totalorder %s23, 1
      %p201 = por %p199, %p200
      %p202 = scmp.ne.s32.totalorder %s194, %s197
      %p203 = scmp.eq.s32.totalorder %s23, 0
      %p204 = por %p202, %p203
      %p205 = scmp.ne.s32.totalorder %s194, %s197
      %p206 = scmp.eq.s32.totalorder %s28, 1
      %p207 = por %p205, %p206
      %p208 = scmp.ne.s32.totalorder %s197, %s198
      %p209 = scmp.eq.s32.totalorder %s28, 0
      %p210 = por %p208, %p209
      %p211 = scmp.ne.s32.totalorder %s197, %s198
      %p212 = scmp.eq.s32.totalorder %s29, 1
      %p213 = por %p211, %p212
      %p215 = scmp.ne.s32.totalorder %s198, %s214
      %p216 = scmp.eq.s32.totalorder %s29, 0
      %p217 = por %p215, %p216
      %p218 = scmp.le.s32.totalorder 1, %s23
      %p219 = scmp.lt.s32.totalorder %s23, 3
      %p220 = pnand %p218, %p219
      %p221 = pneg %p220
      // Predicated region
      $region9: #{importance_renderer_forward.6} parent=5 // pred_check
        _
      $region10: #{importance_renderer_forward.6} parent=5 // pred_check_branch
        %223 = sbr.rel (%p220) target = $region12
      $region11: #{importance_renderer_forward.6} parent=5 // pred_region
        %s224 = ssub.s32 %s23, 1
        // Predicated region
        $region13: #{importance_renderer_forward.6} parent=11 // pred_check
          %p225 = pneg %p119
        $region14: #{importance_renderer_forward.6} parent=11 // pred_check_branch
          %227 = sbr.rel (%p225) target = $region16
        $region15: #{importance_renderer_forward.6} parent=11 // pred_region
          %s229 = ssub.s32 512, 512
          %230 = vsyncadd [#allocation7], %s229
          %s231 = sshll.u32 [#allocation8], 4
          %s232 = int_to_ptr.vmem [resolvable:$true] %s231
          %237 = dma.hbm_to_vmem [thread:$0]  %s2, 512, %s232, [#allocation7], 128, 128, 8
        $region16: #{importance_renderer_forward.6} parent=11 // pred_fallthru
          _
        // Predicated region
        $region17: #{importance_renderer_forward.6} parent=11 // pred_check
          %p238 = pneg %p140
        $region18: #{importance_renderer_forward.6} parent=11 // pred_check_branch
          %240 = sbr.rel (%p238) target = $region20
        $region19: #{importance_renderer_forward.6} parent=11 // pred_region
          %s242 = ssub.s32 512, 512
          %243 = vsyncadd [#allocation10], %s242
          %s244 = sshll.u32 [#allocation9], 4
          %s245 = int_to_ptr.vmem [resolvable:$true] %s244
          %250 = dma.hbm_to_vmem [thread:$0]  %s3, 512, %s245, [#allocation10], 128, 128, 8
        $region20: #{importance_renderer_forward.6} parent=11 // pred_fallthru
          _
        // Predicated region
        $region21: #{importance_renderer_forward.6} parent=11 // pred_check
          %p251 = pneg %p161
        $region22: #{importance_renderer_forward.6} parent=11 // pred_check_branch
          %253 = sbr.rel (%p251) target = $region24
        $region23: #{importance_renderer_forward.6} parent=11 // pred_region
          %s255 = ssub.s32 64, 64
          %256 = vsyncadd [#allocation10], %s255
          %s258 = sshll.u32 [#allocation11], 4
          %s259 = int_to_ptr.vmem [resolvable:$true] %s258
          %261 = dma.hbm_to_vmem [thread:$0]  %s4, 64, %s259, [#allocation10]
        $region24: #{importance_renderer_forward.6} parent=11 // pred_fallthru
          _
        // Predicated region
        $region25: #{importance_renderer_forward.6} parent=11 // pred_check
          %p262 = pneg %p182
        $region26: #{importance_renderer_forward.6} parent=11 // pred_check_branch
          %264 = sbr.rel (%p262) target = $region28
        $region27: #{importance_renderer_forward.6} parent=11 // pred_region
          %s266 = ssub.s32 64, 64
          %267 = vsyncadd [#allocation13], %s266
          %s269 = sshll.u32 [#allocation12], 4
          %s270 = int_to_ptr.vmem [resolvable:$true] %s269
          %272 = dma.hbm_to_vmem [thread:$0]  %s5, 64, %s270, [#allocation13]
        $region28: #{importance_renderer_forward.6} parent=11 // pred_fallthru
          _
      $region12: #{importance_renderer_forward.6} parent=5 // pred_fallthru
        _
      %p273 = scmp.lt.s32.totalorder %s23, 2
      // Predicated region
      $region29: #{importance_renderer_forward.6} parent=5 // pred_check
        %p274 = pneg %p273
      $region30: #{importance_renderer_forward.6} parent=5 // pred_check_branch
        %276 = sbr.rel (%p274) target = $region32
      $region31: #{importance_renderer_forward.6} parent=5 // pred_region
        // Predicated region
        $region33: #{importance_renderer_forward.6} parent=31 // pred_check
          %p277 = pneg %p64
        $region34: #{importance_renderer_forward.6} parent=31 // pred_check_branch
          %279 = sbr.rel (%p277) target = $region36
        $region35: #{importance_renderer_forward.6} parent=31 // pred_region
          %s280 = sand.u32 %s54, 1
          %s281 = scalar_lea.sflag [#allocation4], %s280
          %s282 = sand.u32 %s54, 1
          %s283 = smul.addr %s282, 4
          %s284 = scalar_lea.vmem [#allocation3], %s283
          %s286 = ssub.s32 64, 64
          %287 = vsyncadd %s281, %s286
          %s288 = sadd.s32 %s31, %s30
          %s289 = smul.addr %s288, 64
          %s290 = scalar_lea.hbm %s0, %s289
          %s292 = sshll.u32 %s284, 4
          %s293 = int_to_ptr.vmem [resolvable:$true] %s292
          %295 = dma.hbm_to_vmem [thread:$0]  %s290, 64, %s293, %s281
        $region36: #{importance_renderer_forward.6} parent=31 // pred_fallthru
          _
        // Predicated region
        $region37: #{importance_renderer_forward.6} parent=31 // pred_check
          %p296 = pneg %p92
        $region38: #{importance_renderer_forward.6} parent=31 // pred_check_branch
          %298 = sbr.rel (%p296) target = $region40
        $region39: #{importance_renderer_forward.6} parent=31 // pred_region
          %s299 = sand.u32 %s23, 1
          %s300 = scalar_lea.sflag [#allocation7], %s299
          %s301 = sand.u32 %s82, 1
          %s302 = smul.addr %s301, 48
          %s303 = scalar_lea.vmem [#allocation6], %s302
          %s304 = smul.u32 2, %s32
          %s306 = ssub.s32 768, 768
          %307 = vsyncadd %s300, %s306
          %s308 = smul.addr %s30, 6
          %s309 = sadd.s32 %s304, %s308
          %s310 = smul.addr %s309, 128
          %s311 = scalar_lea.hbm %s1, %s310
          %s312 = sshll.u32 %s303, 4
          %s313 = int_to_ptr.vmem [resolvable:$true] %s312
          %318 = dma.hbm_to_vmem [thread:$0]  %s311, 768, %s313, %s300, 256, 256, 16
        $region40: #{importance_renderer_forward.6} parent=31 // pred_fallthru
          _
      $region32: #{importance_renderer_forward.6} parent=5 // pred_fallthru
        _
      %p319 = scmp.le.s32.totalorder 1, %s23
      %p320 = scmp.lt.s32.totalorder %s23, 3
      %p321 = pnand %p319, %p320
      %p322 = pneg %p321
      // Predicated region
      $region41: #{importance_renderer_forward.6} parent=5 // pred_check
        _
      $region42: #{importance_renderer_forward.6} parent=5 // pred_check_branch
        %324 = sbr.rel (%p321) target = $region44
      $region43: #{importance_renderer_forward.6} parent=5 // pred_region
        %s325 = ssub.s32 %s23, 1
        %s326 = sand.u32 %s57, 1
        %s327 = scalar_lea.sflag [#allocation4], %s326
        %s328 = sand.u32 %s57, 1
        %s329 = smul.addr %s328, 4
        %s330 = scalar_lea.vmem [#allocation3], %s329
        // Predicated region
        $region45: #{importance_renderer_forward.6} parent=43 // pred_check
          %p331 = pneg %p70
        $region46: #{importance_renderer_forward.6} parent=43 // pred_check_branch
          %333 = sbr.rel (%p331) target = $region48
        $region47: #{importance_renderer_forward.6} parent=43 // pred_region
          %334 = dma.done %s327, 64
        $region48: #{importance_renderer_forward.6} parent=43 // pred_fallthru
          _
        %s335 = sand.u32 %s28, 1
        %s336 = scalar_lea.sflag [#allocation7], %s335
        %s337 = sand.u32 %s85, 1
        %s338 = smul.addr %s337, 48
        %s339 = scalar_lea.vmem [#allocation6], %s338
        // Predicated region
        $region49: #{importance_renderer_forward.6} parent=43 // pred_check
          %p340 = pneg %p98
        $region50: #{importance_renderer_forward.6} parent=43 // pred_check_branch
          %342 = sbr.rel (%p340) target = $region52
        $region51: #{importance_renderer_forward.6} parent=43 // pred_region
          %343 = dma.done %s336, 768
        $region52: #{importance_renderer_forward.6} parent=43 // pred_fallthru
          _
        // Predicated region
        $region53: #{importance_renderer_forward.6} parent=43 // pred_check
          %p344 = pneg %p119
        $region54: #{importance_renderer_forward.6} parent=43 // pred_check_branch
          %346 = sbr.rel (%p344) target = $region56
        $region55: #{importance_renderer_forward.6} parent=43 // pred_region
          %347 = dma.done [#allocation7], 512
        $region56: #{importance_renderer_forward.6} parent=43 // pred_fallthru
          _
        // Predicated region
        $region57: #{importance_renderer_forward.6} parent=43 // pred_check
          %p348 = pneg %p140
        $region58: #{importance_renderer_forward.6} parent=43 // pred_check_branch
          %350 = sbr.rel (%p348) target = $region60
        $region59: #{importance_renderer_forward.6} parent=43 // pred_region
          %351 = dma.done [#allocation10], 512
        $region60: #{importance_renderer_forward.6} parent=43 // pred_fallthru
          _
        // Predicated region
        $region61: #{importance_renderer_forward.6} parent=43 // pred_check
          %p352 = pneg %p161
        $region62: #{importance_renderer_forward.6} parent=43 // pred_check_branch
          %354 = sbr.rel (%p352) target = $region64
        $region63: #{importance_renderer_forward.6} parent=43 // pred_region
          %355 = dma.done [#allocation10], 64
        $region64: #{importance_renderer_forward.6} parent=43 // pred_fallthru
          _
        // Predicated region
        $region65: #{importance_renderer_forward.6} parent=43 // pred_check
          %p356 = pneg %p182
        $region66: #{importance_renderer_forward.6} parent=43 // pred_check_branch
          %358 = sbr.rel (%p356) target = $region68
        $region67: #{importance_renderer_forward.6} parent=43 // pred_region
          %359 = dma.done [#allocation13], 64
        $region68: #{importance_renderer_forward.6} parent=43 // pred_fallthru
          _
        %s360 = sand.u32 %s57, 1
        %s361 = scalar_lea.sflag [#allocation4], %s360
        %s362 = sand.u32 %s57, 1
        %s363 = smul.addr %s362, 4
        %s364 = scalar_lea.vmem [#allocation3], %s363
        %p365 = pneg %p70
        %p366 = pneg %p67
        %s367 = sand.u32 %s28, 1
        %s368 = scalar_lea.sflag [#allocation7], %s367
        %s369 = sand.u32 %s85, 1
        %s370 = smul.addr %s369, 48
        %s371 = scalar_lea.vmem [#allocation6], %s370
        %p372 = pneg %p98
        %p373 = pneg %p95
        %p374 = pneg %p119
        %p375 = pneg %p116
        %p376 = pneg %p140
        %p377 = pneg %p137
        %p378 = pneg %p161
        %p379 = pneg %p158
        %p380 = pneg %p182
        %p381 = pneg %p179
        %p382 = pneg %p210
        %p383 = pneg %p207
        %s384 = sand.u32 %s197, 1
        %s385 = scalar_lea.sflag [#allocation5], %s384
        %s386 = sand.u32 %s197, 1
        %s387 = smul.addr %s386, 4
        %s388 = scalar_lea.vmem [#allocation14], %s387
        %s389 = smul.u32 2, %s35
        %p390 = scmp.eq.s32.totalorder %s35, 0
        // Predicated region
        $region69: #{importance_renderer_forward.6} parent=43 // pred_check
          %p391 = pneg %p390
        $region70: #{importance_renderer_forward.6} parent=43 // pred_check_branch
          %393 = sbr.rel (%p391) target = $region72
        $region71: #{importance_renderer_forward.6} parent=43 // pred_region
          %394 = vst [vmem:[#allocation2] sm:$0xff] 0.0
        $region72: #{importance_renderer_forward.6} parent=43 // pred_fallthru
          _
        %v395 = vld [vmem:[%s330] sm:$0x7]
        %s396 = smul.u32 %s35, 256
        %v397 = vlaneseq
        %v398 = vshrl.u32 %v397, 7
        %v399 = vadd.s32 %v398, 8
        %v400 = vadd.s32 %v398, 16
        %v401 = vadd.s32 %v398, 24
        %v402 = vadd.s32 %v398, 32
        %v403 = vadd.s32 %v398, 40
        %v404 = vadd.s32 %v398, 48
        %v405 = vadd.s32 %v398, 56
        %v406 = vadd.s32 %v398, 64
        %v407 = vadd.s32 %v398, 72
        %v408 = vadd.s32 %v398, 80
        %v409 = vadd.s32 %v398, 88
        %v410 = vadd.s32 %v398, 96
        %v411 = vadd.s32 %v398, 104
        %v412 = vadd.s32 %v398, 112
        %v413 = vadd.s32 %v398, 120
        %v414 = vadd.s32 %v398, 128
        %v415 = vadd.s32 %v398, 136
        %v416 = vadd.s32 %v398, 144
        %v417 = vadd.s32 %v398, 152
        %v418 = vadd.s32 %v398, 160
        %v419 = vadd.s32 %v398, 168
        %v420 = vadd.s32 %v398, 176
        %v421 = vadd.s32 %v398, 184
        %v422 = vadd.s32 %v398, 192
        %v423 = vadd.s32 %v398, 200
        %v424 = vadd.s32 %v398, 208
        %v425 = vadd.s32 %v398, 216
        %v426 = vadd.s32 %v398, 224
        %v427 = vadd.s32 %v398, 232
        %v428 = vadd.s32 %v398, 240
        %v429 = vadd.s32 %v398, 248
        %v430 = vstv %s396
        %v431 = vadd.s32 %v398, %v430
        %v432 = vadd.s32 %v399, %v430
        %v433 = vadd.s32 %v400, %v430
        %v434 = vadd.s32 %v401, %v430
        %v435 = vadd.s32 %v402, %v430
        %v436 = vadd.s32 %v403, %v430
        %v437 = vadd.s32 %v404, %v430
        %v438 = vadd.s32 %v405, %v430
        %v439 = vadd.s32 %v406, %v430
        %v440 = vadd.s32 %v407, %v430
        %v441 = vadd.s32 %v408, %v430
        %v442 = vadd.s32 %v409, %v430
        %v443 = vadd.s32 %v410, %v430
        %v444 = vadd.s32 %v411, %v430
        %v445 = vadd.s32 %v412, %v430
        %v446 = vadd.s32 %v413, %v430
        %v447 = vadd.s32 %v414, %v430
        %v448 = vadd.s32 %v415, %v430
        %v449 = vadd.s32 %v416, %v430
        %v450 = vadd.s32 %v417, %v430
        %v451 = vadd.s32 %v418, %v430
        %v452 = vadd.s32 %v419, %v430
        %v453 = vadd.s32 %v420, %v430
        %v454 = vadd.s32 %v421, %v430
        %v455 = vadd.s32 %v422, %v430
        %v456 = vadd.s32 %v423, %v430
        %v457 = vadd.s32 %v424, %v430
        %v458 = vadd.s32 %v425, %v430
        %v459 = vadd.s32 %v426, %v430
        %v460 = vadd.s32 %v427, %v430
        %v461 = vadd.s32 %v428, %v430
        %v462 = vadd.s32 %v429, %v430
        %v463 = vmul.f32 %v395, 0.0
        %v465 = vrot.slane %v463, 1
        %v467 = vadd.f32 %v395, %v465
        %v468 = vrot.slane %v463, 2
        %v470 = vadd.f32 %v467, %v468
        %v472 = vrot.slane %v395, 1
        %v474 = vadd.f32 %v463, %v472
        %v475 = vadd.f32 %v474, %v468
        %v476 = vadd.f32 %v470, 1.0
        %v477 = vmul.f32 %v476, 16.0
        %v478 = vsub.f32 %v477, 1.0
        %v479 = vmul.f32 %v478, 0.5
        %v480 = vadd.f32 %v475, 1.0
        %v481 = vmul.f32 %v480, 16.0
        %v482 = vsub.f32 %v481, 1.0
        %v483 = vmul.f32 %v482, 0.5
        %v484 = vfloor.f32 %v479
        %v485 = vfloor.f32 %v483
        %v486 = vadd.f32 %v484, 1.0
        %v487 = vadd.f32 %v485, 1.0
        %v488 = vsub.f32 %v479, %v484
        %v489 = vsub.f32 1.0, %v488
        %v490 = vsub.f32 %v483, %v485
        %v491 = vsub.f32 1.0, %v490
        %v492 = vmul.f32 %v491, %v489
        %v493 = vmul.f32 %v491, %v488
        %v494 = vmul.f32 %v490, %v489
        %v495 = vmul.f32 %v490, %v488
        %vm496 = vcmp.ge.f32.partialorder %v484, 0.0
        %vm497 = vcmp.le.f32.partialorder %v484, 15.0
        %vm498 = vmand %vm496, %vm497
        %vm499 = vcmp.ge.f32.partialorder %v485, 0.0
        %vm500 = vmand %vm498, %vm499
        %vm501 = vcmp.le.f32.partialorder %v485, 15.0
        %vm502 = vmand %vm500, %vm501
        %v503 = vmul.f32 %v485, 16.0
        %v504 = vadd.f32 %v503, %v484
        %v505 = vcvt.f32.s32.to.zero.pseudo %v504
        %v506 = vlaneseq
        %v507 = vshrl.u32 %v506, 7
        %v508 = vsub.s32 0, %v507
        %v509 = vrot.slane %v505, %v508
        %vm510 = vcmp.eq.s32.totalorder %v431, %v509
        %vm511 = vcmp.eq.s32.totalorder %v432, %v509
        %vm512 = vcmp.eq.s32.totalorder %v433, %v509
        %vm513 = vcmp.eq.s32.totalorder %v434, %v509
        %vm514 = vcmp.eq.s32.totalorder %v435, %v509
        %vm515 = vcmp.eq.s32.totalorder %v436, %v509
        %vm516 = vcmp.eq.s32.totalorder %v437, %v509
        %vm517 = vcmp.eq.s32.totalorder %v438, %v509
        %vm518 = vcmp.eq.s32.totalorder %v439, %v509
        %vm519 = vcmp.eq.s32.totalorder %v440, %v509
        %vm520 = vcmp.eq.s32.totalorder %v441, %v509
        %vm521 = vcmp.eq.s32.totalorder %v442, %v509
        %vm522 = vcmp.eq.s32.totalorder %v443, %v509
        %vm523 = vcmp.eq.s32.totalorder %v444, %v509
        %vm524 = vcmp.eq.s32.totalorder %v445, %v509
        %vm525 = vcmp.eq.s32.totalorder %v446, %v509
        %vm526 = vcmp.eq.s32.totalorder %v447, %v509
        %vm527 = vcmp.eq.s32.totalorder %v448, %v509
        %vm528 = vcmp.eq.s32.totalorder %v449, %v509
        %vm529 = vcmp.eq.s32.totalorder %v450, %v509
        %vm530 = vcmp.eq.s32.totalorder %v451, %v509
        %vm531 = vcmp.eq.s32.totalorder %v452, %v509
        %vm532 = vcmp.eq.s32.totalorder %v453, %v509
        %vm533 = vcmp.eq.s32.totalorder %v454, %v509
        %vm534 = vcmp.eq.s32.totalorder %v455, %v509
        %vm535 = vcmp.eq.s32.totalorder %v456, %v509
        %vm536 = vcmp.eq.s32.totalorder %v457, %v509
        %vm537 = vcmp.eq.s32.totalorder %v458, %v509
        %vm538 = vcmp.eq.s32.totalorder %v459, %v509
        %vm539 = vcmp.eq.s32.totalorder %v460, %v509
        %vm540 = vcmp.eq.s32.totalorder %v461, %v509
        %vm541 = vcmp.eq.s32.totalorder %v462, %v509
        %v542 = vsel %vm502, 1, 0
        %v543 = vlaneseq
        %v544 = vshrl.u32 %v543, 7
        %v545 = vsub.s32 0, %v544
        %v546 = vrot.slane %v542, %v545
        %vm547 = vcmp.eq.s32.totalorder %v546, 1
        %vm548 = vmand %vm510, %vm547
        %vm549 = vmand %vm511, %vm547
        %vm550 = vmand %vm512, %vm547
        %vm551 = vmand %vm513, %vm547
        %vm552 = vmand %vm514, %vm547
        %vm553 = vmand %vm515, %vm547
        %vm554 = vmand %vm516, %vm547
        %vm555 = vmand %vm517, %vm547
        %vm556 = vmand %vm518, %vm547
        %vm557 = vmand %vm519, %vm547
        %vm558 = vmand %vm520, %vm547
        %vm559 = vmand %vm521, %vm547
        %vm560 = vmand %vm522, %vm547
        %vm561 = vmand %vm523, %vm547
        %vm562 = vmand %vm524, %vm547
        %vm563 = vmand %vm525, %vm547
        %vm564 = vmand %vm526, %vm547
        %vm565 = vmand %vm527, %vm547
        %vm566 = vmand %vm528, %vm547
        %vm567 = vmand %vm529, %vm547
        %vm568 = vmand %vm530, %vm547
        %vm569 = vmand %vm531, %vm547
        %vm570 = vmand %vm532, %vm547
        %vm571 = vmand %vm533, %vm547
        %vm572 = vmand %vm534, %vm547
        %vm573 = vmand %vm535, %vm547
        %vm574 = vmand %vm536, %vm547
        %vm575 = vmand %vm537, %vm547
        %vm576 = vmand %vm538, %vm547
        %vm577 = vmand %vm539, %vm547
        %vm578 = vmand %vm540, %vm547
        %vm579 = vmand %vm541, %vm547
        %v580 = vlaneseq
        %v581 = vshrl.u32 %v580, 7
        %v582 = vsub.s32 0, %v581
        %v583 = vrot.slane %v492, %v582
        %v584 = vsel %vm548, %v583, 0.0
        %v585 = vsel %vm549, %v583, 0.0
        %v586 = vsel %vm550, %v583, 0.0
        %v587 = vsel %vm551, %v583, 0.0
        %v588 = vsel %vm552, %v583, 0.0
        %v589 = vsel %vm553, %v583, 0.0
        %v590 = vsel %vm554, %v583, 0.0
        %v591 = vsel %vm555, %v583, 0.0
        %v592 = vsel %vm556, %v583, 0.0
        %v593 = vsel %vm557, %v583, 0.0
        %v594 = vsel %vm558, %v583, 0.0
        %v595 = vsel %vm559, %v583, 0.0
        %v596 = vsel %vm560, %v583, 0.0
        %v597 = vsel %vm561, %v583, 0.0
        %v598 = vsel %vm562, %v583, 0.0
        %v599 = vsel %vm563, %v583, 0.0
        %v600 = vsel %vm564, %v583, 0.0
        %v601 = vsel %vm565, %v583, 0.0
        %v602 = vsel %vm566, %v583, 0.0
        %v603 = vsel %vm567, %v583, 0.0
        %v604 = vsel %vm568, %v583, 0.0
        %v605 = vsel %vm569, %v583, 0.0
        %v606 = vsel %vm570, %v583, 0.0
        %v607 = vsel %vm571, %v583, 0.0
        %v608 = vsel %vm572, %v583, 0.0
        %v609 = vsel %vm573, %v583, 0.0
        %v610 = vsel %vm574, %v583, 0.0
        %v611 = vsel %vm575, %v583, 0.0
        %v612 = vsel %vm576, %v583, 0.0
        %v613 = vsel %vm577, %v583, 0.0
        %v614 = vsel %vm578, %v583, 0.0
        %v615 = vsel %vm579, %v583, 0.0
        %v616 = vadd.f32 %v584, 0.0
        %v617 = vadd.f32 %v585, 0.0
        %v618 = vadd.f32 %v586, 0.0
        %v619 = vadd.f32 %v587, 0.0
        %v620 = vadd.f32 %v588, 0.0
        %v621 = vadd.f32 %v589, 0.0
        %v622 = vadd.f32 %v590, 0.0
        %v623 = vadd.f32 %v591, 0.0
        %v624 = vadd.f32 %v592, 0.0
        %v625 = vadd.f32 %v593, 0.0
        %v626 = vadd.f32 %v594, 0.0
        %v627 = vadd.f32 %v595, 0.0
        %v628 = vadd.f32 %v596, 0.0
        %v629 = vadd.f32 %v597, 0.0
        %v630 = vadd.f32 %v598, 0.0
        %v631 = vadd.f32 %v599, 0.0
        %v632 = vadd.f32 %v600, 0.0
        %v633 = vadd.f32 %v601, 0.0
        %v634 = vadd.f32 %v602, 0.0
        %v635 = vadd.f32 %v603, 0.0
        %v636 = vadd.f32 %v604, 0.0
        %v637 = vadd.f32 %v605, 0.0
        %v638 = vadd.f32 %v606, 0.0
        %v639 = vadd.f32 %v607, 0.0
        %v640 = vadd.f32 %v608, 0.0
        %v641 = vadd.f32 %v609, 0.0
        %v642 = vadd.f32 %v610, 0.0
        %v643 = vadd.f32 %v611, 0.0
        %v644 = vadd.f32 %v612, 0.0
        %v645 = vadd.f32 %v613, 0.0
        %v646 = vadd.f32 %v614, 0.0
        %v647 = vadd.f32 %v615, 0.0
        %vm648 = vcmp.ge.f32.partialorder %v486, 0.0
        %vm649 = vcmp.le.f32.partialorder %v486, 15.0
        %vm650 = vmand %vm648, %vm649
        %vm651 = vmand %vm650, %vm499
        %vm652 = vmand %vm651, %vm501
        %v653 = vadd.f32 %v503, %v486
        %v654 = vcvt.f32.s32.to.zero.pseudo %v653
        %v655 = vlaneseq
        %v656 = vshrl.u32 %v655, 7
        %v657 = vsub.s32 0, %v656
        %v658 = vrot.slane %v654, %v657
        %vm659 = vcmp.eq.s32.totalorder %v431, %v658
        %vm660 = vcmp.eq.s32.totalorder %v432, %v658
        %vm661 = vcmp.eq.s32.totalorder %v433, %v658
        %vm662 = vcmp.eq.s32.totalorder %v434, %v658
        %vm663 = vcmp.eq.s32.totalorder %v435, %v658
        %vm664 = vcmp.eq.s32.totalorder %v436, %v658
        %vm665 = vcmp.eq.s32.totalorder %v437, %v658
        %vm666 = vcmp.eq.s32.totalorder %v438, %v658
        %vm667 = vcmp.eq.s32.totalorder %v439, %v658
        %vm668 = vcmp.eq.s32.totalorder %v440, %v658
        %vm669 = vcmp.eq.s32.totalorder %v441, %v658
        %vm670 = vcmp.eq.s32.totalorder %v442, %v658
        %vm671 = vcmp.eq.s32.totalorder %v443, %v658
        %vm672 = vcmp.eq.s32.totalorder %v444, %v658
        %vm673 = vcmp.eq.s32.totalorder %v445, %v658
        %vm674 = vcmp.eq.s32.totalorder %v446, %v658
        %vm675 = vcmp.eq.s32.totalorder %v447, %v658
        %vm676 = vcmp.eq.s32.totalorder %v448, %v658
        %vm677 = vcmp.eq.s32.totalorder %v449, %v658
        %vm678 = vcmp.eq.s32.totalorder %v450, %v658
        %vm679 = vcmp.eq.s32.totalorder %v451, %v658
        %vm680 = vcmp.eq.s32.totalorder %v452, %v658
        %vm681 = vcmp.eq.s32.totalorder %v453, %v658
        %vm682 = vcmp.eq.s32.totalorder %v454, %v658
        %vm683 = vcmp.eq.s32.totalorder %v455, %v658
        %vm684 = vcmp.eq.s32.totalorder %v456, %v658
        %vm685 = vcmp.eq.s32.totalorder %v457, %v658
        %vm686 = vcmp.eq.s32.totalorder %v458, %v658
        %vm687 = vcmp.eq.s32.totalorder %v459, %v658
        %vm688 = vcmp.eq.s32.totalorder %v460, %v658
        %vm689 = vcmp.eq.s32.totalorder %v461, %v658
        %vm690 = vcmp.eq.s32.totalorder %v462, %v658
        %v691 = vsel %vm652, 1, 0
        %v692 = vlaneseq
        %v693 = vshrl.u32 %v692, 7
        %v694 = vsub.s32 0, %v693
        %v695 = vrot.slane %v691, %v694
        %vm696 = vcmp.eq.s32.totalorder %v695, 1
        %vm697 = vmand %vm659, %vm696
        %vm698 = vmand %vm660, %vm696
        %vm699 = vmand %vm661, %vm696
        %vm700 = vmand %vm662, %vm696
        %vm701 = vmand %vm663, %vm696
        %vm702 = vmand %vm664, %vm696
        %vm703 = vmand %vm665, %vm696
        %vm704 = vmand %vm666, %vm696
        %vm705 = vmand %vm667, %vm696
        %vm706 = vmand %vm668, %vm696
        %vm707 = vmand %vm669, %vm696
        %vm708 = vmand %vm670, %vm696
        %vm709 = vmand %vm671, %vm696
        %vm710 = vmand %vm672, %vm696
        %vm711 = vmand %vm673, %vm696
        %vm712 = vmand %vm674, %vm696
        %vm713 = vmand %vm675, %vm696
        %vm714 = vmand %vm676, %vm696
        %vm715 = vmand %vm677, %vm696
        %vm716 = vmand %vm678, %vm696
        %vm717 = vmand %vm679, %vm696
        %vm718 = vmand %vm680, %vm696
        %vm719 = vmand %vm681, %vm696
        %vm720 = vmand %vm682, %vm696
        %vm721 = vmand %vm683, %vm696
        %vm722 = vmand %vm684, %vm696
        %vm723 = vmand %vm685, %vm696
        %vm724 = vmand %vm686, %vm696
        %vm725 = vmand %vm687, %vm696
        %vm726 = vmand %vm688, %vm696
        %vm727 = vmand %vm689, %vm696
        %vm728 = vmand %vm690, %vm696
        %v729 = vlaneseq
        %v730 = vshrl.u32 %v729, 7
        %v731 = vsub.s32 0, %v730
        %v732 = vrot.slane %v493, %v731
        %v733 = vsel %vm697, %v732, 0.0
        %v734 = vsel %vm698, %v732, 0.0
        %v735 = vsel %vm699, %v732, 0.0
        %v736 = vsel %vm700, %v732, 0.0
        %v737 = vsel %vm701, %v732, 0.0
        %v738 = vsel %vm702, %v732, 0.0
        %v739 = vsel %vm703, %v732, 0.0
        %v740 = vsel %vm704, %v732, 0.0
        %v741 = vsel %vm705, %v732, 0.0
        %v742 = vsel %vm706, %v732, 0.0
        %v743 = vsel %vm707, %v732, 0.0
        %v744 = vsel %vm708, %v732, 0.0
        %v745 = vsel %vm709, %v732, 0.0
        %v746 = vsel %vm710, %v732, 0.0
        %v747 = vsel %vm711, %v732, 0.0
        %v748 = vsel %vm712, %v732, 0.0
        %v749 = vsel %vm713, %v732, 0.0
        %v750 = vsel %vm714, %v732, 0.0
        %v751 = vsel %vm715, %v732, 0.0
        %v752 = vsel %vm716, %v732, 0.0
        %v753 = vsel %vm717, %v732, 0.0
        %v754 = vsel %vm718, %v732, 0.0
        %v755 = vsel %vm719, %v732, 0.0
        %v756 = vsel %vm720, %v732, 0.0
        %v757 = vsel %vm721, %v732, 0.0
        %v758 = vsel %vm722, %v732, 0.0
        %v759 = vsel %vm723, %v732, 0.0
        %v760 = vsel %vm724, %v732, 0.0
        %v761 = vsel %vm725, %v732, 0.0
        %v762 = vsel %vm726, %v732, 0.0
        %v763 = vsel %vm727, %v732, 0.0
        %v764 = vsel %vm728, %v732, 0.0
        %v765 = vadd.f32 %v616, %v733
        %v766 = vadd.f32 %v617, %v734
        %v767 = vadd.f32 %v618, %v735
        %v768 = vadd.f32 %v619, %v736
        %v769 = vadd.f32 %v620, %v737
        %v770 = vadd.f32 %v621, %v738
        %v771 = vadd.f32 %v622, %v739
        %v772 = vadd.f32 %v623, %v740
        %v773 = vadd.f32 %v624, %v741
        %v774 = vadd.f32 %v625, %v742
        %v775 = vadd.f32 %v626, %v743
        %v776 = vadd.f32 %v627, %v744
        %v777 = vadd.f32 %v628, %v745
        %v778 = vadd.f32 %v629, %v746
        %v779 = vadd.f32 %v630, %v747
        %v780 = vadd.f32 %v631, %v748
        %v781 = vadd.f32 %v632, %v749
        %v782 = vadd.f32 %v633, %v750
        %v783 = vadd.f32 %v634, %v751
        %v784 = vadd.f32 %v635, %v752
        %v785 = vadd.f32 %v636, %v753
        %v786 = vadd.f32 %v637, %v754
        %v787 = vadd.f32 %v638, %v755
        %v788 = vadd.f32 %v639, %v756
        %v789 = vadd.f32 %v640, %v757
        %v790 = vadd.f32 %v641, %v758
        %v791 = vadd.f32 %v642, %v759
        %v792 = vadd.f32 %v643, %v760
        %v793 = vadd.f32 %v644, %v761
        %v794 = vadd.f32 %v645, %v762
        %v795 = vadd.f32 %v646, %v763
        %v796 = vadd.f32 %v647, %v764
        %vm797 = vcmp.ge.f32.partialorder %v487, 0.0
        %vm798 = vmand %vm498, %vm797
        %vm799 = vcmp.le.f32.partialorder %v487, 15.0
        %vm800 = vmand %vm798, %vm799
        %v801 = vmul.f32 %v487, 16.0
        %v802 = vadd.f32 %v801, %v484
        %v803 = vcvt.f32.s32.to.zero.pseudo %v802
        %v804 = vlaneseq
        %v805 = vshrl.u32 %v804, 7
        %v806 = vsub.s32 0, %v805
        %v807 = vrot.slane %v803, %v806
        %vm808 = vcmp.eq.s32.totalorder %v431, %v807
        %vm809 = vcmp.eq.s32.totalorder %v432, %v807
        %vm810 = vcmp.eq.s32.totalorder %v433, %v807
        %vm811 = vcmp.eq.s32.totalorder %v434, %v807
        %vm812 = vcmp.eq.s32.totalorder %v435, %v807
        %vm813 = vcmp.eq.s32.totalorder %v436, %v807
        %vm814 = vcmp.eq.s32.totalorder %v437, %v807
        %vm815 = vcmp.eq.s32.totalorder %v438, %v807
        %vm816 = vcmp.eq.s32.totalorder %v439, %v807
        %vm817 = vcmp.eq.s32.totalorder %v440, %v807
        %vm818 = vcmp.eq.s32.totalorder %v441, %v807
        %vm819 = vcmp.eq.s32.totalorder %v442, %v807
        %vm820 = vcmp.eq.s32.totalorder %v443, %v807
        %vm821 = vcmp.eq.s32.totalorder %v444, %v807
        %vm822 = vcmp.eq.s32.totalorder %v445, %v807
        %vm823 = vcmp.eq.s32.totalorder %v446, %v807
        %vm824 = vcmp.eq.s32.totalorder %v447, %v807
        %vm825 = vcmp.eq.s32.totalorder %v448, %v807
        %vm826 = vcmp.eq.s32.totalorder %v449, %v807
        %vm827 = vcmp.eq.s32.totalorder %v450, %v807
        %vm828 = vcmp.eq.s32.totalorder %v451, %v807
        %vm829 = vcmp.eq.s32.totalorder %v452, %v807
        %vm830 = vcmp.eq.s32.totalorder %v453, %v807
        %vm831 = vcmp.eq.s32.totalorder %v454, %v807
        %vm832 = vcmp.eq.s32.totalorder %v455, %v807
        %vm833 = vcmp.eq.s32.totalorder %v456, %v807
        %vm834 = vcmp.eq.s32.totalorder %v457, %v807
        %vm835 = vcmp.eq.s32.totalorder %v458, %v807
        %vm836 = vcmp.eq.s32.totalorder %v459, %v807
        %vm837 = vcmp.eq.s32.totalorder %v460, %v807
        %vm838 = vcmp.eq.s32.totalorder %v461, %v807
        %vm839 = vcmp.eq.s32.totalorder %v462, %v807
        %v840 = vsel %vm800, 1, 0
        %v841 = vlaneseq
        %v842 = vshrl.u32 %v841, 7
        %v843 = vsub.s32 0, %v842
        %v844 = vrot.slane %v840, %v843
        %vm845 = vcmp.eq.s32.totalorder %v844, 1
        %vm846 = vmand %vm808, %vm845
        %vm847 = vmand %vm809, %vm845
        %vm848 = vmand %vm810, %vm845
        %vm849 = vmand %vm811, %vm845
        %vm850 = vmand %vm812, %vm845
        %vm851 = vmand %vm813, %vm845
        %vm852 = vmand %vm814, %vm845
        %vm853 = vmand %vm815, %vm845
        %vm854 = vmand %vm816, %vm845
        %vm855 = vmand %vm817, %vm845
        %vm856 = vmand %vm818, %vm845
        %vm857 = vmand %vm819, %vm845
        %vm858 = vmand %vm820, %vm845
        %vm859 = vmand %vm821, %vm845
        %vm860 = vmand %vm822, %vm845
        %vm861 = vmand %vm823, %vm845
        %vm862 = vmand %vm824, %vm845
        %vm863 = vmand %vm825, %vm845
        %vm864 = vmand %vm826, %vm845
        %vm865 = vmand %vm827, %vm845
        %vm866 = vmand %vm828, %vm845
        %vm867 = vmand %vm829, %vm845
        %vm868 = vmand %vm830, %vm845
        %vm869 = vmand %vm831, %vm845
        %vm870 = vmand %vm832, %vm845
        %vm871 = vmand %vm833, %vm845
        %vm872 = vmand %vm834, %vm845
        %vm873 = vmand %vm835, %vm845
        %vm874 = vmand %vm836, %vm845
        %vm875 = vmand %vm837, %vm845
        %vm876 = vmand %vm838, %vm845
        %vm877 = vmand %vm839, %vm845
        %v878 = vlaneseq
        %v879 = vshrl.u32 %v878, 7
        %v880 = vsub.s32 0, %v879
        %v881 = vrot.slane %v494, %v880
        %v882 = vsel %vm846, %v881, 0.0
        %v883 = vsel %vm847, %v881, 0.0
        %v884 = vsel %vm848, %v881, 0.0
        %v885 = vsel %vm849, %v881, 0.0
        %v886 = vsel %vm850, %v881, 0.0
        %v887 = vsel %vm851, %v881, 0.0
        %v888 = vsel %vm852, %v881, 0.0
        %v889 = vsel %vm853, %v881, 0.0
        %v890 = vsel %vm854, %v881, 0.0
        %v891 = vsel %vm855, %v881, 0.0
        %v892 = vsel %vm856, %v881, 0.0
        %v893 = vsel %vm857, %v881, 0.0
        %v894 = vsel %vm858, %v881, 0.0
        %v895 = vsel %vm859, %v881, 0.0
        %v896 = vsel %vm860, %v881, 0.0
        %v897 = vsel %vm861, %v881, 0.0
        %v898 = vsel %vm862, %v881, 0.0
        %v899 = vsel %vm863, %v881, 0.0
        %v900 = vsel %vm864, %v881, 0.0
        %v901 = vsel %vm865, %v881, 0.0
        %v902 = vsel %vm866, %v881, 0.0
        %v903 = vsel %vm867, %v881, 0.0
        %v904 = vsel %vm868, %v881, 0.0
        %v905 = vsel %vm869, %v881, 0.0
        %v906 = vsel %vm870, %v881, 0.0
        %v907 = vsel %vm871, %v881, 0.0
        %v908 = vsel %vm872, %v881, 0.0
        %v909 = vsel %vm873, %v881, 0.0
        %v910 = vsel %vm874, %v881, 0.0
        %v911 = vsel %vm875, %v881, 0.0
        %v912 = vsel %vm876, %v881, 0.0
        %v913 = vsel %vm877, %v881, 0.0
        %v914 = vadd.f32 %v765, %v882
        %v915 = vadd.f32 %v766, %v883
        %v916 = vadd.f32 %v767, %v884
        %v917 = vadd.f32 %v768, %v885
        %v918 = vadd.f32 %v769, %v886
        %v919 = vadd.f32 %v770, %v887
        %v920 = vadd.f32 %v771, %v888
        %v921 = vadd.f32 %v772, %v889
        %v922 = vadd.f32 %v773, %v890
        %v923 = vadd.f32 %v774, %v891
        %v924 = vadd.f32 %v775, %v892
        %v925 = vadd.f32 %v776, %v893
        %v926 = vadd.f32 %v777, %v894
        %v927 = vadd.f32 %v778, %v895
        %v928 = vadd.f32 %v779, %v896
        %v929 = vadd.f32 %v780, %v897
        %v930 = vadd.f32 %v781, %v898
        %v931 = vadd.f32 %v782, %v899
        %v932 = vadd.f32 %v783, %v900
        %v933 = vadd.f32 %v784, %v901
        %v934 = vadd.f32 %v785, %v902
        %v935 = vadd.f32 %v786, %v903
        %v936 = vadd.f32 %v787, %v904
        %v937 = vadd.f32 %v788, %v905
        %v938 = vadd.f32 %v789, %v906
        %v939 = vadd.f32 %v790, %v907
        %v940 = vadd.f32 %v791, %v908
        %v941 = vadd.f32 %v792, %v909
        %v942 = vadd.f32 %v793, %v910
        %v943 = vadd.f32 %v794, %v911
        %v944 = vadd.f32 %v795, %v912
        %v945 = vadd.f32 %v796, %v913
        %vm946 = vmand %vm650, %vm797
        %vm947 = vmand %vm946, %vm799
        %v948 = vadd.f32 %v801, %v486
        %v949 = vcvt.f32.s32.to.zero.pseudo %v948
        %v950 = vlaneseq
        %v951 = vshrl.u32 %v950, 7
        %v952 = vsub.s32 0, %v951
        %v953 = vrot.slane %v949, %v952
        %vm954 = vcmp.eq.s32.totalorder %v431, %v953
        %vm955 = vcmp.eq.s32.totalorder %v432, %v953
        %vm956 = vcmp.eq.s32.totalorder %v433, %v953
        %vm957 = vcmp.eq.s32.totalorder %v434, %v953
        %vm958 = vcmp.eq.s32.totalorder %v435, %v953
        %vm959 = vcmp.eq.s32.totalorder %v436, %v953
        %vm960 = vcmp.eq.s32.totalorder %v437, %v953
        %vm961 = vcmp.eq.s32.totalorder %v438, %v953
        %vm962 = vcmp.eq.s32.totalorder %v439, %v953
        %vm963 = vcmp.eq.s32.totalorder %v440, %v953
        %vm964 = vcmp.eq.s32.totalorder %v441, %v953
        %vm965 = vcmp.eq.s32.totalorder %v442, %v953
        %vm966 = vcmp.eq.s32.totalorder %v443, %v953
        %vm967 = vcmp.eq.s32.totalorder %v444, %v953
        %vm968 = vcmp.eq.s32.totalorder %v445, %v953
        %vm969 = vcmp.eq.s32.totalorder %v446, %v953
        %vm970 = vcmp.eq.s32.totalorder %v447, %v953
        %vm971 = vcmp.eq.s32.totalorder %v448, %v953
        %vm972 = vcmp.eq.s32.totalorder %v449, %v953
        %vm973 = vcmp.eq.s32.totalorder %v450, %v953
        %vm974 = vcmp.eq.s32.totalorder %v451, %v953
        %vm975 = vcmp.eq.s32.totalorder %v452, %v953
        %vm976 = vcmp.eq.s32.totalorder %v453, %v953
        %vm977 = vcmp.eq.s32.totalorder %v454, %v953
        %vm978 = vcmp.eq.s32.totalorder %v455, %v953
        %vm979 = vcmp.eq.s32.totalorder %v456, %v953
        %vm980 = vcmp.eq.s32.totalorder %v457, %v953
        %vm981 = vcmp.eq.s32.totalorder %v458, %v953
        %vm982 = vcmp.eq.s32.totalorder %v459, %v953
        %vm983 = vcmp.eq.s32.totalorder %v460, %v953
        %vm984 = vcmp.eq.s32.totalorder %v461, %v953
        %vm985 = vcmp.eq.s32.totalorder %v462, %v953
        %v986 = vsel %vm947, 1, 0
        %v987 = vlaneseq
        %v988 = vshrl.u32 %v987, 7
        %v989 = vsub.s32 0, %v988
        %v990 = vrot.slane %v986, %v989
        %vm991 = vcmp.eq.s32.totalorder %v990, 1
        %vm992 = vmand %vm954, %vm991
        %vm993 = vmand %vm955, %vm991
        %vm994 = vmand %vm956, %vm991
        %vm995 = vmand %vm957, %vm991
        %vm996 = vmand %vm958, %vm991
        %vm997 = vmand %vm959, %vm991
        %vm998 = vmand %vm960, %vm991
        %vm999 = vmand %vm961, %vm991
        %vm1000 = vmand %vm962, %vm991
        %vm1001 = vmand %vm963, %vm991
        %vm1002 = vmand %vm964, %vm991
        %vm1003 = vmand %vm965, %vm991
        %vm1004 = vmand %vm966, %vm991
        %vm1005 = vmand %vm967, %vm991
        %vm1006 = vmand %vm968, %vm991
        %vm1007 = vmand %vm969, %vm991
        %vm1008 = vmand %vm970, %vm991
        %vm1009 = vmand %vm971, %vm991
        %vm1010 = vmand %vm972, %vm991
        %vm1011 = vmand %vm973, %vm991
        %vm1012 = vmand %vm974, %vm991
        %vm1013 = vmand %vm975, %vm991
        %vm1014 = vmand %vm976, %vm991
        %vm1015 = vmand %vm977, %vm991
        %vm1016 = vmand %vm978, %vm991
        %vm1017 = vmand %vm979, %vm991
        %vm1018 = vmand %vm980, %vm991
        %vm1019 = vmand %vm981, %vm991
        %vm1020 = vmand %vm982, %vm991
        %vm1021 = vmand %vm983, %vm991
        %vm1022 = vmand %vm984, %vm991
        %vm1023 = vmand %vm985, %vm991
        %v1024 = vlaneseq
        %v1025 = vshrl.u32 %v1024, 7
        %v1026 = vsub.s32 0, %v1025
        %v1027 = vrot.slane %v495, %v1026
        %v1028 = vsel %vm992, %v1027, 0.0
        %v1029 = vsel %vm993, %v1027, 0.0
        %v1030 = vsel %vm994, %v1027, 0.0
        %v1031 = vsel %vm995, %v1027, 0.0
        %v1032 = vsel %vm996, %v1027, 0.0
        %v1033 = vsel %vm997, %v1027, 0.0
        %v1034 = vsel %vm998, %v1027, 0.0
        %v1035 = vsel %vm999, %v1027, 0.0
        %v1036 = vsel %vm1000, %v1027, 0.0
        %v1037 = vsel %vm1001, %v1027, 0.0
        %v1038 = vsel %vm1002, %v1027, 0.0
        %v1039 = vsel %vm1003, %v1027, 0.0
        %v1040 = vsel %vm1004, %v1027, 0.0
        %v1041 = vsel %vm1005, %v1027, 0.0
        %v1042 = vsel %vm1006, %v1027, 0.0
        %v1043 = vsel %vm1007, %v1027, 0.0
        %v1044 = vsel %vm1008, %v1027, 0.0
        %v1045 = vsel %vm1009, %v1027, 0.0
        %v1046 = vsel %vm1010, %v1027, 0.0
        %v1047 = vsel %vm1011, %v1027, 0.0
        %v1048 = vsel %vm1012, %v1027, 0.0
        %v1049 = vsel %vm1013, %v1027, 0.0
        %v1050 = vsel %vm1014, %v1027, 0.0
        %v1051 = vsel %vm1015, %v1027, 0.0
        %v1052 = vsel %vm1016, %v1027, 0.0
        %v1053 = vsel %vm1017, %v1027, 0.0
        %v1054 = vsel %vm1018, %v1027, 0.0
        %v1055 = vsel %vm1019, %v1027, 0.0
        %v1056 = vsel %vm1020, %v1027, 0.0
        %v1057 = vsel %vm1021, %v1027, 0.0
        %v1058 = vsel %vm1022, %v1027, 0.0
        %v1059 = vsel %vm1023, %v1027, 0.0
        %v1060 = vadd.f32 %v914, %v1028
        %v1061 = vadd.f32 %v915, %v1029
        %v1062 = vadd.f32 %v916, %v1030
        %v1063 = vadd.f32 %v917, %v1031
        %v1064 = vadd.f32 %v918, %v1032
        %v1065 = vadd.f32 %v919, %v1033
        %v1066 = vadd.f32 %v920, %v1034
        %v1067 = vadd.f32 %v921, %v1035
        %v1068 = vadd.f32 %v922, %v1036
        %v1069 = vadd.f32 %v923, %v1037
        %v1070 = vadd.f32 %v924, %v1038
        %v1071 = vadd.f32 %v925, %v1039
        %v1072 = vadd.f32 %v926, %v1040
        %v1073 = vadd.f32 %v927, %v1041
        %v1074 = vadd.f32 %v928, %v1042
        %v1075 = vadd.f32 %v929, %v1043
        %v1076 = vadd.f32 %v930, %v1044
        %v1077 = vadd.f32 %v931, %v1045
        %v1078 = vadd.f32 %v932, %v1046
        %v1079 = vadd.f32 %v933, %v1047
        %v1080 = vadd.f32 %v934, %v1048
        %v1081 = vadd.f32 %v935, %v1049
        %v1082 = vadd.f32 %v936, %v1050
        %v1083 = vadd.f32 %v937, %v1051
        %v1084 = vadd.f32 %v938, %v1052
        %v1085 = vadd.f32 %v939, %v1053
        %v1086 = vadd.f32 %v940, %v1054
        %v1087 = vadd.f32 %v941, %v1055
        %v1088 = vadd.f32 %v942, %v1056
        %v1089 = vadd.f32 %v943, %v1057
        %v1090 = vadd.f32 %v944, %v1058
        %v1091 = vadd.f32 %v945, %v1059
        %v1092 = vld [vmem:[#allocation2] sm:$0xff]
        %v1093 = vld [vmem:[%s339] sm:$0xff]
        %v1094 = vld [vmem:[%s339 + $0x8] sm:$0xff]
        %1095 = vmatprep.subr.mxu0 0.0
        %1096 = vmatpush1.msra.mxu0 %v1060
        %1097 = vmatprep.subr.mxu0 0.0
        %1098 = vmatpush1.msra.mxu0 %v1061
        %1099 = vmatprep.subr.mxu0 0.0
        %1100 = vmatpush1.msra.mxu0 %v1062
        %1101 = vmatprep.subr.mxu0 0.0
        %1102 = vmatpush1.msra.mxu0 %v1063
        %1103 = vmatprep.subr.mxu0 0.0
        %1104 = vmatpush1.msra.mxu0 %v1064
        %1105 = vmatprep.subr.mxu0 0.0
        %1106 = vmatpush1.msra.mxu0 %v1065
        %1107 = vmatprep.subr.mxu0 0.0
        %1108 = vmatpush1.msra.mxu0 %v1066
        %1109 = vmatprep.subr.mxu0 0.0
        %1110 = vmatpush1.msra.mxu0 %v1067
        %1111 = vmatprep.subr.mxu0 0.0
        %1112 = vmatpush1.msra.mxu0 %v1068
        %1113 = vmatprep.subr.mxu0 0.0
        %1114 = vmatpush1.msra.mxu0 %v1069
        %1115 = vmatprep.subr.mxu0 0.0
        %1116 = vmatpush1.msra.mxu0 %v1070
        %1117 = vmatprep.subr.mxu0 0.0
        %1118 = vmatpush1.msra.mxu0 %v1071
        %1119 = vmatprep.subr.mxu0 0.0
        %1120 = vmatpush1.msra.mxu0 %v1072
        %1121 = vmatprep.subr.mxu0 0.0
        %1122 = vmatpush1.msra.mxu0 %v1073
        %1123 = vmatprep.subr.mxu0 0.0
        %1124 = vmatpush1.msra.mxu0 %v1074
        %1125 = vmatprep.subr.mxu0 0.0
        %1126 = vmatpush1.msra.mxu0 %v1075
        %1127 = vmatprep.subr.mxu0 0.0
        %1128 = vmatpush1.msra.mxu0 %v1076
        %1129 = vmatprep.subr.mxu0 0.0
        %1130 = vmatpush1.msra.mxu0 %v1077
        %1131 = vmatprep.subr.mxu0 0.0
        %1132 = vmatpush1.msra.mxu0 %v1078
        %1133 = vmatprep.subr.mxu0 0.0
        %1134 = vmatpush1.msra.mxu0 %v1079
        %1135 = vmatprep.subr.mxu0 0.0
        %1136 = vmatpush1.msra.mxu0 %v1080
        %1137 = vmatprep.subr.mxu0 0.0
        %1138 = vmatpush1.msra.mxu0 %v1081
        %1139 = vmatprep.subr.mxu0 0.0
        %1140 = vmatpush1.msra.mxu0 %v1082
        %1141 = vmatprep.subr.mxu0 0.0
        %1142 = vmatpush1.msra.mxu0 %v1083
        %1143 = vmatprep.subr.mxu0 0.0
        %1144 = vmatpush1.msra.mxu0 %v1084
        %1145 = vmatprep.subr.mxu0 0.0
        %1146 = vmatpush1.msra.mxu0 %v1085
        %1147 = vmatprep.subr.mxu0 0.0
        %1148 = vmatpush1.msra.mxu0 %v1086
        %1149 = vmatprep.subr.mxu0 0.0
        %1150 = vmatpush1.msra.mxu0 %v1087
        %1151 = vmatprep.subr.mxu0 0.0
        %1152 = vmatpush1.msra.mxu0 %v1088
        %1153 = vmatprep.subr.mxu0 0.0
        %1154 = vmatpush1.msra.mxu0 %v1089
        %1155 = vmatprep.subr.mxu0 0.0
        %1156 = vmatpush1.msra.mxu0 %v1090
        %1157 = vmatprep.subr.mxu0 0.0
        %1158 = vmatpush1.msra.mxu0 %v1091
        %1159 = vmatprep.mubr.f32.mxu0 %v1094
        %1160 = vmatmul.mubr.f32.gmra.mrb[0].mxu0 %v1093
        %v1161 = vpop.f32.mrb[0].mxu0
        %v1162 = vadd.f32 0.0, %v1161
        %v1163 = vpop.f32.mrb[0].mxu0
        %1164 = vdwg.mxu0
        %v1165 = vadd.f32 %v1092, %v1162
        %1166 = vst [vmem:[#allocation2] sm:$0xff] %v1165
        %v1167 = vadd.f32 %v463, %v465
        %v1168 = vrot.slane %v395, 2
        %v1170 = vadd.f32 %v1167, %v1168
        %v1171 = vadd.f32 %v1170, 1.0
        %v1172 = vmul.f32 %v1171, 16.0
        %v1173 = vsub.f32 %v1172, 1.0
        %v1174 = vmul.f32 %v1173, 0.5
        %v1175 = vfloor.f32 %v1174
        %v1176 = vadd.f32 %v1175, 1.0
        %v1177 = vsub.f32 %v1174, %v1175
        %v1178 = vsub.f32 1.0, %v1177
        %v1179 = vmul.f32 %v1178, %v489
        %v1180 = vmul.f32 %v1178, %v488
        %v1181 = vmul.f32 %v1177, %v489
        %v1182 = vmul.f32 %v1177, %v488
        %vm1183 = vcmp.ge.f32.partialorder %v1175, 0.0
        %vm1184 = vmand %vm498, %vm1183
        %vm1185 = vcmp.le.f32.partialorder %v1175, 15.0
        %vm1186 = vmand %vm1184, %vm1185
        %v1187 = vmul.f32 %v1175, 16.0
        %v1188 = vadd.f32 %v1187, %v484
        %v1189 = vcvt.f32.s32.to.zero.pseudo %v1188
        %v1190 = vlaneseq
        %v1191 = vshrl.u32 %v1190, 7
        %v1192 = vsub.s32 0, %v1191
        %v1193 = vrot.slane %v1189, %v1192
        %vm1194 = vcmp.eq.s32.totalorder %v431, %v1193
        %vm1195 = vcmp.eq.s32.totalorder %v432, %v1193
        %vm1196 = vcmp.eq.s32.totalorder %v433, %v1193
        %vm1197 = vcmp.eq.s32.totalorder %v434, %v1193
        %vm1198 = vcmp.eq.s32.totalorder %v435, %v1193
        %vm1199 = vcmp.eq.s32.totalorder %v436, %v1193
        %vm1200 = vcmp.eq.s32.totalorder %v437, %v1193
        %vm1201 = vcmp.eq.s32.totalorder %v438, %v1193
        %vm1202 = vcmp.eq.s32.totalorder %v439, %v1193
        %vm1203 = vcmp.eq.s32.totalorder %v440, %v1193
        %vm1204 = vcmp.eq.s32.totalorder %v441, %v1193
        %vm1205 = vcmp.eq.s32.totalorder %v442, %v1193
        %vm1206 = vcmp.eq.s32.totalorder %v443, %v1193
        %vm1207 = vcmp.eq.s32.totalorder %v444, %v1193
        %vm1208 = vcmp.eq.s32.totalorder %v445, %v1193
        %vm1209 = vcmp.eq.s32.totalorder %v446, %v1193
        %vm1210 = vcmp.eq.s32.totalorder %v447, %v1193
        %vm1211 = vcmp.eq.s32.totalorder %v448, %v1193
        %vm1212 = vcmp.eq.s32.totalorder %v449, %v1193
        %vm1213 = vcmp.eq.s32.totalorder %v450, %v1193
        %vm1214 = vcmp.eq.s32.totalorder %v451, %v1193
        %vm1215 = vcmp.eq.s32.totalorder %v452, %v1193
        %vm1216 = vcmp.eq.s32.totalorder %v453, %v1193
        %vm1217 = vcmp.eq.s32.totalorder %v454, %v1193
        %vm1218 = vcmp.eq.s32.totalorder %v455, %v1193
        %vm1219 = vcmp.eq.s32.totalorder %v456, %v1193
        %vm1220 = vcmp.eq.s32.totalorder %v457, %v1193
        %vm1221 = vcmp.eq.s32.totalorder %v458, %v1193
        %vm1222 = vcmp.eq.s32.totalorder %v459, %v1193
        %vm1223 = vcmp.eq.s32.totalorder %v460, %v1193
        %vm1224 = vcmp.eq.s32.totalorder %v461, %v1193
        %vm1225 = vcmp.eq.s32.totalorder %v462, %v1193
        %v1226 = vsel %vm1186, 1, 0
        %v1227 = vlaneseq
        %v1228 = vshrl.u32 %v1227, 7
        %v1229 = vsub.s32 0, %v1228
        %v1230 = vrot.slane %v1226, %v1229
        %vm1231 = vcmp.eq.s32.totalorder %v1230, 1
        %vm1232 = vmand %vm1194, %vm1231
        %vm1233 = vmand %vm1195, %vm1231
        %vm1234 = vmand %vm1196, %vm1231
        %vm1235 = vmand %vm1197, %vm1231
        %vm1236 = vmand %vm1198, %vm1231
        %vm1237 = vmand %vm1199, %vm1231
        %vm1238 = vmand %vm1200, %vm1231
        %vm1239 = vmand %vm1201, %vm1231
        %vm1240 = vmand %vm1202, %vm1231
        %vm1241 = vmand %vm1203, %vm1231
        %vm1242 = vmand %vm1204, %vm1231
        %vm1243 = vmand %vm1205, %vm1231
        %vm1244 = vmand %vm1206, %vm1231
        %vm1245 = vmand %vm1207, %vm1231
        %vm1246 = vmand %vm1208, %vm1231
        %vm1247 = vmand %vm1209, %vm1231
        %vm1248 = vmand %vm1210, %vm1231
        %vm1249 = vmand %vm1211, %vm1231
        %vm1250 = vmand %vm1212, %vm1231
        %vm1251 = vmand %vm1213, %vm1231
        %vm1252 = vmand %vm1214, %vm1231
        %vm1253 = vmand %vm1215, %vm1231
        %vm1254 = vmand %vm1216, %vm1231
        %vm1255 = vmand %vm1217, %vm1231
        %vm1256 = vmand %vm1218, %vm1231
        %vm1257 = vmand %vm1219, %vm1231
        %vm1258 = vmand %vm1220, %vm1231
        %vm1259 = vmand %vm1221, %vm1231
        %vm1260 = vmand %vm1222, %vm1231
        %vm1261 = vmand %vm1223, %vm1231
        %vm1262 = vmand %vm1224, %vm1231
        %vm1263 = vmand %vm1225, %vm1231
        %v1264 = vlaneseq
        %v1265 = vshrl.u32 %v1264, 7
        %v1266 = vsub.s32 0, %v1265
        %v1267 = vrot.slane %v1179, %v1266
        %v1268 = vsel %vm1232, %v1267, 0.0
        %v1269 = vsel %vm1233, %v1267, 0.0
        %v1270 = vsel %vm1234, %v1267, 0.0
        %v1271 = vsel %vm1235, %v1267, 0.0
        %v1272 = vsel %vm1236, %v1267, 0.0
        %v1273 = vsel %vm1237, %v1267, 0.0
        %v1274 = vsel %vm1238, %v1267, 0.0
        %v1275 = vsel %vm1239, %v1267, 0.0
        %v1276 = vsel %vm1240, %v1267, 0.0
        %v1277 = vsel %vm1241, %v1267, 0.0
        %v1278 = vsel %vm1242, %v1267, 0.0
        %v1279 = vsel %vm1243, %v1267, 0.0
        %v1280 = vsel %vm1244, %v1267, 0.0
        %v1281 = vsel %vm1245, %v1267, 0.0
        %v1282 = vsel %vm1246, %v1267, 0.0
        %v1283 = vsel %vm1247, %v1267, 0.0
        %v1284 = vsel %vm1248, %v1267, 0.0
        %v1285 = vsel %vm1249, %v1267, 0.0
        %v1286 = vsel %vm1250, %v1267, 0.0
        %v1287 = vsel %vm1251, %v1267, 0.0
        %v1288 = vsel %vm1252, %v1267, 0.0
        %v1289 = vsel %vm1253, %v1267, 0.0
        %v1290 = vsel %vm1254, %v1267, 0.0
        %v1291 = vsel %vm1255, %v1267, 0.0
        %v1292 = vsel %vm1256, %v1267, 0.0
        %v1293 = vsel %vm1257, %v1267, 0.0
        %v1294 = vsel %vm1258, %v1267, 0.0
        %v1295 = vsel %vm1259, %v1267, 0.0
        %v1296 = vsel %vm1260, %v1267, 0.0
        %v1297 = vsel %vm1261, %v1267, 0.0
        %v1298 = vsel %vm1262, %v1267, 0.0
        %v1299 = vsel %vm1263, %v1267, 0.0
        %v1300 = vadd.f32 %v1268, 0.0
        %v1301 = vadd.f32 %v1269, 0.0
        %v1302 = vadd.f32 %v1270, 0.0
        %v1303 = vadd.f32 %v1271, 0.0
        %v1304 = vadd.f32 %v1272, 0.0
        %v1305 = vadd.f32 %v1273, 0.0
        %v1306 = vadd.f32 %v1274, 0.0
        %v1307 = vadd.f32 %v1275, 0.0
        %v1308 = vadd.f32 %v1276, 0.0
        %v1309 = vadd.f32 %v1277, 0.0
        %v1310 = vadd.f32 %v1278, 0.0
        %v1311 = vadd.f32 %v1279, 0.0
        %v1312 = vadd.f32 %v1280, 0.0
        %v1313 = vadd.f32 %v1281, 0.0
        %v1314 = vadd.f32 %v1282, 0.0
        %v1315 = vadd.f32 %v1283, 0.0
        %v1316 = vadd.f32 %v1284, 0.0
        %v1317 = vadd.f32 %v1285, 0.0
        %v1318 = vadd.f32 %v1286, 0.0
        %v1319 = vadd.f32 %v1287, 0.0
        %v1320 = vadd.f32 %v1288, 0.0
        %v1321 = vadd.f32 %v1289, 0.0
        %v1322 = vadd.f32 %v1290, 0.0
        %v1323 = vadd.f32 %v1291, 0.0
        %v1324 = vadd.f32 %v1292, 0.0
        %v1325 = vadd.f32 %v1293, 0.0
        %v1326 = vadd.f32 %v1294, 0.0
        %v1327 = vadd.f32 %v1295, 0.0
        %v1328 = vadd.f32 %v1296, 0.0
        %v1329 = vadd.f32 %v1297, 0.0
        %v1330 = vadd.f32 %v1298, 0.0
        %v1331 = vadd.f32 %v1299, 0.0
        %vm1332 = vmand %vm650, %vm1183
        %vm1333 = vmand %vm1332, %vm1185
        %v1334 = vadd.f32 %v1187, %v486
        %v1335 = vcvt.f32.s32.to.zero.pseudo %v1334
        %v1336 = vlaneseq
        %v1337 = vshrl.u32 %v1336, 7
        %v1338 = vsub.s32 0, %v1337
        %v1339 = vrot.slane %v1335, %v1338
        %vm1340 = vcmp.eq.s32.totalorder %v431, %v1339
        %vm1341 = vcmp.eq.s32.totalorder %v432, %v1339
        %vm1342 = vcmp.eq.s32.totalorder %v433, %v1339
        %vm1343 = vcmp.eq.s32.totalorder %v434, %v1339
        %vm1344 = vcmp.eq.s32.totalorder %v435, %v1339
        %vm1345 = vcmp.eq.s32.totalorder %v436, %v1339
        %vm1346 = vcmp.eq.s32.totalorder %v437, %v1339
        %vm1347 = vcmp.eq.s32.totalorder %v438, %v1339
        %vm1348 = vcmp.eq.s32.totalorder %v439, %v1339
        %vm1349 = vcmp.eq.s32.totalorder %v440, %v1339
        %vm1350 = vcmp.eq.s32.totalorder %v441, %v1339
        %vm1351 = vcmp.eq.s32.totalorder %v442, %v1339
        %vm1352 = vcmp.eq.s32.totalorder %v443, %v1339
        %vm1353 = vcmp.eq.s32.totalorder %v444, %v1339
        %vm1354 = vcmp.eq.s32.totalorder %v445, %v1339
        %vm1355 = vcmp.eq.s32.totalorder %v446, %v1339
        %vm1356 = vcmp.eq.s32.totalorder %v447, %v1339
        %vm1357 = vcmp.eq.s32.totalorder %v448, %v1339
        %vm1358 = vcmp.eq.s32.totalorder %v449, %v1339
        %vm1359 = vcmp.eq.s32.totalorder %v450, %v1339
        %vm1360 = vcmp.eq.s32.totalorder %v451, %v1339
        %vm1361 = vcmp.eq.s32.totalorder %v452, %v1339
        %vm1362 = vcmp.eq.s32.totalorder %v453, %v1339
        %vm1363 = vcmp.eq.s32.totalorder %v454, %v1339
        %vm1364 = vcmp.eq.s32.totalorder %v455, %v1339
        %vm1365 = vcmp.eq.s32.totalorder %v456, %v1339
        %vm1366 = vcmp.eq.s32.totalorder %v457, %v1339
        %vm1367 = vcmp.eq.s32.totalorder %v458, %v1339
        %vm1368 = vcmp.eq.s32.totalorder %v459, %v1339
        %vm1369 = vcmp.eq.s32.totalorder %v460, %v1339
        %vm1370 = vcmp.eq.s32.totalorder %v461, %v1339
        %vm1371 = vcmp.eq.s32.totalorder %v462, %v1339
        %v1372 = vsel %vm1333, 1, 0
        %v1373 = vlaneseq
        %v1374 = vshrl.u32 %v1373, 7
        %v1375 = vsub.s32 0, %v1374
        %v1376 = vrot.slane %v1372, %v1375
        %vm1377 = vcmp.eq.s32.totalorder %v1376, 1
        %vm1378 = vmand %vm1340, %vm1377
        %vm1379 = vmand %vm1341, %vm1377
        %vm1380 = vmand %vm1342, %vm1377
        %vm1381 = vmand %vm1343, %vm1377
        %vm1382 = vmand %vm1344, %vm1377
        %vm1383 = vmand %vm1345, %vm1377
        %vm1384 = vmand %vm1346, %vm1377
        %vm1385 = vmand %vm1347, %vm1377
        %vm1386 = vmand %vm1348, %vm1377
        %vm1387 = vmand %vm1349, %vm1377
        %vm1388 = vmand %vm1350, %vm1377
        %vm1389 = vmand %vm1351, %vm1377
        %vm1390 = vmand %vm1352, %vm1377
        %vm1391 = vmand %vm1353, %vm1377
        %vm1392 = vmand %vm1354, %vm1377
        %vm1393 = vmand %vm1355, %vm1377
        %vm1394 = vmand %vm1356, %vm1377
        %vm1395 = vmand %vm1357, %vm1377
        %vm1396 = vmand %vm1358, %vm1377
        %vm1397 = vmand %vm1359, %vm1377
        %vm1398 = vmand %vm1360, %vm1377
        %vm1399 = vmand %vm1361, %vm1377
        %vm1400 = vmand %vm1362, %vm1377
        %vm1401 = vmand %vm1363, %vm1377
        %vm1402 = vmand %vm1364, %vm1377
        %vm1403 = vmand %vm1365, %vm1377
        %vm1404 = vmand %vm1366, %vm1377
        %vm1405 = vmand %vm1367, %vm1377
        %vm1406 = vmand %vm1368, %vm1377
        %vm1407 = vmand %vm1369, %vm1377
        %vm1408 = vmand %vm1370, %vm1377
        %vm1409 = vmand %vm1371, %vm1377
        %v1410 = vlaneseq
        %v1411 = vshrl.u32 %v1410, 7
        %v1412 = vsub.s32 0, %v1411
        %v1413 = vrot.slane %v1180, %v1412
        %v1414 = vsel %vm1378, %v1413, 0.0
        %v1415 = vsel %vm1379, %v1413, 0.0
        %v1416 = vsel %vm1380, %v1413, 0.0
        %v1417 = vsel %vm1381, %v1413, 0.0
        %v1418 = vsel %vm1382, %v1413, 0.0
        %v1419 = vsel %vm1383, %v1413, 0.0
        %v1420 = vsel %vm1384, %v1413, 0.0
        %v1421 = vsel %vm1385, %v1413, 0.0
        %v1422 = vsel %vm1386, %v1413, 0.0
        %v1423 = vsel %vm1387, %v1413, 0.0
        %v1424 = vsel %vm1388, %v1413, 0.0
        %v1425 = vsel %vm1389, %v1413, 0.0
        %v1426 = vsel %vm1390, %v1413, 0.0
        %v1427 = vsel %vm1391, %v1413, 0.0
        %v1428 = vsel %vm1392, %v1413, 0.0
        %v1429 = vsel %vm1393, %v1413, 0.0
        %v1430 = vsel %vm1394, %v1413, 0.0
        %v1431 = vsel %vm1395, %v1413, 0.0
        %v1432 = vsel %vm1396, %v1413, 0.0
        %v1433 = vsel %vm1397, %v1413, 0.0
        %v1434 = vsel %vm1398, %v1413, 0.0
        %v1435 = vsel %vm1399, %v1413, 0.0
        %v1436 = vsel %vm1400, %v1413, 0.0
        %v1437 = vsel %vm1401, %v1413, 0.0
        %v1438 = vsel %vm1402, %v1413, 0.0
        %v1439 = vsel %vm1403, %v1413, 0.0
        %v1440 = vsel %vm1404, %v1413, 0.0
        %v1441 = vsel %vm1405, %v1413, 0.0
        %v1442 = vsel %vm1406, %v1413, 0.0
        %v1443 = vsel %vm1407, %v1413, 0.0
        %v1444 = vsel %vm1408, %v1413, 0.0
        %v1445 = vsel %vm1409, %v1413, 0.0
        %v1446 = vadd.f32 %v1300, %v1414
        %v1447 = vadd.f32 %v1301, %v1415
        %v1448 = vadd.f32 %v1302, %v1416
        %v1449 = vadd.f32 %v1303, %v1417
        %v1450 = vadd.f32 %v1304, %v1418
        %v1451 = vadd.f32 %v1305, %v1419
        %v1452 = vadd.f32 %v1306, %v1420
        %v1453 = vadd.f32 %v1307, %v1421
        %v1454 = vadd.f32 %v1308, %v1422
        %v1455 = vadd.f32 %v1309, %v1423
        %v1456 = vadd.f32 %v1310, %v1424
        %v1457 = vadd.f32 %v1311, %v1425
        %v1458 = vadd.f32 %v1312, %v1426
        %v1459 = vadd.f32 %v1313, %v1427
        %v1460 = vadd.f32 %v1314, %v1428
        %v1461 = vadd.f32 %v1315, %v1429
        %v1462 = vadd.f32 %v1316, %v1430
        %v1463 = vadd.f32 %v1317, %v1431
        %v1464 = vadd.f32 %v1318, %v1432
        %v1465 = vadd.f32 %v1319, %v1433
        %v1466 = vadd.f32 %v1320, %v1434
        %v1467 = vadd.f32 %v1321, %v1435
        %v1468 = vadd.f32 %v1322, %v1436
        %v1469 = vadd.f32 %v1323, %v1437
        %v1470 = vadd.f32 %v1324, %v1438
        %v1471 = vadd.f32 %v1325, %v1439
        %v1472 = vadd.f32 %v1326, %v1440
        %v1473 = vadd.f32 %v1327, %v1441
        %v1474 = vadd.f32 %v1328, %v1442
        %v1475 = vadd.f32 %v1329, %v1443
        %v1476 = vadd.f32 %v1330, %v1444
        %v1477 = vadd.f32 %v1331, %v1445
        %vm1478 = vcmp.ge.f32.partialorder %v1176, 0.0
        %vm1479 = vmand %vm498, %vm1478
        %vm1480 = vcmp.le.f32.partialorder %v1176, 15.0
        %vm1481 = vmand %vm1479, %vm1480
        %v1482 = vmul.f32 %v1176, 16.0
        %v1483 = vadd.f32 %v1482, %v484
        %v1484 = vcvt.f32.s32.to.zero.pseudo %v1483
        %v1485 = vlaneseq
        %v1486 = vshrl.u32 %v1485, 7
        %v1487 = vsub.s32 0, %v1486
        %v1488 = vrot.slane %v1484, %v1487
        %vm1489 = vcmp.eq.s32.totalorder %v431, %v1488
        %vm1490 = vcmp.eq.s32.totalorder %v432, %v1488
        %vm1491 = vcmp.eq.s32.totalorder %v433, %v1488
        %vm1492 = vcmp.eq.s32.totalorder %v434, %v1488
        %vm1493 = vcmp.eq.s32.totalorder %v435, %v1488
        %vm1494 = vcmp.eq.s32.totalorder %v436, %v1488
        %vm1495 = vcmp.eq.s32.totalorder %v437, %v1488
        %vm1496 = vcmp.eq.s32.totalorder %v438, %v1488
        %vm1497 = vcmp.eq.s32.totalorder %v439, %v1488
        %vm1498 = vcmp.eq.s32.totalorder %v440, %v1488
        %vm1499 = vcmp.eq.s32.totalorder %v441, %v1488
        %vm1500 = vcmp.eq.s32.totalorder %v442, %v1488
        %vm1501 = vcmp.eq.s32.totalorder %v443, %v1488
        %vm1502 = vcmp.eq.s32.totalorder %v444, %v1488
        %vm1503 = vcmp.eq.s32.totalorder %v445, %v1488
        %vm1504 = vcmp.eq.s32.totalorder %v446, %v1488
        %vm1505 = vcmp.eq.s32.totalorder %v447, %v1488
        %vm1506 = vcmp.eq.s32.totalorder %v448, %v1488
        %vm1507 = vcmp.eq.s32.totalorder %v449, %v1488
        %vm1508 = vcmp.eq.s32.totalorder %v450, %v1488
        %vm1509 = vcmp.eq.s32.totalorder %v451, %v1488
        %vm1510 = vcmp.eq.s32.totalorder %v452, %v1488
        %vm1511 = vcmp.eq.s32.totalorder %v453, %v1488
        %vm1512 = vcmp.eq.s32.totalorder %v454, %v1488
        %vm1513 = vcmp.eq.s32.totalorder %v455, %v1488
        %vm1514 = vcmp.eq.s32.totalorder %v456, %v1488
        %vm1515 = vcmp.eq.s32.totalorder %v457, %v1488
        %vm1516 = vcmp.eq.s32.totalorder %v458, %v1488
        %vm1517 = vcmp.eq.s32.totalorder %v459, %v1488
        %vm1518 = vcmp.eq.s32.totalorder %v460, %v1488
        %vm1519 = vcmp.eq.s32.totalorder %v461, %v1488
        %vm1520 = vcmp.eq.s32.totalorder %v462, %v1488
        %v1521 = vsel %vm1481, 1, 0
        %v1522 = vlaneseq
        %v1523 = vshrl.u32 %v1522, 7
        %v1524 = vsub.s32 0, %v1523
        %v1525 = vrot.slane %v1521, %v1524
        %vm1526 = vcmp.eq.s32.totalorder %v1525, 1
        %vm1527 = vmand %vm1489, %vm1526
        %vm1528 = vmand %vm1490, %vm1526
        %vm1529 = vmand %vm1491, %vm1526
        %vm1530 = vmand %vm1492, %vm1526
        %vm1531 = vmand %vm1493, %vm1526
        %vm1532 = vmand %vm1494, %vm1526
        %vm1533 = vmand %vm1495, %vm1526
        %vm1534 = vmand %vm1496, %vm1526
        %vm1535 = vmand %vm1497, %vm1526
        %vm1536 = vmand %vm1498, %vm1526
        %vm1537 = vmand %vm1499, %vm1526
        %vm1538 = vmand %vm1500, %vm1526
        %vm1539 = vmand %vm1501, %vm1526
        %vm1540 = vmand %vm1502, %vm1526
        %vm1541 = vmand %vm1503, %vm1526
        %vm1542 = vmand %vm1504, %vm1526
        %vm1543 = vmand %vm1505, %vm1526
        %vm1544 = vmand %vm1506, %vm1526
        %vm1545 = vmand %vm1507, %vm1526
        %vm1546 = vmand %vm1508, %vm1526
        %vm1547 = vmand %vm1509, %vm1526
        %vm1548 = vmand %vm1510, %vm1526
        %vm1549 = vmand %vm1511, %vm1526
        %vm1550 = vmand %vm1512, %vm1526
        %vm1551 = vmand %vm1513, %vm1526
        %vm1552 = vmand %vm1514, %vm1526
        %vm1553 = vmand %vm1515, %vm1526
        %vm1554 = vmand %vm1516, %vm1526
        %vm1555 = vmand %vm1517, %vm1526
        %vm1556 = vmand %vm1518, %vm1526
        %vm1557 = vmand %vm1519, %vm1526
        %vm1558 = vmand %vm1520, %vm1526
        %v1559 = vlaneseq
        %v1560 = vshrl.u32 %v1559, 7
        %v1561 = vsub.s32 0, %v1560
        %v1562 = vrot.slane %v1181, %v1561
        %v1563 = vsel %vm1527, %v1562, 0.0
        %v1564 = vsel %vm1528, %v1562, 0.0
        %v1565 = vsel %vm1529, %v1562, 0.0
        %v1566 = vsel %vm1530, %v1562, 0.0
        %v1567 = vsel %vm1531, %v1562, 0.0
        %v1568 = vsel %vm1532, %v1562, 0.0
        %v1569 = vsel %vm1533, %v1562, 0.0
        %v1570 = vsel %vm1534, %v1562, 0.0
        %v1571 = vsel %vm1535, %v1562, 0.0
        %v1572 = vsel %vm1536, %v1562, 0.0
        %v1573 = vsel %vm1537, %v1562, 0.0
        %v1574 = vsel %vm1538, %v1562, 0.0
        %v1575 = vsel %vm1539, %v1562, 0.0
        %v1576 = vsel %vm1540, %v1562, 0.0
        %v1577 = vsel %vm1541, %v1562, 0.0
        %v1578 = vsel %vm1542, %v1562, 0.0
        %v1579 = vsel %vm1543, %v1562, 0.0
        %v1580 = vsel %vm1544, %v1562, 0.0
        %v1581 = vsel %vm1545, %v1562, 0.0
        %v1582 = vsel %vm1546, %v1562, 0.0
        %v1583 = vsel %vm1547, %v1562, 0.0
        %v1584 = vsel %vm1548, %v1562, 0.0
        %v1585 = vsel %vm1549, %v1562, 0.0
        %v1586 = vsel %vm1550, %v1562, 0.0
        %v1587 = vsel %vm1551, %v1562, 0.0
        %v1588 = vsel %vm1552, %v1562, 0.0
        %v1589 = vsel %vm1553, %v1562, 0.0
        %v1590 = vsel %vm1554, %v1562, 0.0
        %v1591 = vsel %vm1555, %v1562, 0.0
        %v1592 = vsel %vm1556, %v1562, 0.0
        %v1593 = vsel %vm1557, %v1562, 0.0
        %v1594 = vsel %vm1558, %v1562, 0.0
        %v1595 = vadd.f32 %v1446, %v1563
        %v1596 = vadd.f32 %v1447, %v1564
        %v1597 = vadd.f32 %v1448, %v1565
        %v1598 = vadd.f32 %v1449, %v1566
        %v1599 = vadd.f32 %v1450, %v1567
        %v1600 = vadd.f32 %v1451, %v1568
        %v1601 = vadd.f32 %v1452, %v1569
        %v1602 = vadd.f32 %v1453, %v1570
        %v1603 = vadd.f32 %v1454, %v1571
        %v1604 = vadd.f32 %v1455, %v1572
        %v1605 = vadd.f32 %v1456, %v1573
        %v1606 = vadd.f32 %v1457, %v1574
        %v1607 = vadd.f32 %v1458, %v1575
        %v1608 = vadd.f32 %v1459, %v1576
        %v1609 = vadd.f32 %v1460, %v1577
        %v1610 = vadd.f32 %v1461, %v1578
        %v1611 = vadd.f32 %v1462, %v1579
        %v1612 = vadd.f32 %v1463, %v1580
        %v1613 = vadd.f32 %v1464, %v1581
        %v1614 = vadd.f32 %v1465, %v1582
        %v1615 = vadd.f32 %v1466, %v1583
        %v1616 = vadd.f32 %v1467, %v1584
        %v1617 = vadd.f32 %v1468, %v1585
        %v1618 = vadd.f32 %v1469, %v1586
        %v1619 = vadd.f32 %v1470, %v1587
        %v1620 = vadd.f32 %v1471, %v1588
        %v1621 = vadd.f32 %v1472, %v1589
        %v1622 = vadd.f32 %v1473, %v1590
        %v1623 = vadd.f32 %v1474, %v1591
        %v1624 = vadd.f32 %v1475, %v1592
        %v1625 = vadd.f32 %v1476, %v1593
        %v1626 = vadd.f32 %v1477, %v1594
        %vm1627 = vmand %vm650, %vm1478
        %vm1628 = vmand %vm1627, %vm1480
        %v1629 = vadd.f32 %v1482, %v486
        %v1630 = vcvt.f32.s32.to.zero.pseudo %v1629
        %v1631 = vlaneseq
        %v1632 = vshrl.u32 %v1631, 7
        %v1633 = vsub.s32 0, %v1632
        %v1634 = vrot.slane %v1630, %v1633
        %vm1635 = vcmp.eq.s32.totalorder %v431, %v1634
        %vm1636 = vcmp.eq.s32.totalorder %v432, %v1634
        %vm1637 = vcmp.eq.s32.totalorder %v433, %v1634
        %vm1638 = vcmp.eq.s32.totalorder %v434, %v1634
        %vm1639 = vcmp.eq.s32.totalorder %v435, %v1634
        %vm1640 = vcmp.eq.s32.totalorder %v436, %v1634
        %vm1641 = vcmp.eq.s32.totalorder %v437, %v1634
        %vm1642 = vcmp.eq.s32.totalorder %v438, %v1634
        %vm1643 = vcmp.eq.s32.totalorder %v439, %v1634
        %vm1644 = vcmp.eq.s32.totalorder %v440, %v1634
        %vm1645 = vcmp.eq.s32.totalorder %v441, %v1634
        %vm1646 = vcmp.eq.s32.totalorder %v442, %v1634
        %vm1647 = vcmp.eq.s32.totalorder %v443, %v1634
        %vm1648 = vcmp.eq.s32.totalorder %v444, %v1634
        %vm1649 = vcmp.eq.s32.totalorder %v445, %v1634
        %vm1650 = vcmp.eq.s32.totalorder %v446, %v1634
        %vm1651 = vcmp.eq.s32.totalorder %v447, %v1634
        %vm1652 = vcmp.eq.s32.totalorder %v448, %v1634
        %vm1653 = vcmp.eq.s32.totalorder %v449, %v1634
        %vm1654 = vcmp.eq.s32.totalorder %v450, %v1634
        %vm1655 = vcmp.eq.s32.totalorder %v451, %v1634
        %vm1656 = vcmp.eq.s32.totalorder %v452, %v1634
        %vm1657 = vcmp.eq.s32.totalorder %v453, %v1634
        %vm1658 = vcmp.eq.s32.totalorder %v454, %v1634
        %vm1659 = vcmp.eq.s32.totalorder %v455, %v1634
        %vm1660 = vcmp.eq.s32.totalorder %v456, %v1634
        %vm1661 = vcmp.eq.s32.totalorder %v457, %v1634
        %vm1662 = vcmp.eq.s32.totalorder %v458, %v1634
        %vm1663 = vcmp.eq.s32.totalorder %v459, %v1634
        %vm1664 = vcmp.eq.s32.totalorder %v460, %v1634
        %vm1665 = vcmp.eq.s32.totalorder %v461, %v1634
        %vm1666 = vcmp.eq.s32.totalorder %v462, %v1634
        %v1667 = vsel %vm1628, 1, 0
        %v1668 = vlaneseq
        %v1669 = vshrl.u32 %v1668, 7
        %v1670 = vsub.s32 0, %v1669
        %v1671 = vrot.slane %v1667, %v1670
        %vm1672 = vcmp.eq.s32.totalorder %v1671, 1
        %vm1673 = vmand %vm1635, %vm1672
        %vm1674 = vmand %vm1636, %vm1672
        %vm1675 = vmand %vm1637, %vm1672
        %vm1676 = vmand %vm1638, %vm1672
        %vm1677 = vmand %vm1639, %vm1672
        %vm1678 = vmand %vm1640, %vm1672
        %vm1679 = vmand %vm1641, %vm1672
        %vm1680 = vmand %vm1642, %vm1672
        %vm1681 = vmand %vm1643, %vm1672
        %vm1682 = vmand %vm1644, %vm1672
        %vm1683 = vmand %vm1645, %vm1672
        %vm1684 = vmand %vm1646, %vm1672
        %vm1685 = vmand %vm1647, %vm1672
        %vm1686 = vmand %vm1648, %vm1672
        %vm1687 = vmand %vm1649, %vm1672
        %vm1688 = vmand %vm1650, %vm1672
        %vm1689 = vmand %vm1651, %vm1672
        %vm1690 = vmand %vm1652, %vm1672
        %vm1691 = vmand %vm1653, %vm1672
        %vm1692 = vmand %vm1654, %vm1672
        %vm1693 = vmand %vm1655, %vm1672
        %vm1694 = vmand %vm1656, %vm1672
        %vm1695 = vmand %vm1657, %vm1672
        %vm1696 = vmand %vm1658, %vm1672
        %vm1697 = vmand %vm1659, %vm1672
        %vm1698 = vmand %vm1660, %vm1672
        %vm1699 = vmand %vm1661, %vm1672
        %vm1700 = vmand %vm1662, %vm1672
        %vm1701 = vmand %vm1663, %vm1672
        %vm1702 = vmand %vm1664, %vm1672
        %vm1703 = vmand %vm1665, %vm1672
        %vm1704 = vmand %vm1666, %vm1672
        %v1705 = vlaneseq
        %v1706 = vshrl.u32 %v1705, 7
        %v1707 = vsub.s32 0, %v1706
        %v1708 = vrot.slane %v1182, %v1707
        %v1709 = vsel %vm1673, %v1708, 0.0
        %v1710 = vsel %vm1674, %v1708, 0.0
        %v1711 = vsel %vm1675, %v1708, 0.0
        %v1712 = vsel %vm1676, %v1708, 0.0
        %v1713 = vsel %vm1677, %v1708, 0.0
        %v1714 = vsel %vm1678, %v1708, 0.0
        %v1715 = vsel %vm1679, %v1708, 0.0
        %v1716 = vsel %vm1680, %v1708, 0.0
        %v1717 = vsel %vm1681, %v1708, 0.0
        %v1718 = vsel %vm1682, %v1708, 0.0
        %v1719 = vsel %vm1683, %v1708, 0.0
        %v1720 = vsel %vm1684, %v1708, 0.0
        %v1721 = vsel %vm1685, %v1708, 0.0
        %v1722 = vsel %vm1686, %v1708, 0.0
        %v1723 = vsel %vm1687, %v1708, 0.0
        %v1724 = vsel %vm1688, %v1708, 0.0
        %v1725 = vsel %vm1689, %v1708, 0.0
        %v1726 = vsel %vm1690, %v1708, 0.0
        %v1727 = vsel %vm1691, %v1708, 0.0
        %v1728 = vsel %vm1692, %v1708, 0.0
        %v1729 = vsel %vm1693, %v1708, 0.0
        %v1730 = vsel %vm1694, %v1708, 0.0
        %v1731 = vsel %vm1695, %v1708, 0.0
        %v1732 = vsel %vm1696, %v1708, 0.0
        %v1733 = vsel %vm1697, %v1708, 0.0
        %v1734 = vsel %vm1698, %v1708, 0.0
        %v1735 = vsel %vm1699, %v1708, 0.0
        %v1736 = vsel %vm1700, %v1708, 0.0
        %v1737 = vsel %vm1701, %v1708, 0.0
        %v1738 = vsel %vm1702, %v1708, 0.0
        %v1739 = vsel %vm1703, %v1708, 0.0
        %v1740 = vsel %vm1704, %v1708, 0.0
        %v1741 = vadd.f32 %v1595, %v1709
        %v1742 = vadd.f32 %v1596, %v1710
        %v1743 = vadd.f32 %v1597, %v1711
        %v1744 = vadd.f32 %v1598, %v1712
        %v1745 = vadd.f32 %v1599, %v1713
        %v1746 = vadd.f32 %v1600, %v1714
        %v1747 = vadd.f32 %v1601, %v1715
        %v1748 = vadd.f32 %v1602, %v1716
        %v1749 = vadd.f32 %v1603, %v1717
        %v1750 = vadd.f32 %v1604, %v1718
        %v1751 = vadd.f32 %v1605, %v1719
        %v1752 = vadd.f32 %v1606, %v1720
        %v1753 = vadd.f32 %v1607, %v1721
        %v1754 = vadd.f32 %v1608, %v1722
        %v1755 = vadd.f32 %v1609, %v1723
        %v1756 = vadd.f32 %v1610, %v1724
        %v1757 = vadd.f32 %v1611, %v1725
        %v1758 = vadd.f32 %v1612, %v1726
        %v1759 = vadd.f32 %v1613, %v1727
        %v1760 = vadd.f32 %v1614, %v1728
        %v1761 = vadd.f32 %v1615, %v1729
        %v1762 = vadd.f32 %v1616, %v1730
        %v1763 = vadd.f32 %v1617, %v1731
        %v1764 = vadd.f32 %v1618, %v1732
        %v1765 = vadd.f32 %v1619, %v1733
        %v1766 = vadd.f32 %v1620, %v1734
        %v1767 = vadd.f32 %v1621, %v1735
        %v1768 = vadd.f32 %v1622, %v1736
        %v1769 = vadd.f32 %v1623, %v1737
        %v1770 = vadd.f32 %v1624, %v1738
        %v1771 = vadd.f32 %v1625, %v1739
        %v1772 = vadd.f32 %v1626, %v1740
        %v1773 = vld [vmem:[#allocation2] sm:$0xff]
        %s1774 = scalar_lea.vmem %s339, 16 [#allocation6]
        %v1775 = vld [vmem:[%s1774] sm:$0xff]
        %v1776 = vld [vmem:[%s1774 + $0x8] sm:$0xff]
        %1777 = vmatprep.subr.mxu0 0.0
        %1778 = vmatpush1.msra.mxu0 %v1741
        %1779 = vmatprep.subr.mxu0 0.0
        %1780 = vmatpush1.msra.mxu0 %v1742
        %1781 = vmatprep.subr.mxu0 0.0
        %1782 = vmatpush1.msra.mxu0 %v1743
        %1783 = vmatprep.subr.mxu0 0.0
        %1784 = vmatpush1.msra.mxu0 %v1744
        %1785 = vmatprep.subr.mxu0 0.0
        %1786 = vmatpush1.msra.mxu0 %v1745
        %1787 = vmatprep.subr.mxu0 0.0
        %1788 = vmatpush1.msra.mxu0 %v1746
        %1789 = vmatprep.subr.mxu0 0.0
        %1790 = vmatpush1.msra.mxu0 %v1747
        %1791 = vmatprep.subr.mxu0 0.0
        %1792 = vmatpush1.msra.mxu0 %v1748
        %1793 = vmatprep.subr.mxu0 0.0
        %1794 = vmatpush1.msra.mxu0 %v1749
        %1795 = vmatprep.subr.mxu0 0.0
        %1796 = vmatpush1.msra.mxu0 %v1750
        %1797 = vmatprep.subr.mxu0 0.0
        %1798 = vmatpush1.msra.mxu0 %v1751
        %1799 = vmatprep.subr.mxu0 0.0
        %1800 = vmatpush1.msra.mxu0 %v1752
        %1801 = vmatprep.subr.mxu0 0.0
        %1802 = vmatpush1.msra.mxu0 %v1753
        %1803 = vmatprep.subr.mxu0 0.0
        %1804 = vmatpush1.msra.mxu0 %v1754
        %1805 = vmatprep.subr.mxu0 0.0
        %1806 = vmatpush1.msra.mxu0 %v1755
        %1807 = vmatprep.subr.mxu0 0.0
        %1808 = vmatpush1.msra.mxu0 %v1756
        %1809 = vmatprep.subr.mxu0 0.0
        %1810 = vmatpush1.msra.mxu0 %v1757
        %1811 = vmatprep.subr.mxu0 0.0
        %1812 = vmatpush1.msra.mxu0 %v1758
        %1813 = vmatprep.subr.mxu0 0.0
        %1814 = vmatpush1.msra.mxu0 %v1759
        %1815 = vmatprep.subr.mxu0 0.0
        %1816 = vmatpush1.msra.mxu0 %v1760
        %1817 = vmatprep.subr.mxu0 0.0
        %1818 = vmatpush1.msra.mxu0 %v1761
        %1819 = vmatprep.subr.mxu0 0.0
        %1820 = vmatpush1.msra.mxu0 %v1762
        %1821 = vmatprep.subr.mxu0 0.0
        %1822 = vmatpush1.msra.mxu0 %v1763
        %1823 = vmatprep.subr.mxu0 0.0
        %1824 = vmatpush1.msra.mxu0 %v1764
        %1825 = vmatprep.subr.mxu0 0.0
        %1826 = vmatpush1.msra.mxu0 %v1765
        %1827 = vmatprep.subr.mxu0 0.0
        %1828 = vmatpush1.msra.mxu0 %v1766
        %1829 = vmatprep.subr.mxu0 0.0
        %1830 = vmatpush1.msra.mxu0 %v1767
        %1831 = vmatprep.subr.mxu0 0.0
        %1832 = vmatpush1.msra.mxu0 %v1768
        %1833 = vmatprep.subr.mxu0 0.0
        %1834 = vmatpush1.msra.mxu0 %v1769
        %1835 = vmatprep.subr.mxu0 0.0
        %1836 = vmatpush1.msra.mxu0 %v1770
        %1837 = vmatprep.subr.mxu0 0.0
        %1838 = vmatpush1.msra.mxu0 %v1771
        %1839 = vmatprep.subr.mxu0 0.0
        %1840 = vmatpush1.msra.mxu0 %v1772
        %1841 = vmatprep.mubr.f32.mxu0 %v1776
        %1842 = vmatmul.mubr.f32.gmra.mrb[0].mxu0 %v1775
        %v1843 = vpop.f32.mrb[0].mxu0
        %v1844 = vadd.f32 0.0, %v1843
        %v1845 = vpop.f32.mrb[0].mxu0
        %1846 = vdwg.mxu0
        %v1847 = vadd.f32 %v1773, %v1844
        %1848 = vst [vmem:[#allocation2] sm:$0xff] %v1847
        %vm1849 = vmand %vm1183, %vm1185
        %vm1850 = vmand %vm1849, %vm496
        %vm1851 = vmand %vm1850, %vm497
        %v1852 = vmul.f32 %v484, 16.0
        %v1853 = vadd.f32 %v1852, %v1175
        %v1854 = vcvt.f32.s32.to.zero.pseudo %v1853
        %v1855 = vlaneseq
        %v1856 = vshrl.u32 %v1855, 7
        %v1857 = vsub.s32 0, %v1856
        %v1858 = vrot.slane %v1854, %v1857
        %vm1859 = vcmp.eq.s32.totalorder %v431, %v1858
        %vm1860 = vcmp.eq.s32.totalorder %v432, %v1858
        %vm1861 = vcmp.eq.s32.totalorder %v433, %v1858
        %vm1862 = vcmp.eq.s32.totalorder %v434, %v1858
        %vm1863 = vcmp.eq.s32.totalorder %v435, %v1858
        %vm1864 = vcmp.eq.s32.totalorder %v436, %v1858
        %vm1865 = vcmp.eq.s32.totalorder %v437, %v1858
        %vm1866 = vcmp.eq.s32.totalorder %v438, %v1858
        %vm1867 = vcmp.eq.s32.totalorder %v439, %v1858
        %vm1868 = vcmp.eq.s32.totalorder %v440, %v1858
        %vm1869 = vcmp.eq.s32.totalorder %v441, %v1858
        %vm1870 = vcmp.eq.s32.totalorder %v442, %v1858
        %vm1871 = vcmp.eq.s32.totalorder %v443, %v1858
        %vm1872 = vcmp.eq.s32.totalorder %v444, %v1858
        %vm1873 = vcmp.eq.s32.totalorder %v445, %v1858
        %vm1874 = vcmp.eq.s32.totalorder %v446, %v1858
        %vm1875 = vcmp.eq.s32.totalorder %v447, %v1858
        %vm1876 = vcmp.eq.s32.totalorder %v448, %v1858
        %vm1877 = vcmp.eq.s32.totalorder %v449, %v1858
        %vm1878 = vcmp.eq.s32.totalorder %v450, %v1858
        %vm1879 = vcmp.eq.s32.totalorder %v451, %v1858
        %vm1880 = vcmp.eq.s32.totalorder %v452, %v1858
        %vm1881 = vcmp.eq.s32.totalorder %v453, %v1858
        %vm1882 = vcmp.eq.s32.totalorder %v454, %v1858
        %vm1883 = vcmp.eq.s32.totalorder %v455, %v1858
        %vm1884 = vcmp.eq.s32.totalorder %v456, %v1858
        %vm1885 = vcmp.eq.s32.totalorder %v457, %v1858
        %vm1886 = vcmp.eq.s32.totalorder %v458, %v1858
        %vm1887 = vcmp.eq.s32.totalorder %v459, %v1858
        %vm1888 = vcmp.eq.s32.totalorder %v460, %v1858
        %vm1889 = vcmp.eq.s32.totalorder %v461, %v1858
        %vm1890 = vcmp.eq.s32.totalorder %v462, %v1858
        %v1891 = vsel %vm1851, 1, 0
        %v1892 = vlaneseq
        %v1893 = vshrl.u32 %v1892, 7
        %v1894 = vsub.s32 0, %v1893
        %v1895 = vrot.slane %v1891, %v1894
        %vm1896 = vcmp.eq.s32.totalorder %v1895, 1
        %vm1897 = vmand %vm1859, %vm1896
        %vm1898 = vmand %vm1860, %vm1896
        %vm1899 = vmand %vm1861, %vm1896
        %vm1900 = vmand %vm1862, %vm1896
        %vm1901 = vmand %vm1863, %vm1896
        %vm1902 = vmand %vm1864, %vm1896
        %vm1903 = vmand %vm1865, %vm1896
        %vm1904 = vmand %vm1866, %vm1896
        %vm1905 = vmand %vm1867, %vm1896
        %vm1906 = vmand %vm1868, %vm1896
        %vm1907 = vmand %vm1869, %vm1896
        %vm1908 = vmand %vm1870, %vm1896
        %vm1909 = vmand %vm1871, %vm1896
        %vm1910 = vmand %vm1872, %vm1896
        %vm1911 = vmand %vm1873, %vm1896
        %vm1912 = vmand %vm1874, %vm1896
        %vm1913 = vmand %vm1875, %vm1896
        %vm1914 = vmand %vm1876, %vm1896
        %vm1915 = vmand %vm1877, %vm1896
        %vm1916 = vmand %vm1878, %vm1896
        %vm1917 = vmand %vm1879, %vm1896
        %vm1918 = vmand %vm1880, %vm1896
        %vm1919 = vmand %vm1881, %vm1896
        %vm1920 = vmand %vm1882, %vm1896
        %vm1921 = vmand %vm1883, %vm1896
        %vm1922 = vmand %vm1884, %vm1896
        %vm1923 = vmand %vm1885, %vm1896
        %vm1924 = vmand %vm1886, %vm1896
        %vm1925 = vmand %vm1887, %vm1896
        %vm1926 = vmand %vm1888, %vm1896
        %vm1927 = vmand %vm1889, %vm1896
        %vm1928 = vmand %vm1890, %vm1896
        %v1929 = vsel %vm1897, %v1267, 0.0
        %v1930 = vsel %vm1898, %v1267, 0.0
        %v1931 = vsel %vm1899, %v1267, 0.0
        %v1932 = vsel %vm1900, %v1267, 0.0
        %v1933 = vsel %vm1901, %v1267, 0.0
        %v1934 = vsel %vm1902, %v1267, 0.0
        %v1935 = vsel %vm1903, %v1267, 0.0
        %v1936 = vsel %vm1904, %v1267, 0.0
        %v1937 = vsel %vm1905, %v1267, 0.0
        %v1938 = vsel %vm1906, %v1267, 0.0
        %v1939 = vsel %vm1907, %v1267, 0.0
        %v1940 = vsel %vm1908, %v1267, 0.0
        %v1941 = vsel %vm1909, %v1267, 0.0
        %v1942 = vsel %vm1910, %v1267, 0.0
        %v1943 = vsel %vm1911, %v1267, 0.0
        %v1944 = vsel %vm1912, %v1267, 0.0
        %v1945 = vsel %vm1913, %v1267, 0.0
        %v1946 = vsel %vm1914, %v1267, 0.0
        %v1947 = vsel %vm1915, %v1267, 0.0
        %v1948 = vsel %vm1916, %v1267, 0.0
        %v1949 = vsel %vm1917, %v1267, 0.0
        %v1950 = vsel %vm1918, %v1267, 0.0
        %v1951 = vsel %vm1919, %v1267, 0.0
        %v1952 = vsel %vm1920, %v1267, 0.0
        %v1953 = vsel %vm1921, %v1267, 0.0
        %v1954 = vsel %vm1922, %v1267, 0.0
        %v1955 = vsel %vm1923, %v1267, 0.0
        %v1956 = vsel %vm1924, %v1267, 0.0
        %v1957 = vsel %vm1925, %v1267, 0.0
        %v1958 = vsel %vm1926, %v1267, 0.0
        %v1959 = vsel %vm1927, %v1267, 0.0
        %v1960 = vsel %vm1928, %v1267, 0.0
        %v1961 = vadd.f32 %v1929, 0.0
        %v1962 = vadd.f32 %v1930, 0.0
        %v1963 = vadd.f32 %v1931, 0.0
        %v1964 = vadd.f32 %v1932, 0.0
        %v1965 = vadd.f32 %v1933, 0.0
        %v1966 = vadd.f32 %v1934, 0.0
        %v1967 = vadd.f32 %v1935, 0.0
        %v1968 = vadd.f32 %v1936, 0.0
        %v1969 = vadd.f32 %v1937, 0.0
        %v1970 = vadd.f32 %v1938, 0.0
        %v1971 = vadd.f32 %v1939, 0.0
        %v1972 = vadd.f32 %v1940, 0.0
        %v1973 = vadd.f32 %v1941, 0.0
        %v1974 = vadd.f32 %v1942, 0.0
        %v1975 = vadd.f32 %v1943, 0.0
        %v1976 = vadd.f32 %v1944, 0.0
        %v1977 = vadd.f32 %v1945, 0.0
        %v1978 = vadd.f32 %v1946, 0.0
        %v1979 = vadd.f32 %v1947, 0.0
        %v1980 = vadd.f32 %v1948, 0.0
        %v1981 = vadd.f32 %v1949, 0.0
        %v1982 = vadd.f32 %v1950, 0.0
        %v1983 = vadd.f32 %v1951, 0.0
        %v1984 = vadd.f32 %v1952, 0.0
        %v1985 = vadd.f32 %v1953, 0.0
        %v1986 = vadd.f32 %v1954, 0.0
        %v1987 = vadd.f32 %v1955, 0.0
        %v1988 = vadd.f32 %v1956, 0.0
        %v1989 = vadd.f32 %v1957, 0.0
        %v1990 = vadd.f32 %v1958, 0.0
        %v1991 = vadd.f32 %v1959, 0.0
        %v1992 = vadd.f32 %v1960, 0.0
        %vm1993 = vmand %vm1478, %vm1480
        %vm1994 = vmand %vm1993, %vm496
        %vm1995 = vmand %vm1994, %vm497
        %v1996 = vadd.f32 %v1852, %v1176
        %v1997 = vcvt.f32.s32.to.zero.pseudo %v1996
        %v1998 = vlaneseq
        %v1999 = vshrl.u32 %v1998, 7
        %v2000 = vsub.s32 0, %v1999
        %v2001 = vrot.slane %v1997, %v2000
        %vm2002 = vcmp.eq.s32.totalorder %v431, %v2001
        %vm2003 = vcmp.eq.s32.totalorder %v432, %v2001
        %vm2004 = vcmp.eq.s32.totalorder %v433, %v2001
        %vm2005 = vcmp.eq.s32.totalorder %v434, %v2001
        %vm2006 = vcmp.eq.s32.totalorder %v435, %v2001
        %vm2007 = vcmp.eq.s32.totalorder %v436, %v2001
        %vm2008 = vcmp.eq.s32.totalorder %v437, %v2001
        %vm2009 = vcmp.eq.s32.totalorder %v438, %v2001
        %vm2010 = vcmp.eq.s32.totalorder %v439, %v2001
        %vm2011 = vcmp.eq.s32.totalorder %v440, %v2001
        %vm2012 = vcmp.eq.s32.totalorder %v441, %v2001
        %vm2013 = vcmp.eq.s32.totalorder %v442, %v2001
        %vm2014 = vcmp.eq.s32.totalorder %v443, %v2001
        %vm2015 = vcmp.eq.s32.totalorder %v444, %v2001
        %vm2016 = vcmp.eq.s32.totalorder %v445, %v2001
        %vm2017 = vcmp.eq.s32.totalorder %v446, %v2001
        %vm2018 = vcmp.eq.s32.totalorder %v447, %v2001
        %vm2019 = vcmp.eq.s32.totalorder %v448, %v2001
        %vm2020 = vcmp.eq.s32.totalorder %v449, %v2001
        %vm2021 = vcmp.eq.s32.totalorder %v450, %v2001
        %vm2022 = vcmp.eq.s32.totalorder %v451, %v2001
        %vm2023 = vcmp.eq.s32.totalorder %v452, %v2001
        %vm2024 = vcmp.eq.s32.totalorder %v453, %v2001
        %vm2025 = vcmp.eq.s32.totalorder %v454, %v2001
        %vm2026 = vcmp.eq.s32.totalorder %v455, %v2001
        %vm2027 = vcmp.eq.s32.totalorder %v456, %v2001
        %vm2028 = vcmp.eq.s32.totalorder %v457, %v2001
        %vm2029 = vcmp.eq.s32.totalorder %v458, %v2001
        %vm2030 = vcmp.eq.s32.totalorder %v459, %v2001
        %vm2031 = vcmp.eq.s32.totalorder %v460, %v2001
        %vm2032 = vcmp.eq.s32.totalorder %v461, %v2001
        %vm2033 = vcmp.eq.s32.totalorder %v462, %v2001
        %v2034 = vsel %vm1995, 1, 0
        %v2035 = vlaneseq
        %v2036 = vshrl.u32 %v2035, 7
        %v2037 = vsub.s32 0, %v2036
        %v2038 = vrot.slane %v2034, %v2037
        %vm2039 = vcmp.eq.s32.totalorder %v2038, 1
        %vm2040 = vmand %vm2002, %vm2039
        %vm2041 = vmand %vm2003, %vm2039
        %vm2042 = vmand %vm2004, %vm2039
        %vm2043 = vmand %vm2005, %vm2039
        %vm2044 = vmand %vm2006, %vm2039
        %vm2045 = vmand %vm2007, %vm2039
        %vm2046 = vmand %vm2008, %vm2039
        %vm2047 = vmand %vm2009, %vm2039
        %vm2048 = vmand %vm2010, %vm2039
        %vm2049 = vmand %vm2011, %vm2039
        %vm2050 = vmand %vm2012, %vm2039
        %vm2051 = vmand %vm2013, %vm2039
        %vm2052 = vmand %vm2014, %vm2039
        %vm2053 = vmand %vm2015, %vm2039
        %vm2054 = vmand %vm2016, %vm2039
        %vm2055 = vmand %vm2017, %vm2039
        %vm2056 = vmand %vm2018, %vm2039
        %vm2057 = vmand %vm2019, %vm2039
        %vm2058 = vmand %vm2020, %vm2039
        %vm2059 = vmand %vm2021, %vm2039
        %vm2060 = vmand %vm2022, %vm2039
        %vm2061 = vmand %vm2023, %vm2039
        %vm2062 = vmand %vm2024, %vm2039
        %vm2063 = vmand %vm2025, %vm2039
        %vm2064 = vmand %vm2026, %vm2039
        %vm2065 = vmand %vm2027, %vm2039
        %vm2066 = vmand %vm2028, %vm2039
        %vm2067 = vmand %vm2029, %vm2039
        %vm2068 = vmand %vm2030, %vm2039
        %vm2069 = vmand %vm2031, %vm2039
        %vm2070 = vmand %vm2032, %vm2039
        %vm2071 = vmand %vm2033, %vm2039
        %v2072 = vsel %vm2040, %v1562, 0.0
        %v2073 = vsel %vm2041, %v1562, 0.0
        %v2074 = vsel %vm2042, %v1562, 0.0
        %v2075 = vsel %vm2043, %v1562, 0.0
        %v2076 = vsel %vm2044, %v1562, 0.0
        %v2077 = vsel %vm2045, %v1562, 0.0
        %v2078 = vsel %vm2046, %v1562, 0.0
        %v2079 = vsel %vm2047, %v1562, 0.0
        %v2080 = vsel %vm2048, %v1562, 0.0
        %v2081 = vsel %vm2049, %v1562, 0.0
        %v2082 = vsel %vm2050, %v1562, 0.0
        %v2083 = vsel %vm2051, %v1562, 0.0
        %v2084 = vsel %vm2052, %v1562, 0.0
        %v2085 = vsel %vm2053, %v1562, 0.0
        %v2086 = vsel %vm2054, %v1562, 0.0
        %v2087 = vsel %vm2055, %v1562, 0.0
        %v2088 = vsel %vm2056, %v1562, 0.0
        %v2089 = vsel %vm2057, %v1562, 0.0
        %v2090 = vsel %vm2058, %v1562, 0.0
        %v2091 = vsel %vm2059, %v1562, 0.0
        %v2092 = vsel %vm2060, %v1562, 0.0
        %v2093 = vsel %vm2061, %v1562, 0.0
        %v2094 = vsel %vm2062, %v1562, 0.0
        %v2095 = vsel %vm2063, %v1562, 0.0
        %v2096 = vsel %vm2064, %v1562, 0.0
        %v2097 = vsel %vm2065, %v1562, 0.0
        %v2098 = vsel %vm2066, %v1562, 0.0
        %v2099 = vsel %vm2067, %v1562, 0.0
        %v2100 = vsel %vm2068, %v1562, 0.0
        %v2101 = vsel %vm2069, %v1562, 0.0
        %v2102 = vsel %vm2070, %v1562, 0.0
        %v2103 = vsel %vm2071, %v1562, 0.0
        %v2104 = vadd.f32 %v1961, %v2072
        %v2105 = vadd.f32 %v1962, %v2073
        %v2106 = vadd.f32 %v1963, %v2074
        %v2107 = vadd.f32 %v1964, %v2075
        %v2108 = vadd.f32 %v1965, %v2076
        %v2109 = vadd.f32 %v1966, %v2077
        %v2110 = vadd.f32 %v1967, %v2078
        %v2111 = vadd.f32 %v1968, %v2079
        %v2112 = vadd.f32 %v1969, %v2080
        %v2113 = vadd.f32 %v1970, %v2081
        %v2114 = vadd.f32 %v1971, %v2082
        %v2115 = vadd.f32 %v1972, %v2083
        %v2116 = vadd.f32 %v1973, %v2084
        %v2117 = vadd.f32 %v1974, %v2085
        %v2118 = vadd.f32 %v1975, %v2086
        %v2119 = vadd.f32 %v1976, %v2087
        %v2120 = vadd.f32 %v1977, %v2088
        %v2121 = vadd.f32 %v1978, %v2089
        %v2122 = vadd.f32 %v1979, %v2090
        %v2123 = vadd.f32 %v1980, %v2091
        %v2124 = vadd.f32 %v1981, %v2092
        %v2125 = vadd.f32 %v1982, %v2093
        %v2126 = vadd.f32 %v1983, %v2094
        %v2127 = vadd.f32 %v1984, %v2095
        %v2128 = vadd.f32 %v1985, %v2096
        %v2129 = vadd.f32 %v1986, %v2097
        %v2130 = vadd.f32 %v1987, %v2098
        %v2131 = vadd.f32 %v1988, %v2099
        %v2132 = vadd.f32 %v1989, %v2100
        %v2133 = vadd.f32 %v1990, %v2101
        %v2134 = vadd.f32 %v1991, %v2102
        %v2135 = vadd.f32 %v1992, %v2103
        %vm2136 = vmand %vm1849, %vm648
        %vm2137 = vmand %vm2136, %vm649
        %v2138 = vmul.f32 %v486, 16.0
        %v2139 = vadd.f32 %v2138, %v1175
        %v2140 = vcvt.f32.s32.to.zero.pseudo %v2139
        %v2141 = vlaneseq
        %v2142 = vshrl.u32 %v2141, 7
        %v2143 = vsub.s32 0, %v2142
        %v2144 = vrot.slane %v2140, %v2143
        %vm2145 = vcmp.eq.s32.totalorder %v431, %v2144
        %vm2146 = vcmp.eq.s32.totalorder %v432, %v2144
        %vm2147 = vcmp.eq.s32.totalorder %v433, %v2144
        %vm2148 = vcmp.eq.s32.totalorder %v434, %v2144
        %vm2149 = vcmp.eq.s32.totalorder %v435, %v2144
        %vm2150 = vcmp.eq.s32.totalorder %v436, %v2144
        %vm2151 = vcmp.eq.s32.totalorder %v437, %v2144
        %vm2152 = vcmp.eq.s32.totalorder %v438, %v2144
        %vm2153 = vcmp.eq.s32.totalorder %v439, %v2144
        %vm2154 = vcmp.eq.s32.totalorder %v440, %v2144
        %vm2155 = vcmp.eq.s32.totalorder %v441, %v2144
        %vm2156 = vcmp.eq.s32.totalorder %v442, %v2144
        %vm2157 = vcmp.eq.s32.totalorder %v443, %v2144
        %vm2158 = vcmp.eq.s32.totalorder %v444, %v2144
        %vm2159 = vcmp.eq.s32.totalorder %v445, %v2144
        %vm2160 = vcmp.eq.s32.totalorder %v446, %v2144
        %vm2161 = vcmp.eq.s32.totalorder %v447, %v2144
        %vm2162 = vcmp.eq.s32.totalorder %v448, %v2144
        %vm2163 = vcmp.eq.s32.totalorder %v449, %v2144
        %vm2164 = vcmp.eq.s32.totalorder %v450, %v2144
        %vm2165 = vcmp.eq.s32.totalorder %v451, %v2144
        %vm2166 = vcmp.eq.s32.totalorder %v452, %v2144
        %vm2167 = vcmp.eq.s32.totalorder %v453, %v2144
        %vm2168 = vcmp.eq.s32.totalorder %v454, %v2144
        %vm2169 = vcmp.eq.s32.totalorder %v455, %v2144
        %vm2170 = vcmp.eq.s32.totalorder %v456, %v2144
        %vm2171 = vcmp.eq.s32.totalorder %v457, %v2144
        %vm2172 = vcmp.eq.s32.totalorder %v458, %v2144
        %vm2173 = vcmp.eq.s32.totalorder %v459, %v2144
        %vm2174 = vcmp.eq.s32.totalorder %v460, %v2144
        %vm2175 = vcmp.eq.s32.totalorder %v461, %v2144
        %vm2176 = vcmp.eq.s32.totalorder %v462, %v2144
        %v2177 = vsel %vm2137, 1, 0
        %v2178 = vlaneseq
        %v2179 = vshrl.u32 %v2178, 7
        %v2180 = vsub.s32 0, %v2179
        %v2181 = vrot.slane %v2177, %v2180
        %vm2182 = vcmp.eq.s32.totalorder %v2181, 1
        %vm2183 = vmand %vm2145, %vm2182
        %vm2184 = vmand %vm2146, %vm2182
        %vm2185 = vmand %vm2147, %vm2182
        %vm2186 = vmand %vm2148, %vm2182
        %vm2187 = vmand %vm2149, %vm2182
        %vm2188 = vmand %vm2150, %vm2182
        %vm2189 = vmand %vm2151, %vm2182
        %vm2190 = vmand %vm2152, %vm2182
        %vm2191 = vmand %vm2153, %vm2182
        %vm2192 = vmand %vm2154, %vm2182
        %vm2193 = vmand %vm2155, %vm2182
        %vm2194 = vmand %vm2156, %vm2182
        %vm2195 = vmand %vm2157, %vm2182
        %vm2196 = vmand %vm2158, %vm2182
        %vm2197 = vmand %vm2159, %vm2182
        %vm2198 = vmand %vm2160, %vm2182
        %vm2199 = vmand %vm2161, %vm2182
        %vm2200 = vmand %vm2162, %vm2182
        %vm2201 = vmand %vm2163, %vm2182
        %vm2202 = vmand %vm2164, %vm2182
        %vm2203 = vmand %vm2165, %vm2182
        %vm2204 = vmand %vm2166, %vm2182
        %vm2205 = vmand %vm2167, %vm2182
        %vm2206 = vmand %vm2168, %vm2182
        %vm2207 = vmand %vm2169, %vm2182
        %vm2208 = vmand %vm2170, %vm2182
        %vm2209 = vmand %vm2171, %vm2182
        %vm2210 = vmand %vm2172, %vm2182
        %vm2211 = vmand %vm2173, %vm2182
        %vm2212 = vmand %vm2174, %vm2182
        %vm2213 = vmand %vm2175, %vm2182
        %vm2214 = vmand %vm2176, %vm2182
        %v2215 = vsel %vm2183, %v1413, 0.0
        %v2216 = vsel %vm2184, %v1413, 0.0
        %v2217 = vsel %vm2185, %v1413, 0.0
        %v2218 = vsel %vm2186, %v1413, 0.0
        %v2219 = vsel %vm2187, %v1413, 0.0
        %v2220 = vsel %vm2188, %v1413, 0.0
        %v2221 = vsel %vm2189, %v1413, 0.0
        %v2222 = vsel %vm2190, %v1413, 0.0
        %v2223 = vsel %vm2191, %v1413, 0.0
        %v2224 = vsel %vm2192, %v1413, 0.0
        %v2225 = vsel %vm2193, %v1413, 0.0
        %v2226 = vsel %vm2194, %v1413, 0.0
        %v2227 = vsel %vm2195, %v1413, 0.0
        %v2228 = vsel %vm2196, %v1413, 0.0
        %v2229 = vsel %vm2197, %v1413, 0.0
        %v2230 = vsel %vm2198, %v1413, 0.0
        %v2231 = vsel %vm2199, %v1413, 0.0
        %v2232 = vsel %vm2200, %v1413, 0.0
        %v2233 = vsel %vm2201, %v1413, 0.0
        %v2234 = vsel %vm2202, %v1413, 0.0
        %v2235 = vsel %vm2203, %v1413, 0.0
        %v2236 = vsel %vm2204, %v1413, 0.0
        %v2237 = vsel %vm2205, %v1413, 0.0
        %v2238 = vsel %vm2206, %v1413, 0.0
        %v2239 = vsel %vm2207, %v1413, 0.0
        %v2240 = vsel %vm2208, %v1413, 0.0
        %v2241 = vsel %vm2209, %v1413, 0.0
        %v2242 = vsel %vm2210, %v1413, 0.0
        %v2243 = vsel %vm2211, %v1413, 0.0
        %v2244 = vsel %vm2212, %v1413, 0.0
        %v2245 = vsel %vm2213, %v1413, 0.0
        %v2246 = vsel %vm2214, %v1413, 0.0
        %v2247 = vadd.f32 %v2104, %v2215
        %v2248 = vadd.f32 %v2105, %v2216
        %v2249 = vadd.f32 %v2106, %v2217
        %v2250 = vadd.f32 %v2107, %v2218
        %v2251 = vadd.f32 %v2108, %v2219
        %v2252 = vadd.f32 %v2109, %v2220
        %v2253 = vadd.f32 %v2110, %v2221
        %v2254 = vadd.f32 %v2111, %v2222
        %v2255 = vadd.f32 %v2112, %v2223
        %v2256 = vadd.f32 %v2113, %v2224
        %v2257 = vadd.f32 %v2114, %v2225
        %v2258 = vadd.f32 %v2115, %v2226
        %v2259 = vadd.f32 %v2116, %v2227
        %v2260 = vadd.f32 %v2117, %v2228
        %v2261 = vadd.f32 %v2118, %v2229
        %v2262 = vadd.f32 %v2119, %v2230
        %v2263 = vadd.f32 %v2120, %v2231
        %v2264 = vadd.f32 %v2121, %v2232
        %v2265 = vadd.f32 %v2122, %v2233
        %v2266 = vadd.f32 %v2123, %v2234
        %v2267 = vadd.f32 %v2124, %v2235
        %v2268 = vadd.f32 %v2125, %v2236
        %v2269 = vadd.f32 %v2126, %v2237
        %v2270 = vadd.f32 %v2127, %v2238
        %v2271 = vadd.f32 %v2128, %v2239
        %v2272 = vadd.f32 %v2129, %v2240
        %v2273 = vadd.f32 %v2130, %v2241
        %v2274 = vadd.f32 %v2131, %v2242
        %v2275 = vadd.f32 %v2132, %v2243
        %v2276 = vadd.f32 %v2133, %v2244
        %v2277 = vadd.f32 %v2134, %v2245
        %v2278 = vadd.f32 %v2135, %v2246
        %vm2279 = vmand %vm1993, %vm648
        %vm2280 = vmand %vm2279, %vm649
        %v2281 = vadd.f32 %v2138, %v1176
        %v2282 = vcvt.f32.s32.to.zero.pseudo %v2281
        %v2283 = vlaneseq
        %v2284 = vshrl.u32 %v2283, 7
        %v2285 = vsub.s32 0, %v2284
        %v2286 = vrot.slane %v2282, %v2285
        %vm2287 = vcmp.eq.s32.totalorder %v431, %v2286
        %vm2288 = vcmp.eq.s32.totalorder %v432, %v2286
        %vm2289 = vcmp.eq.s32.totalorder %v433, %v2286
        %vm2290 = vcmp.eq.s32.totalorder %v434, %v2286
        %vm2291 = vcmp.eq.s32.totalorder %v435, %v2286
        %vm2292 = vcmp.eq.s32.totalorder %v436, %v2286
        %vm2293 = vcmp.eq.s32.totalorder %v437, %v2286
        %vm2294 = vcmp.eq.s32.totalorder %v438, %v2286
        %vm2295 = vcmp.eq.s32.totalorder %v439, %v2286
        %vm2296 = vcmp.eq.s32.totalorder %v440, %v2286
        %vm2297 = vcmp.eq.s32.totalorder %v441, %v2286
        %vm2298 = vcmp.eq.s32.totalorder %v442, %v2286
        %vm2299 = vcmp.eq.s32.totalorder %v443, %v2286
        %vm2300 = vcmp.eq.s32.totalorder %v444, %v2286
        %vm2301 = vcmp.eq.s32.totalorder %v445, %v2286
        %vm2302 = vcmp.eq.s32.totalorder %v446, %v2286
        %vm2303 = vcmp.eq.s32.totalorder %v447, %v2286
        %vm2304 = vcmp.eq.s32.totalorder %v448, %v2286
        %vm2305 = vcmp.eq.s32.totalorder %v449, %v2286
        %vm2306 = vcmp.eq.s32.totalorder %v450, %v2286
        %vm2307 = vcmp.eq.s32.totalorder %v451, %v2286
        %vm2308 = vcmp.eq.s32.totalorder %v452, %v2286
        %vm2309 = vcmp.eq.s32.totalorder %v453, %v2286
        %vm2310 = vcmp.eq.s32.totalorder %v454, %v2286
        %vm2311 = vcmp.eq.s32.totalorder %v455, %v2286
        %vm2312 = vcmp.eq.s32.totalorder %v456, %v2286
        %vm2313 = vcmp.eq.s32.totalorder %v457, %v2286
        %vm2314 = vcmp.eq.s32.totalorder %v458, %v2286
        %vm2315 = vcmp.eq.s32.totalorder %v459, %v2286
        %vm2316 = vcmp.eq.s32.totalorder %v460, %v2286
        %vm2317 = vcmp.eq.s32.totalorder %v461, %v2286
        %vm2318 = vcmp.eq.s32.totalorder %v462, %v2286
        %v2319 = vsel %vm2280, 1, 0
        %v2320 = vlaneseq
        %v2321 = vshrl.u32 %v2320, 7
        %v2322 = vsub.s32 0, %v2321
        %v2323 = vrot.slane %v2319, %v2322
        %vm2324 = vcmp.eq.s32.totalorder %v2323, 1
        %vm2325 = vmand %vm2287, %vm2324
        %vm2326 = vmand %vm2288, %vm2324
        %vm2327 = vmand %vm2289, %vm2324
        %vm2328 = vmand %vm2290, %vm2324
        %vm2329 = vmand %vm2291, %vm2324
        %vm2330 = vmand %vm2292, %vm2324
        %vm2331 = vmand %vm2293, %vm2324
        %vm2332 = vmand %vm2294, %vm2324
        %vm2333 = vmand %vm2295, %vm2324
        %vm2334 = vmand %vm2296, %vm2324
        %vm2335 = vmand %vm2297, %vm2324
        %vm2336 = vmand %vm2298, %vm2324
        %vm2337 = vmand %vm2299, %vm2324
        %vm2338 = vmand %vm2300, %vm2324
        %vm2339 = vmand %vm2301, %vm2324
        %vm2340 = vmand %vm2302, %vm2324
        %vm2341 = vmand %vm2303, %vm2324
        %vm2342 = vmand %vm2304, %vm2324
        %vm2343 = vmand %vm2305, %vm2324
        %vm2344 = vmand %vm2306, %vm2324
        %vm2345 = vmand %vm2307, %vm2324
        %vm2346 = vmand %vm2308, %vm2324
        %vm2347 = vmand %vm2309, %vm2324
        %vm2348 = vmand %vm2310, %vm2324
        %vm2349 = vmand %vm2311, %vm2324
        %vm2350 = vmand %vm2312, %vm2324
        %vm2351 = vmand %vm2313, %vm2324
        %vm2352 = vmand %vm2314, %vm2324
        %vm2353 = vmand %vm2315, %vm2324
        %vm2354 = vmand %vm2316, %vm2324
        %vm2355 = vmand %vm2317, %vm2324
        %vm2356 = vmand %vm2318, %vm2324
        %v2357 = vsel %vm2325, %v1708, 0.0
        %v2358 = vsel %vm2326, %v1708, 0.0
        %v2359 = vsel %vm2327, %v1708, 0.0
        %v2360 = vsel %vm2328, %v1708, 0.0
        %v2361 = vsel %vm2329, %v1708, 0.0
        %v2362 = vsel %vm2330, %v1708, 0.0
        %v2363 = vsel %vm2331, %v1708, 0.0
        %v2364 = vsel %vm2332, %v1708, 0.0
        %v2365 = vsel %vm2333, %v1708, 0.0
        %v2366 = vsel %vm2334, %v1708, 0.0
        %v2367 = vsel %vm2335, %v1708, 0.0
        %v2368 = vsel %vm2336, %v1708, 0.0
        %v2369 = vsel %vm2337, %v1708, 0.0
        %v2370 = vsel %vm2338, %v1708, 0.0
        %v2371 = vsel %vm2339, %v1708, 0.0
        %v2372 = vsel %vm2340, %v1708, 0.0
        %v2373 = vsel %vm2341, %v1708, 0.0
        %v2374 = vsel %vm2342, %v1708, 0.0
        %v2375 = vsel %vm2343, %v1708, 0.0
        %v2376 = vsel %vm2344, %v1708, 0.0
        %v2377 = vsel %vm2345, %v1708, 0.0
        %v2378 = vsel %vm2346, %v1708, 0.0
        %v2379 = vsel %vm2347, %v1708, 0.0
        %v2380 = vsel %vm2348, %v1708, 0.0
        %v2381 = vsel %vm2349, %v1708, 0.0
        %v2382 = vsel %vm2350, %v1708, 0.0
        %v2383 = vsel %vm2351, %v1708, 0.0
        %v2384 = vsel %vm2352, %v1708, 0.0
        %v2385 = vsel %vm2353, %v1708, 0.0
        %v2386 = vsel %vm2354, %v1708, 0.0
        %v2387 = vsel %vm2355, %v1708, 0.0
        %v2388 = vsel %vm2356, %v1708, 0.0
        %v2389 = vadd.f32 %v2247, %v2357
        %v2390 = vadd.f32 %v2248, %v2358
        %v2391 = vadd.f32 %v2249, %v2359
        %v2392 = vadd.f32 %v2250, %v2360
        %v2393 = vadd.f32 %v2251, %v2361
        %v2394 = vadd.f32 %v2252, %v2362
        %v2395 = vadd.f32 %v2253, %v2363
        %v2396 = vadd.f32 %v2254, %v2364
        %v2397 = vadd.f32 %v2255, %v2365
        %v2398 = vadd.f32 %v2256, %v2366
        %v2399 = vadd.f32 %v2257, %v2367
        %v2400 = vadd.f32 %v2258, %v2368
        %v2401 = vadd.f32 %v2259, %v2369
        %v2402 = vadd.f32 %v2260, %v2370
        %v2403 = vadd.f32 %v2261, %v2371
        %v2404 = vadd.f32 %v2262, %v2372
        %v2405 = vadd.f32 %v2263, %v2373
        %v2406 = vadd.f32 %v2264, %v2374
        %v2407 = vadd.f32 %v2265, %v2375
        %v2408 = vadd.f32 %v2266, %v2376
        %v2409 = vadd.f32 %v2267, %v2377
        %v2410 = vadd.f32 %v2268, %v2378
        %v2411 = vadd.f32 %v2269, %v2379
        %v2412 = vadd.f32 %v2270, %v2380
        %v2413 = vadd.f32 %v2271, %v2381
        %v2414 = vadd.f32 %v2272, %v2382
        %v2415 = vadd.f32 %v2273, %v2383
        %v2416 = vadd.f32 %v2274, %v2384
        %v2417 = vadd.f32 %v2275, %v2385
        %v2418 = vadd.f32 %v2276, %v2386
        %v2419 = vadd.f32 %v2277, %v2387
        %v2420 = vadd.f32 %v2278, %v2388
        %v2421 = vld [vmem:[#allocation2] sm:$0xff]
        %s2422 = scalar_lea.vmem %s339, 32 [#allocation6]
        %v2423 = vld [vmem:[%s2422] sm:$0xff]
        %v2424 = vld [vmem:[%s2422 + $0x8] sm:$0xff]
        %2425 = vmatprep.subr.mxu0 0.0
        %2426 = vmatpush1.msra.mxu0 %v2389
        %2427 = vmatprep.subr.mxu0 0.0
        %2428 = vmatpush1.msra.mxu0 %v2390
        %2429 = vmatprep.subr.mxu0 0.0
        %2430 = vmatpush1.msra.mxu0 %v2391
        %2431 = vmatprep.subr.mxu0 0.0
        %2432 = vmatpush1.msra.mxu0 %v2392
        %2433 = vmatprep.subr.mxu0 0.0
        %2434 = vmatpush1.msra.mxu0 %v2393
        %2435 = vmatprep.subr.mxu0 0.0
        %2436 = vmatpush1.msra.mxu0 %v2394
        %2437 = vmatprep.subr.mxu0 0.0
        %2438 = vmatpush1.msra.mxu0 %v2395
        %2439 = vmatprep.subr.mxu0 0.0
        %2440 = vmatpush1.msra.mxu0 %v2396
        %2441 = vmatprep.subr.mxu0 0.0
        %2442 = vmatpush1.msra.mxu0 %v2397
        %2443 = vmatprep.subr.mxu0 0.0
        %2444 = vmatpush1.msra.mxu0 %v2398
        %2445 = vmatprep.subr.mxu0 0.0
        %2446 = vmatpush1.msra.mxu0 %v2399
        %2447 = vmatprep.subr.mxu0 0.0
        %2448 = vmatpush1.msra.mxu0 %v2400
        %2449 = vmatprep.subr.mxu0 0.0
        %2450 = vmatpush1.msra.mxu0 %v2401
        %2451 = vmatprep.subr.mxu0 0.0
        %2452 = vmatpush1.msra.mxu0 %v2402
        %2453 = vmatprep.subr.mxu0 0.0
        %2454 = vmatpush1.msra.mxu0 %v2403
        %2455 = vmatprep.subr.mxu0 0.0
        %2456 = vmatpush1.msra.mxu0 %v2404
        %2457 = vmatprep.subr.mxu0 0.0
        %2458 = vmatpush1.msra.mxu0 %v2405
        %2459 = vmatprep.subr.mxu0 0.0
        %2460 = vmatpush1.msra.mxu0 %v2406
        %2461 = vmatprep.subr.mxu0 0.0
        %2462 = vmatpush1.msra.mxu0 %v2407
        %2463 = vmatprep.subr.mxu0 0.0
        %2464 = vmatpush1.msra.mxu0 %v2408
        %2465 = vmatprep.subr.mxu0 0.0
        %2466 = vmatpush1.msra.mxu0 %v2409
        %2467 = vmatprep.subr.mxu0 0.0
        %2468 = vmatpush1.msra.mxu0 %v2410
        %2469 = vmatprep.subr.mxu0 0.0
        %2470 = vmatpush1.msra.mxu0 %v2411
        %2471 = vmatprep.subr.mxu0 0.0
        %2472 = vmatpush1.msra.mxu0 %v2412
        %2473 = vmatprep.subr.mxu0 0.0
        %2474 = vmatpush1.msra.mxu0 %v2413
        %2475 = vmatprep.subr.mxu0 0.0
        %2476 = vmatpush1.msra.mxu0 %v2414
        %2477 = vmatprep.subr.mxu0 0.0
        %2478 = vmatpush1.msra.mxu0 %v2415
        %2479 = vmatprep.subr.mxu0 0.0
        %2480 = vmatpush1.msra.mxu0 %v2416
        %2481 = vmatprep.subr.mxu0 0.0
        %2482 = vmatpush1.msra.mxu0 %v2417
        %2483 = vmatprep.subr.mxu0 0.0
        %2484 = vmatpush1.msra.mxu0 %v2418
        %2485 = vmatprep.subr.mxu0 0.0
        %2486 = vmatpush1.msra.mxu0 %v2419
        %2487 = vmatprep.subr.mxu0 0.0
        %2488 = vmatpush1.msra.mxu0 %v2420
        %2489 = vmatprep.mubr.f32.mxu0 %v2424
        %2490 = vmatmul.mubr.f32.gmra.mrb[0].mxu0 %v2423
        %v2491 = vpop.f32.mrb[0].mxu0
        %v2492 = vadd.f32 0.0, %v2491
        %v2493 = vpop.f32.mrb[0].mxu0
        %2494 = vdwg.mxu0
        %v2495 = vadd.f32 %v2421, %v2492
        %2496 = vst [vmem:[#allocation2] sm:$0xff] %v2495
        // Predicated region
        $region73: #{importance_renderer_forward.6} parent=43 // pred_check
          %p2497 = pneg %p390
        $region74: #{importance_renderer_forward.6} parent=43 // pred_check_branch
          %2499 = sbr.rel (%p2497) target = $region76
        $region75: #{importance_renderer_forward.6} parent=43 // pred_region
          %v2500 = vld [vmem:[#allocation2] sm:$0xff]
          %v2501 = vmul.f32 %v2500, 0.33333334
          %v2502 = vld [vmem:[#allocation8] sm:$0xff]
          %v2503 = vld [vmem:[#allocation8 + $0x8] sm:$0xff]
          %v2504 = vld [vmem:[#allocation8 + $0x10] sm:$0xff]
          %v2505 = vld [vmem:[#allocation8 + $0x18] sm:$0xff]
          %v2506 = vld [vmem:[#allocation9] sm:$0xff]
          %v2507 = vld [vmem:[#allocation9 + $0x8] sm:$0xff]
          %v2508 = vld [vmem:[#allocation9 + $0x10] sm:$0xff]
          %v2509 = vld [vmem:[#allocation9 + $0x18] sm:$0xff]
          %2511 = vset.pattern.permute.xlu0 0
          %2512 = vperm.xlu0 %2511, %v2506
          %v2513 = vpop.permute.xlu0 %2512
          %2516 = vset.pattern.permute.xlu0 0
          %2517 = vperm.xlu0 %2516, %v2507
          %v2518 = vpop.permute.xlu0 %2517
          %2521 = vset.pattern.permute.xlu0 0
          %2522 = vperm.xlu0 %2521, %v2508
          %v2523 = vpop.permute.xlu0 %2522
          %2526 = vset.pattern.permute.xlu0 0
          %2527 = vperm.xlu0 %2526, %v2509
          %v2528 = vpop.permute.xlu0 %2527
          %vm2530 = vcmask 64512
          %v2532 = vsel %vm2530, %v2502, 0
          %v2535 = vsel %vm2530, %v2503, 0
          %v2538 = vsel %vm2530, %v2504, 0
          %v2541 = vsel %vm2530, %v2505, 0
          %2543 = vmatprep.subr.mxu0 0.0
          %2544 = vmatpush1.msra.mxu0 %v2501
          %2545 = vmatprep.subr.mxu0 0.0
          %2546 = vmatpush1.msra.mxu0 0.0
          %2547 = vmatprep.subr.mxu0 0.0
          %2548 = vmatpush1.msra.mxu0 0.0
          %2549 = vmatprep.subr.mxu0 0.0
          %2550 = vmatpush1.msra.mxu0 0.0
          %2551 = vmatprep.subr.mxu0 0.0
          %2552 = vmatpush1.msra.mxu0 0.0
          %2553 = vmatprep.subr.mxu0 0.0
          %2554 = vmatpush1.msra.mxu0 0.0
          %2555 = vmatprep.subr.mxu0 0.0
          %2556 = vmatpush1.msra.mxu0 0.0
          %2557 = vmatprep.subr.mxu0 0.0
          %2558 = vmatpush1.msra.mxu0 0.0
          %2559 = vmatprep.subr.mxu0 0.0
          %2560 = vmatpush1.msra.mxu0 0.0
          %2561 = vmatprep.subr.mxu0 0.0
          %2562 = vmatpush1.msra.mxu0 0.0
          %2563 = vmatprep.subr.mxu0 0.0
          %2564 = vmatpush1.msra.mxu0 0.0
          %2565 = vmatprep.subr.mxu0 0.0
          %2566 = vmatpush1.msra.mxu0 0.0
          %2567 = vmatprep.subr.mxu0 0.0
          %2568 = vmatpush1.msra.mxu0 0.0
          %2569 = vmatprep.subr.mxu0 0.0
          %2570 = vmatpush1.msra.mxu0 0.0
          %2571 = vmatprep.subr.mxu0 0.0
          %2572 = vmatpush1.msra.mxu0 0.0
          %2573 = vmatprep.subr.mxu0 0.0
          %2574 = vmatpush1.msra.mxu0 0.0
          %2575 = vmatprep.subr.mxu0 0.0
          %2576 = vmatpush1.msra.mxu0 0.0
          %2577 = vmatprep.subr.mxu0 0.0
          %2578 = vmatpush1.msra.mxu0 0.0
          %2579 = vmatprep.subr.mxu0 0.0
          %2580 = vmatpush1.msra.mxu0 0.0
          %2581 = vmatprep.subr.mxu0 0.0
          %2582 = vmatpush1.msra.mxu0 0.0
          %2583 = vmatprep.subr.mxu0 0.0
          %2584 = vmatpush1.msra.mxu0 0.0
          %2585 = vmatprep.subr.mxu0 0.0
          %2586 = vmatpush1.msra.mxu0 0.0
          %2587 = vmatprep.subr.mxu0 0.0
          %2588 = vmatpush1.msra.mxu0 0.0
          %2589 = vmatprep.subr.mxu0 0.0
          %2590 = vmatpush1.msra.mxu0 0.0
          %2591 = vmatprep.subr.mxu0 0.0
          %2592 = vmatpush1.msra.mxu0 0.0
          %2593 = vmatprep.subr.mxu0 0.0
          %2594 = vmatpush1.msra.mxu0 0.0
          %2595 = vmatprep.subr.mxu0 0.0
          %2596 = vmatpush1.msra.mxu0 0.0
          %2597 = vmatprep.subr.mxu0 0.0
          %2598 = vmatpush1.msra.mxu0 0.0
          %2599 = vmatprep.subr.mxu0 0.0
          %2600 = vmatpush1.msra.mxu0 0.0
          %2601 = vmatprep.subr.mxu0 0.0
          %2602 = vmatpush1.msra.mxu0 0.0
          %2603 = vmatprep.subr.mxu0 0.0
          %2604 = vmatpush1.msra.mxu0 0.0
          %2605 = vmatprep.subr.mxu0 0.0
          %2606 = vmatpush1.msra.mxu0 0.0
          %2607 = vmatprep.mubr.f32.mxu0 0.0
          %2608 = vmatmul.mubr.f32.gmra.mrb[0].mxu0 %v2532
          %v2609 = vpop.f32.mrb[0].mxu0
          %v2610 = vadd.f32 %v2513, %v2609
          %v2611 = vpop.f32.mrb[0].mxu0
          %2612 = vmatprep.mubr.f32.mxu0 0.0
          %2613 = vmatmul.mubr.f32.gmra.mrb[0].mxu0 %v2535
          %v2614 = vpop.f32.mrb[0].mxu0
          %v2615 = vadd.f32 %v2518, %v2614
          %v2616 = vpop.f32.mrb[0].mxu0
          %2617 = vmatprep.mubr.f32.mxu0 0.0
          %2618 = vmatmul.mubr.f32.gmra.mrb[0].mxu0 %v2538
          %v2619 = vpop.f32.mrb[0].mxu0
          %v2620 = vadd.f32 %v2523, %v2619
          %v2621 = vpop.f32.mrb[0].mxu0
          %2622 = vmatprep.mubr.f32.mxu0 0.0
          %2623 = vmatmul.mubr.f32.gmra.mrb[0].mxu0 %v2541
          %v2624 = vpop.f32.mrb[0].mxu0
          %v2625 = vadd.f32 %v2528, %v2624
          %v2626 = vpop.f32.mrb[0].mxu0
          %2627 = vdwg.mxu0
          %vm2628 = vcmp.gt.f32.partialorder %v2610, 20.0
          %vm2629 = vcmp.gt.f32.partialorder %v2615, 20.0
          %vm2630 = vcmp.gt.f32.partialorder %v2620, 20.0
          %vm2631 = vcmp.gt.f32.partialorder %v2625, 20.0
          %v2632 = vmin.f32 %v2610, 20.0
          %v2633 = vmin.f32 %v2615, 20.0
          %v2634 = vmin.f32 %v2620, 20.0
          %v2635 = vmin.f32 %v2625, 20.0
          %v2636 = vmul.f32 %v2632, 1.442695
          %v2637 = vpow.pop %v2636
          %v2638 = vmul.f32 %v2633, 1.442695
          %v2639 = vpow.pop %v2638
          %v2640 = vmul.f32 %v2634, 1.442695
          %v2641 = vpow.pop %v2640
          %v2642 = vmul.f32 %v2635, 1.442695
          %v2643 = vpow.pop %v2642
          %v2644 = vadd.f32 %v2637, 1.0
          %v2645 = vadd.f32 %v2639, 1.0
          %v2646 = vadd.f32 %v2641, 1.0
          %v2647 = vadd.f32 %v2643, 1.0
          %v2648 = vlog2.pop %v2644
          %v2649 = vmul.f32 %v2648, 0.6931472
          %v2650 = vlog2.pop %v2645
          %v2651 = vmul.f32 %v2650, 0.6931472
          %v2652 = vlog2.pop %v2646
          %v2653 = vmul.f32 %v2652, 0.6931472
          %v2654 = vlog2.pop %v2647
          %v2655 = vmul.f32 %v2654, 0.6931472
          %v2656 = vsel %vm2628, %v2610, %v2649
          %v2657 = vsel %vm2629, %v2615, %v2651
          %v2658 = vsel %vm2630, %v2620, %v2653
          %v2659 = vsel %vm2631, %v2625, %v2655
          %v2660 = vld [vmem:[#allocation11] sm:$0xf]
          %v2661 = vld [vmem:[#allocation12] sm:$0xf]
          %2663 = vset.pattern.permute.xlu0 0
          %2664 = vperm.xlu0 %2663, %v2661
          %v2665 = vpop.permute.xlu0 %2664
          %vm2667 = vcmask 261120
          %v2669 = vsel %vm2667, %v2660, 0
          %2671 = vmatprep.subr.mxu0 0.0
          %2672 = vmatpush1.msra.mxu0 %v2656
          %2673 = vmatprep.subr.mxu0 0.0
          %2674 = vmatpush1.msra.mxu0 %v2657
          %2675 = vmatprep.subr.mxu0 0.0
          %2676 = vmatpush1.msra.mxu0 %v2658
          %2677 = vmatprep.subr.mxu0 0.0
          %2678 = vmatpush1.msra.mxu0 %v2659
          %2679 = vmatprep.subr.mxu0 0.0
          %2680 = vmatpush1.msra.mxu0 0.0
          %2681 = vmatprep.subr.mxu0 0.0
          %2682 = vmatpush1.msra.mxu0 0.0
          %2683 = vmatprep.subr.mxu0 0.0
          %2684 = vmatpush1.msra.mxu0 0.0
          %2685 = vmatprep.subr.mxu0 0.0
          %2686 = vmatpush1.msra.mxu0 0.0
          %2687 = vmatprep.subr.mxu0 0.0
          %2688 = vmatpush1.msra.mxu0 0.0
          %2689 = vmatprep.subr.mxu0 0.0
          %2690 = vmatpush1.msra.mxu0 0.0
          %2691 = vmatprep.subr.mxu0 0.0
          %2692 = vmatpush1.msra.mxu0 0.0
          %2693 = vmatprep.subr.mxu0 0.0
          %2694 = vmatpush1.msra.mxu0 0.0
          %2695 = vmatprep.subr.mxu0 0.0
          %2696 = vmatpush1.msra.mxu0 0.0
          %2697 = vmatprep.subr.mxu0 0.0
          %2698 = vmatpush1.msra.mxu0 0.0
          %2699 = vmatprep.subr.mxu0 0.0
          %2700 = vmatpush1.msra.mxu0 0.0
          %2701 = vmatprep.subr.mxu0 0.0
          %2702 = vmatpush1.msra.mxu0 0.0
          %2703 = vmatprep.subr.mxu0 0.0
          %2704 = vmatpush1.msra.mxu0 0.0
          %2705 = vmatprep.subr.mxu0 0.0
          %2706 = vmatpush1.msra.mxu0 0.0
          %2707 = vmatprep.subr.mxu0 0.0
          %2708 = vmatpush1.msra.mxu0 0.0
          %2709 = vmatprep.subr.mxu0 0.0
          %2710 = vmatpush1.msra.mxu0 0.0
          %2711 = vmatprep.subr.mxu0 0.0
          %2712 = vmatpush1.msra.mxu0 0.0
          %2713 = vmatprep.subr.mxu0 0.0
          %2714 = vmatpush1.msra.mxu0 0.0
          %2715 = vmatprep.subr.mxu0 0.0
          %2716 = vmatpush1.msra.mxu0 0.0
          %2717 = vmatprep.subr.mxu0 0.0
          %2718 = vmatpush1.msra.mxu0 0.0
          %2719 = vmatprep.subr.mxu0 0.0
          %2720 = vmatpush1.msra.mxu0 0.0
          %2721 = vmatprep.subr.mxu0 0.0
          %2722 = vmatpush1.msra.mxu0 0.0
          %2723 = vmatprep.subr.mxu0 0.0
          %2724 = vmatpush1.msra.mxu0 0.0
          %2725 = vmatprep.subr.mxu0 0.0
          %2726 = vmatpush1.msra.mxu0 0.0
          %2727 = vmatprep.subr.mxu0 0.0
          %2728 = vmatpush1.msra.mxu0 0.0
          %2729 = vmatprep.subr.mxu0 0.0
          %2730 = vmatpush1.msra.mxu0 0.0
          %2731 = vmatprep.subr.mxu0 0.0
          %2732 = vmatpush1.msra.mxu0 0.0
          %2733 = vmatprep.subr.mxu0 0.0
          %2734 = vmatpush1.msra.mxu0 0.0
          %2735 = vmatprep.mubr.f32.mxu0 0.0
          %2736 = vmatmul.mubr.f32.gmra.mrb[0].mxu0 %v2669
          %v2737 = vpop.f32.mrb[0].mxu0
          %v2738 = vadd.f32 %v2665, %v2737
          %v2739 = vpop.f32.mrb[0].mxu0
          %2740 = vdwg.mxu0
          %v2741 = vsub.f32 0.0, %v2738
          %v2742 = vmul.f32 %v2741, 1.442695
          %v2743 = vpow.pop %v2742
          %v2744 = vadd.f32 %v2743, 1.0
          %v2745 = vrcp.pop %v2744
          %v2746 = vmul.f32 %v2745, 1.002
          %v2747 = vsub.f32 %v2746, 0.001
          %vm2748 = vcmask 1040384
          %v2749 = vsel %vm2748, %v2738, %v2747
          %2750 = vst [vmem:[%s388] sm:$0xf] %v2749
        $region76: #{importance_renderer_forward.6} parent=43 // pred_fallthru
          _
        %s2751 = sand.u32 %s197, 1
        %s2752 = scalar_lea.sflag [#allocation5], %s2751
        %s2753 = sand.u32 %s197, 1
        %s2754 = smul.addr %s2753, 4
        %s2755 = scalar_lea.vmem [#allocation14], %s2754
        // Predicated region
        $region77: #{importance_renderer_forward.6} parent=43 // pred_check
          %p2756 = pneg %p207
        $region78: #{importance_renderer_forward.6} parent=43 // pred_check_branch
          %2758 = sbr.rel (%p2756) target = $region80
        $region79: #{importance_renderer_forward.6} parent=43 // pred_region
          %s2760 = ssub.s32 64, 64
          %2761 = vsyncadd %s2752, %s2760
          %s2762 = sadd.s32 %s34, %s33
          %s2763 = smul.addr %s2762, 64
          %s2764 = scalar_lea.hbm %s6, %s2763
          %s2766 = sshll.u32 %s2755, 4
          %s2767 = int_to_ptr.vmem [resolvable:$true] %s2766
          %2769 = dma.vmem_to_hbm [thread:$0]  %s2767, 64, %s2764, %s2752
        $region80: #{importance_renderer_forward.6} parent=43 // pred_fallthru
          _
      $region44: #{importance_renderer_forward.6} parent=5 // pred_fallthru
        _
      %p2770 = scmp.le.s32.totalorder 2, %s23
      // Predicated region
      $region81: #{importance_renderer_forward.6} parent=5 // pred_check
        %p2771 = pneg %p2770
      $region82: #{importance_renderer_forward.6} parent=5 // pred_check_branch
        %2773 = sbr.rel (%p2771) target = $region84
      $region83: #{importance_renderer_forward.6} parent=5 // pred_region
        %s2774 = ssub.s32 %s23, 2
        // Predicated region
        $region85: #{importance_renderer_forward.6} parent=83 // pred_check
          %p2775 = pneg %p213
        $region86: #{importance_renderer_forward.6} parent=83 // pred_check_branch
          %2777 = sbr.rel (%p2775) target = $region88
        $region87: #{importance_renderer_forward.6} parent=83 // pred_region
          %s2778 = sand.u32 %s198, 1
          %s2779 = scalar_lea.sflag [#allocation5], %s2778
          %s2780 = sand.u32 %s198, 1
          %s2781 = smul.addr %s2780, 4
          %s2782 = scalar_lea.vmem [#allocation14], %s2781
          %2783 = dma.done %s2779, 64
        $region88: #{importance_renderer_forward.6} parent=83 // pred_fallthru
          _
      $region84: #{importance_renderer_forward.6} parent=5 // pred_fallthru
        _
    $region6: #{importance_renderer_forward.6} parent=1 // loop_footer
      %s27 = sadd.s32 1, %s23
    $region7: #{importance_renderer_forward.6} parent=1 // loop_footer_branch
      %22 = sbr.rel target = $region3
    $region8: #{importance_renderer_forward.6} parent=1 // loop_exit
      _
    %2784 = vsyncpa [#allocation4], 1
    %s2785 = scalar_lea.sflag [#allocation4], 1
    %2786 = vsyncpa %s2785, 1
    %2787 = vsyncpa [#allocation7], 1
    %s2788 = scalar_lea.sflag [#allocation7], 1
    %2789 = vsyncpa %s2788, 1
    %2790 = vsyncpa [#allocation10], 1
    %2791 = vsyncpa [#allocation13], 1
    %2792 = vsyncpa [#allocation5], 1
    %s2793 = scalar_lea.sflag [#allocation5], 1
    %2794 = vsyncpa %s2793, 1

// kernel: importance_renderer_forward.9
$region0: #{importance_renderer_forward.9}
  #allocation0 [shape = 'u32[]', space=smem, size = 0x4, offset = 0x4, fixed_abs, tag = 'smem constant byte address 0x4 - core index']
  #allocation1 [shape = 'u32[144,128]{1,0:T(1,128)}', space=vmem, size = 0x12000, scoped, tag = 'internal scratch']
  %s0 = inlined_call_operand.hbm [shape: f32[2,3,16,16], index: 0, kind: input, shape index: {}]
  %s1 = inlined_call_operand.hbm [shape: f32[2,16,16], index: 1, kind: input, shape index: {}]
  %s2 = inlined_call_operand.hbm [shape: f32[2,16,16], index: 2, kind: input, shape index: {}]
  %s3 = inlined_call_operand.hbm [shape: f32[2], index: 3, kind: input, shape index: {}]
  %s4 = inlined_call_operand.hbm [shape: f32[2,3,16], index: 4, kind: output, shape index: {0}]
  %s5 = inlined_call_operand.hbm [shape: f32[2,1,16], index: 5, kind: output, shape index: {1}]
  %s6 = inlined_call_operand.hbm [shape: f32[2,15,16], index: 6, kind: output, shape index: {2}]
  %7 = xla_tuple %s4, %s5, %s6
  %s8 = sld [smem:[#allocation0]]
  $region81: #{importance_renderer_forward.9} parent=0
    _
  %s10 = ssub.s32 1, %s8
  %s11 = scalar_select 0, %s10, %s8
  $region1: #{importance_renderer_forward.9} parent=0
    #allocation2 [shape = 'u8[49152]{0}', space=vmem, size = 0xc000, scoped, tag = 'input window, operand 0']
    #allocation3 [shape = 's32[2]{0}', space=sflag, size = 0x8, scoped, tag = 'scoped memory for importance_renderer_forward.9']
    #allocation4 [shape = 's32[2]{0}', space=sflag, size = 0x8, scoped, tag = 'scoped memory for importance_renderer_forward.9']
    #allocation5 [shape = 's32[2]{0}', space=sflag, size = 0x8, scoped, tag = 'scoped memory for importance_renderer_forward.9']
    #allocation6 [shape = 'u8[16384]{0}', space=vmem, size = 0x4000, scoped, tag = 'input window, operand 1']
    #allocation7 [shape = 's32[2]{0}', space=sflag, size = 0x8, scoped, tag = 'scoped memory for importance_renderer_forward.9']
    #allocation8 [shape = 'u8[16384]{0}', space=vmem, size = 0x4000, scoped, tag = 'input window, operand 2']
    #allocation9 [shape = 'u8[512]{0}', space=smem, size = 0x200, scoped, tag = 'input window, operand 3, single buffered']
    #allocation10 [shape = 'u8[4096]{0}', space=vmem, size = 0x1000, scoped, tag = 'output window, operand 0']
    #allocation11 [shape = 'u8[1024]{0}', space=vmem, size = 0x400, scoped, tag = 'output window, operand 1']
    #allocation12 [shape = 's32[2]{0}', space=sflag, size = 0x8, scoped, tag = 'scoped memory for importance_renderer_forward.9']
    #allocation13 [shape = 'u8[16384]{0}', space=vmem, size = 0x4000, scoped, tag = 'output window, operand 2']
    %12 = vsyncpa [#allocation3], 0
    %s13 = scalar_lea.sflag [#allocation3], 1
    %14 = vsyncpa %s13, 0
    %15 = vsyncpa [#allocation7], 0
    %s16 = scalar_lea.sflag [#allocation7], 1
    %17 = vsyncpa %s16, 0
    %18 = vsyncpa [#allocation5], 0
    %19 = vsyncpa [#allocation4], 0
    %s20 = scalar_lea.sflag [#allocation4], 1
    %21 = vsyncpa %s20, 0
    %22 = vsyncpa [#allocation12], 0
    %s23 = scalar_lea.sflag [#allocation12], 1
    %24 = vsyncpa %s23, 0
    loop: start=0, step=1, limit=4
    $region2: #{importance_renderer_forward.9} parent=1 // loop_pre_header
      _
    $region3: #{importance_renderer_forward.9} parent=1 // loop_header
      %s26 = sphi 0, %s30
      %p27 = scmp.ge.s32.totalorder %s26, 4
      %s33 = sphi 0, %s45
      %s34 = sphi 0, %s41
      %s35 = sphi 0, %s33
      %s36 = sphi 0, %s34
      %s37 = sphi 0, %s35
      %s38 = sphi 0, %s36
      %s50 = sphi 0, %s52
      %s53 = sphi 0, %s50
      %s54 = sphi 0, %s53
      %s70 = sphi 0, %s54
      %s78 = sphi 0, %s80
      %s81 = sphi 0, %s78
      %s82 = sphi 0, %s81
      %s98 = sphi 0, %s82
      %s106 = sphi 0, %s108
      %s109 = sphi 0, %s106
      %s110 = sphi 0, %s109
      %s126 = sphi 0, %s110
      %s130 = sphi 0, %s130
      %s132 = sphi 0, %s130
      %s133 = sphi 0, %s132
      %s147 = sphi 0, %s133
      %s155 = sphi 0, %s157
      %s158 = sphi 0, %s155
      %s159 = sphi 0, %s158
      %s175 = sphi 0, %s159
      %s183 = sphi 0, %s185
      %s186 = sphi 0, %s183
      %s187 = sphi 0, %s186
      %s203 = sphi 0, %s187
      %s211 = sphi 0, %s213
      %s214 = sphi 0, %s211
      %s215 = sphi 0, %s214
      %s231 = sphi 0, %s215
    $region4: #{importance_renderer_forward.9} parent=1 // loop_header_branch
      %29 = sbr.rel (%p27) target = $region8
    $region5: #{importance_renderer_forward.9} parent=1 // loop_body
      %s31 = ssub.s32 %s26, 1
      %s32 = ssub.s32 %s26, 2
      %s39 = sadd.s32 1, %s34
      %p40 = scmp.ge.s32.totalorder %s39, 1
      %s41 = scalar_select %p40, 0, %s39
      %s42 = sadd.s32 1, %s33
      %s43 = scalar_select %p40, %s42, %s33
      %p44 = scmp.ge.s32.totalorder %s43, 2
      %s45 = scalar_select %p44, 0, %s43
      %s46 = ssub.s32 %s33, %s45
      %s47 = ssub.s32 %s34, %s41
      %s48 = sor.u32 %s46, %s47
      %p49 = scmp.eq.s32.totalorder %s48, 0
      %s51 = sadd.s32 %s50, 1
      %s52 = scalar_select %p49, %s50, %s51
      %p55 = pneg %p49
      %p56 = scmp.eq.s32.totalorder %s26, 1
      %p57 = por %p55, %p56
      %p58 = scmp.ne.s32.totalorder %s50, %s53
      %p59 = scmp.eq.s32.totalorder %s26, 0
      %p60 = por %p58, %p59
      %p61 = scmp.ne.s32.totalorder %s50, %s53
      %p62 = scmp.eq.s32.totalorder %s31, 1
      %p63 = por %p61, %p62
      %p64 = scmp.ne.s32.totalorder %s53, %s54
      %p65 = scmp.eq.s32.totalorder %s31, 0
      %p66 = por %p64, %p65
      %p67 = scmp.ne.s32.totalorder %s53, %s54
      %p68 = scmp.eq.s32.totalorder %s32, 1
      %p69 = por %p67, %p68
      %p71 = scmp.ne.s32.totalorder %s54, %s70
      %p72 = scmp.eq.s32.totalorder %s32, 0
      %p73 = por %p71, %p72
      %s74 = ssub.s32 %s33, %s45
      %s75 = ssub.s32 %s34, %s41
      %s76 = sor.u32 %s74, %s75
      %p77 = scmp.eq.s32.totalorder %s76, 0
      %s79 = sadd.s32 %s78, 1
      %s80 = scalar_select %p77, %s78, %s79
      %p83 = pneg %p77
      %p84 = scmp.eq.s32.totalorder %s26, 1
      %p85 = por %p83, %p84
      %p86 = scmp.ne.s32.totalorder %s78, %s81
      %p87 = scmp.eq.s32.totalorder %s26, 0
      %p88 = por %p86, %p87
      %p89 = scmp.ne.s32.totalorder %s78, %s81
      %p90 = scmp.eq.s32.totalorder %s31, 1
      %p91 = por %p89, %p90
      %p92 = scmp.ne.s32.totalorder %s81, %s82
      %p93 = scmp.eq.s32.totalorder %s31, 0
      %p94 = por %p92, %p93
      %p95 = scmp.ne.s32.totalorder %s81, %s82
      %p96 = scmp.eq.s32.totalorder %s32, 1
      %p97 = por %p95, %p96
      %p99 = scmp.ne.s32.totalorder %s82, %s98
      %p100 = scmp.eq.s32.totalorder %s32, 0
      %p101 = por %p99, %p100
      %s102 = ssub.s32 %s33, %s45
      %s103 = ssub.s32 %s34, %s41
      %s104 = sor.u32 %s102, %s103
      %p105 = scmp.eq.s32.totalorder %s104, 0
      %s107 = sadd.s32 %s106, 1
      %s108 = scalar_select %p105, %s106, %s107
      %p111 = pneg %p105
      %p112 = scmp.eq.s32.totalorder %s26, 1
      %p113 = por %p111, %p112
      %p114 = scmp.ne.s32.totalorder %s106, %s109
      %p115 = scmp.eq.s32.totalorder %s26, 0
      %p116 = por %p114, %p115
      %p117 = scmp.ne.s32.totalorder %s106, %s109
      %p118 = scmp.eq.s32.totalorder %s31, 1
      %p119 = por %p117, %p118
      %p120 = scmp.ne.s32.totalorder %s109, %s110
      %p121 = scmp.eq.s32.totalorder %s31, 0
      %p122 = por %p120, %p121
      %p123 = scmp.ne.s32.totalorder %s109, %s110
      %p124 = scmp.eq.s32.totalorder %s32, 1
      %p125 = por %p123, %p124
      %p127 = scmp.ne.s32.totalorder %s110, %s126
      %p128 = scmp.eq.s32.totalorder %s32, 0
      %p129 = por %p127, %p128
      %s131 = sadd.s32 %s130, 1
      %p134 = scmp.eq.s32.totalorder %s26, 1
      %p135 = scmp.ne.s32.totalorder %s130, %s132
      %p136 = scmp.eq.s32.totalorder %s26, 0
      %p137 = por %p135, %p136
      %p138 = scmp.ne.s32.totalorder %s130, %s132
      %p139 = scmp.eq.s32.totalorder %s31, 1
      %p140 = por %p138, %p139
      %p141 = scmp.ne.s32.totalorder %s132, %s133
      %p142 = scmp.eq.s32.totalorder %s31, 0
      %p143 = por %p141, %p142
      %p144 = scmp.ne.s32.totalorder %s132, %s133
      %p145 = scmp.eq.s32.totalorder %s32, 1
      %p146 = por %p144, %p145
      %p148 = scmp.ne.s32.totalorder %s133, %s147
      %p149 = scmp.eq.s32.totalorder %s32, 0
      %p150 = por %p148, %p149
      %s151 = ssub.s32 %s33, %s45
      %s152 = ssub.s32 %s34, %s41
      %s153 = sor.u32 %s151, %s152
      %p154 = scmp.eq.s32.totalorder %s153, 0
      %s156 = sadd.s32 %s155, 1
      %s157 = scalar_select %p154, %s155, %s156
      %p160 = pneg %p154
      %p161 = scmp.eq.s32.totalorder %s26, 1
      %p162 = por %p160, %p161
      %p163 = scmp.ne.s32.totalorder %s155, %s158
      %p164 = scmp.eq.s32.totalorder %s26, 0
      %p165 = por %p163, %p164
      %p166 = scmp.ne.s32.totalorder %s155, %s158
      %p167 = scmp.eq.s32.totalorder %s31, 1
      %p168 = por %p166, %p167
      %p169 = scmp.ne.s32.totalorder %s158, %s159
      %p170 = scmp.eq.s32.totalorder %s31, 0
      %p171 = por %p169, %p170
      %p172 = scmp.ne.s32.totalorder %s158, %s159
      %p173 = scmp.eq.s32.totalorder %s32, 1
      %p174 = por %p172, %p173
      %p176 = scmp.ne.s32.totalorder %s159, %s175
      %p177 = scmp.eq.s32.totalorder %s32, 0
      %p178 = por %p176, %p177
      %s179 = ssub.s32 %s33, %s45
      %s180 = ssub.s32 %s34, %s41
      %s181 = sor.u32 %s179, %s180
      %p182 = scmp.eq.s32.totalorder %s181, 0
      %s184 = sadd.s32 %s183, 1
      %s185 = scalar_select %p182, %s183, %s184
      %p188 = pneg %p182
      %p189 = scmp.eq.s32.totalorder %s26, 1
      %p190 = por %p188, %p189
      %p191 = scmp.ne.s32.totalorder %s183, %s186
      %p192 = scmp.eq.s32.totalorder %s26, 0
      %p193 = por %p191, %p192
      %p194 = scmp.ne.s32.totalorder %s183, %s186
      %p195 = scmp.eq.s32.totalorder %s31, 1
      %p196 = por %p194, %p195
      %p197 = scmp.ne.s32.totalorder %s186, %s187
      %p198 = scmp.eq.s32.totalorder %s31, 0
      %p199 = por %p197, %p198
      %p200 = scmp.ne.s32.totalorder %s186, %s187
      %p201 = scmp.eq.s32.totalorder %s32, 1
      %p202 = por %p200, %p201
      %p204 = scmp.ne.s32.totalorder %s187, %s203
      %p205 = scmp.eq.s32.totalorder %s32, 0
      %p206 = por %p204, %p205
      %s207 = ssub.s32 %s33, %s45
      %s208 = ssub.s32 %s34, %s41
      %s209 = sor.u32 %s207, %s208
      %p210 = scmp.eq.s32.totalorder %s209, 0
      %s212 = sadd.s32 %s211, 1
      %s213 = scalar_select %p210, %s211, %s212
      %p216 = pneg %p210
      %p217 = scmp.eq.s32.totalorder %s26, 1
      %p218 = por %p216, %p217
      %p219 = scmp.ne.s32.totalorder %s211, %s214
      %p220 = scmp.eq.s32.totalorder %s26, 0
      %p221 = por %p219, %p220
      %p222 = scmp.ne.s32.totalorder %s211, %s214
      %p223 = scmp.eq.s32.totalorder %s31, 1
      %p224 = por %p222, %p223
      %p225 = scmp.ne.s32.totalorder %s214, %s215
      %p226 = scmp.eq.s32.totalorder %s31, 0
      %p227 = por %p225, %p226
      %p228 = scmp.ne.s32.totalorder %s214, %s215
      %p229 = scmp.eq.s32.totalorder %s32, 1
      %p230 = por %p228, %p229
      %p232 = scmp.ne.s32.totalorder %s215, %s231
      %p233 = scmp.eq.s32.totalorder %s32, 0
      %p234 = por %p232, %p233
      %p235 = scmp.le.s32.totalorder 1, %s26
      %p236 = scmp.lt.s32.totalorder %s26, 3
      %p237 = pnand %p235, %p236
      %p238 = pneg %p237
      // Predicated region
      $region9: #{importance_renderer_forward.9} parent=5 // pred_check
        _
      $region10: #{importance_renderer_forward.9} parent=5 // pred_check_branch
        %240 = sbr.rel (%p237) target = $region12
      $region11: #{importance_renderer_forward.9} parent=5 // pred_region
        %s241 = ssub.s32 %s26, 1
        // Predicated region
        $region13: #{importance_renderer_forward.9} parent=11 // pred_check
          %p242 = pneg %p143
        $region14: #{importance_renderer_forward.9} parent=11 // pred_check_branch
          %244 = sbr.rel (%p242) target = $region16
        $region15: #{importance_renderer_forward.9} parent=11 // pred_region
          %s246 = ssub.s32 16, 16
          %247 = vsyncadd [#allocation5], %s246
          %250 = dma.hbm_to_smem %s3, 16, [#allocation9], [#allocation5]
        $region16: #{importance_renderer_forward.9} parent=11 // pred_fallthru
          _
      $region12: #{importance_renderer_forward.9} parent=5 // pred_fallthru
        _
      %p251 = scmp.lt.s32.totalorder %s26, 2
      // Predicated region
      $region17: #{importance_renderer_forward.9} parent=5 // pred_check
        %p252 = pneg %p251
      $region18: #{importance_renderer_forward.9} parent=5 // pred_check_branch
        %254 = sbr.rel (%p252) target = $region20
      $region19: #{importance_renderer_forward.9} parent=5 // pred_region
        // Predicated region
        $region21: #{importance_renderer_forward.9} parent=19 // pred_check
          %p255 = pneg %p60
        $region22: #{importance_renderer_forward.9} parent=19 // pred_check_branch
          %257 = sbr.rel (%p255) target = $region24
        $region23: #{importance_renderer_forward.9} parent=19 // pred_region
          %s258 = sand.u32 %s50, 1
          %s259 = scalar_lea.sflag [#allocation3], %s258
          %s260 = sand.u32 %s50, 1
          %s261 = smul.addr %s260, 48
          %s262 = scalar_lea.vmem [#allocation2], %s261
          %s264 = ssub.s32 768, 768
          %265 = vsyncadd %s259, %s264
          %s266 = smul.addr %s33, 6
          %s267 = sadd.s32 %s34, %s266
          %s268 = smul.addr %s267, 128
          %s269 = scalar_lea.hbm %s0, %s268
          %s270 = sshll.u32 %s262, 4
          %s271 = int_to_ptr.vmem [resolvable:$true] %s270
          %276 = dma.hbm_to_vmem [thread:$0]  %s269, 768, %s271, %s259, 128, 128, 8
        $region24: #{importance_renderer_forward.9} parent=19 // pred_fallthru
          _
        // Predicated region
        $region25: #{importance_renderer_forward.9} parent=19 // pred_check
          %p277 = pneg %p88
        $region26: #{importance_renderer_forward.9} parent=19 // pred_check_branch
          %279 = sbr.rel (%p277) target = $region28
        $region27: #{importance_renderer_forward.9} parent=19 // pred_region
          %s280 = sand.u32 %s26, 1
          %s281 = scalar_lea.sflag [#allocation7], %s280
          %s282 = sand.u32 %s78, 1
          %s283 = smul.addr %s282, 16
          %s284 = scalar_lea.vmem [#allocation6], %s283
          %s286 = ssub.s32 256, 256
          %287 = vsyncadd %s281, %s286
          %s288 = smul.addr %s33, 2
          %s289 = sadd.s32 %s34, %s288
          %s290 = smul.addr %s289, 128
          %s291 = scalar_lea.hbm %s1, %s290
          %s292 = sshll.u32 %s284, 4
          %s293 = int_to_ptr.vmem [resolvable:$true] %s292
          %298 = dma.hbm_to_vmem [thread:$0]  %s291, 256, %s293, %s281, 128, 128, 8
        $region28: #{importance_renderer_forward.9} parent=19 // pred_fallthru
          _
        // Predicated region
        $region29: #{importance_renderer_forward.9} parent=19 // pred_check
          %p299 = pneg %p116
        $region30: #{importance_renderer_forward.9} parent=19 // pred_check_branch
          %301 = sbr.rel (%p299) target = $region32
        $region31: #{importance_renderer_forward.9} parent=19 // pred_region
          %s302 = sand.u32 %s26, 1
          %s303 = scalar_lea.sflag [#allocation7], %s302
          %s304 = sand.u32 %s106, 1
          %s305 = smul.addr %s304, 16
          %s306 = scalar_lea.vmem [#allocation8], %s305
          %s308 = ssub.s32 256, 256
          %309 = vsyncadd %s303, %s308
          %s310 = smul.addr %s33, 2
          %s311 = sadd.s32 %s34, %s310
          %s312 = smul.addr %s311, 128
          %s313 = scalar_lea.hbm %s2, %s312
          %s314 = sshll.u32 %s306, 4
          %s315 = int_to_ptr.vmem [resolvable:$true] %s314
          %320 = dma.hbm_to_vmem [thread:$0]  %s313, 256, %s315, %s303, 128, 128, 8
        $region32: #{importance_renderer_forward.9} parent=19 // pred_fallthru
          _
      $region20: #{importance_renderer_forward.9} parent=5 // pred_fallthru
        _
      %p321 = scmp.le.s32.totalorder 1, %s26
      %p322 = scmp.lt.s32.totalorder %s26, 3
      %p323 = pnand %p321, %p322
      %p324 = pneg %p323
      // Predicated region
      $region33: #{importance_renderer_forward.9} parent=5 // pred_check
        _
      $region34: #{importance_renderer_forward.9} parent=5 // pred_check_branch
        %326 = sbr.rel (%p323) target = $region36
      $region35: #{importance_renderer_forward.9} parent=5 // pred_region
        %s327 = ssub.s32 %s26, 1
        %s328 = sand.u32 %s53, 1
        %s329 = scalar_lea.sflag [#allocation3], %s328
        %s330 = sand.u32 %s53, 1
        %s331 = smul.addr %s330, 48
        %s332 = scalar_lea.vmem [#allocation2], %s331
        // Predicated region
        $region37: #{importance_renderer_forward.9} parent=35 // pred_check
          %p333 = pneg %p66
        $region38: #{importance_renderer_forward.9} parent=35 // pred_check_branch
          %335 = sbr.rel (%p333) target = $region40
        $region39: #{importance_renderer_forward.9} parent=35 // pred_region
          %336 = dma.done %s329, 768
        $region40: #{importance_renderer_forward.9} parent=35 // pred_fallthru
          _
        %s337 = sand.u32 %s31, 1
        %s338 = scalar_lea.sflag [#allocation7], %s337
        %s339 = sand.u32 %s81, 1
        %s340 = smul.addr %s339, 16
        %s341 = scalar_lea.vmem [#allocation6], %s340
        // Predicated region
        $region41: #{importance_renderer_forward.9} parent=35 // pred_check
          %p342 = pneg %p94
        $region42: #{importance_renderer_forward.9} parent=35 // pred_check_branch
          %344 = sbr.rel (%p342) target = $region44
        $region43: #{importance_renderer_forward.9} parent=35 // pred_region
          %345 = dma.done %s338, 256
        $region44: #{importance_renderer_forward.9} parent=35 // pred_fallthru
          _
        %s346 = sand.u32 %s31, 1
        %s347 = scalar_lea.sflag [#allocation7], %s346
        %s348 = sand.u32 %s109, 1
        %s349 = smul.addr %s348, 16
        %s350 = scalar_lea.vmem [#allocation8], %s349
        // Predicated region
        $region45: #{importance_renderer_forward.9} parent=35 // pred_check
          %p351 = pneg %p122
        $region46: #{importance_renderer_forward.9} parent=35 // pred_check_branch
          %353 = sbr.rel (%p351) target = $region48
        $region47: #{importance_renderer_forward.9} parent=35 // pred_region
          %354 = dma.done %s347, 256
        $region48: #{importance_renderer_forward.9} parent=35 // pred_fallthru
          _
        // Predicated region
        $region49: #{importance_renderer_forward.9} parent=35 // pred_check
          %p355 = pneg %p143
        $region50: #{importance_renderer_forward.9} parent=35 // pred_check_branch
          %357 = sbr.rel (%p355) target = $region52
        $region51: #{importance_renderer_forward.9} parent=35 // pred_region
          %358 = dma.done [#allocation5], 16
        $region52: #{importance_renderer_forward.9} parent=35 // pred_fallthru
          _
        %359 = sfence
        %s360 = sand.u32 %s53, 1
        %s361 = scalar_lea.sflag [#allocation3], %s360
        %s362 = sand.u32 %s53, 1
        %s363 = smul.addr %s362, 48
        %s364 = scalar_lea.vmem [#allocation2], %s363
        %p365 = pneg %p66
        %p366 = pneg %p63
        %s367 = sand.u32 %s31, 1
        %s368 = scalar_lea.sflag [#allocation7], %s367
        %s369 = sand.u32 %s81, 1
        %s370 = smul.addr %s369, 16
        %s371 = scalar_lea.vmem [#allocation6], %s370
        %p372 = pneg %p94
        %p373 = pneg %p91
        %s374 = sand.u32 %s31, 1
        %s375 = scalar_lea.sflag [#allocation7], %s374
        %s376 = sand.u32 %s109, 1
        %s377 = smul.addr %s376, 16
        %s378 = scalar_lea.vmem [#allocation8], %s377
        %p379 = pneg %p122
        %p380 = pneg %p119
        %p381 = pneg %p143
        %p382 = pneg %p140
        %p383 = pneg %p171
        %p384 = pneg %p168
        %s385 = sand.u32 %s158, 1
        %s386 = scalar_lea.sflag [#allocation4], %s385
        %s387 = sand.u32 %s158, 1
        %s388 = smul.addr %s387, 4
        %s389 = scalar_lea.vmem [#allocation10], %s388
        %p390 = pneg %p199
        %p391 = pneg %p196
        %s392 = sand.u32 %s31, 1
        %s393 = scalar_lea.sflag [#allocation12], %s392
        %s394 = sand.u32 %s186, 1
        %s395 = scalar_lea.vmem [#allocation11], %s394
        %p396 = pneg %p227
        %p397 = pneg %p224
        %s398 = sand.u32 %s31, 1
        %s399 = scalar_lea.sflag [#allocation12], %s398
        %s400 = sand.u32 %s214, 1
        %s401 = smul.addr %s400, 16
        %s402 = scalar_lea.vmem [#allocation13], %s401
        %v403 = vld [vmem:[%s332] sm:$0xff]
        %v404 = vld [vmem:[%s332 + $0x8] sm:$0xff]
        %v405 = vld [vmem:[%s332 + $0x10] sm:$0xff]
        %v406 = vld [vmem:[%s332 + $0x18] sm:$0xff]
        %v407 = vld [vmem:[%s332 + $0x20] sm:$0xff]
        %v408 = vld [vmem:[%s332 + $0x28] sm:$0xff]
        %v409 = vld [vmem:[%s341] sm:$0xff]
        %v410 = vld [vmem:[%s341 + $0x8] sm:$0xff]
        %v411 = vld [vmem:[%s350] sm:$0xff]
        %v412 = vld [vmem:[%s350 + $0x8] sm:$0xff]
        %vm415 = vcmask 1040384
        %v416 = vrot.slane %v411, 7
        %v417 = vrot.slane %v412, 7
        %v418 = vsel %vm415, %v416, %v417
        %v421 = vsub.f32 %v411, %v416
        %v422 = vsub.f32 %v412, %v418
        %vm429 = vcmask 1046528
        %v430 = vrot.slane %v403, 1
        %v431 = vrot.slane %v404, 1
        %v432 = vsel %vm429, %v430, %v431
        %v433 = vrot.slane %v405, 1
        %v434 = vrot.slane %v406, 1
        %v435 = vsel %vm429, %v433, %v434
        %v436 = vrot.slane %v407, 1
        %v437 = vrot.slane %v408, 1
        %v438 = vsel %vm429, %v436, %v437
        %v445 = vadd.f32 %v403, %v432
        %v446 = vadd.f32 %v404, %v431
        %v447 = vadd.f32 %v405, %v435
        %v448 = vadd.f32 %v406, %v434
        %v449 = vadd.f32 %v407, %v438
        %v450 = vadd.f32 %v408, %v437
        %v451 = vmul.f32 %v445, 0.5
        %v452 = vmul.f32 %v446, 0.5
        %v453 = vmul.f32 %v447, 0.5
        %v454 = vmul.f32 %v448, 0.5
        %v455 = vmul.f32 %v449, 0.5
        %v456 = vmul.f32 %v450, 0.5
        %v459 = vrot.slane %v409, 1
        %v460 = vrot.slane %v410, 1
        %v461 = vsel %vm429, %v459, %v460
        %v464 = vadd.f32 %v409, %v461
        %v465 = vadd.f32 %v410, %v460
        %v466 = vmul.f32 %v464, 0.5
        %v467 = vmul.f32 %v465, 0.5
        %v468 = vrot.slane %v411, 1
        %v469 = vrot.slane %v412, 1
        %v470 = vsel %vm429, %v468, %v469
        %v473 = vadd.f32 %v411, %v470
        %v474 = vadd.f32 %v412, %v469
        %v475 = vmul.f32 %v473, 0.5
        %v476 = vmul.f32 %v474, 0.5
        %v477 = vsub.f32 %v466, 1.0
        %v478 = vsub.f32 %v467, 1.0
        %vm479 = vcmp.gt.f32.partialorder %v477, 20.0
        %vm480 = vcmp.gt.f32.partialorder %v478, 20.0
        %v481 = vmin.f32 %v477, 20.0
        %v482 = vmin.f32 %v478, 20.0
        %v483 = vmul.f32 %v481, 1.442695
        %v484 = vpow.pop %v483
        %v485 = vmul.f32 %v482, 1.442695
        %v486 = vpow.pop %v485
        %v487 = vadd.f32 %v484, 1.0
        %v488 = vadd.f32 %v486, 1.0
        %v489 = vlog2.pop %v487
        %v490 = vmul.f32 %v489, 0.6931472
        %v491 = vlog2.pop %v488
        %v492 = vmul.f32 %v491, 0.6931472
        %v493 = vsel %vm479, %v477, %v490
        %v494 = vsel %vm480, %v478, %v492
        %v497 = vrot.slane %v421, 1
        %v498 = vrot.slane %v422, 1
        %v499 = vsel %vm429, %v497, %v498
        %v502 = vmul.f32 %v493, %v499
        %v503 = vmul.f32 %v494, %v498
        %v504 = vsub.f32 0.0, %v502
        %v505 = vsub.f32 0.0, %v503
        %v506 = vmul.f32 %v504, 1.442695
        %v507 = vpow.pop %v506
        %v508 = vmul.f32 %v505, 1.442695
        %v509 = vpow.pop %v508
        %v510 = vsub.f32 1.0, %v507
        %v511 = vsub.f32 1.0, %v509
        %v512 = vsub.f32 1.0, %v510
        %v513 = vsub.f32 1.0, %v511
        %v514 = vadd.f32 %v512, 1e-10
        %v515 = vadd.f32 %v513, 1e-10
        %v517 = vrot.slane %v514, 7
        %v519 = vmul.f32 %v510, %v517
        %v520 = vrot.slane %v514, 1
        %v522 = vmul.f32 %v514, %v520
        %v524 = vrot.slane %v522, 6
        %v526 = vmul.f32 %v510, %v524
        %v527 = vrot.slane %v514, 2
        %v529 = vmul.f32 %v522, %v527
        %v531 = vrot.slane %v529, 5
        %v533 = vmul.f32 %v510, %v531
        %v534 = vrot.slane %v514, 3
        %v536 = vmul.f32 %v529, %v534
        %v538 = vrot.slane %v536, 4
        %v540 = vmul.f32 %v510, %v538
        %v541 = vrot.slane %v514, 4
        %v543 = vmul.f32 %v536, %v541
        %v545 = vrot.slane %v543, 3
        %v547 = vmul.f32 %v510, %v545
        %v548 = vrot.slane %v514, 5
        %v550 = vmul.f32 %v543, %v548
        %v552 = vrot.slane %v550, 2
        %v554 = vmul.f32 %v510, %v552
        %v555 = vrot.slane %v514, 6
        %v557 = vmul.f32 %v550, %v555
        %v559 = vrot.slane %v557, 1
        %v561 = vmul.f32 %v510, %v559
        %v562 = vmul.f32 %v557, %v517
        %v563 = vmul.f32 %v511, %v562
        %v564 = vmul.f32 %v562, %v515
        %v566 = vrot.slane %v564, 7
        %v568 = vmul.f32 %v511, %v566
        %v570 = vrot.slane %v515, 1
        %v572 = vmul.f32 %v564, %v570
        %v574 = vrot.slane %v572, 6
        %v576 = vmul.f32 %v511, %v574
        %v577 = vrot.slane %v515, 2
        %v579 = vmul.f32 %v572, %v577
        %v581 = vrot.slane %v579, 5
        %v583 = vmul.f32 %v511, %v581
        %v584 = vrot.slane %v515, 3
        %v586 = vmul.f32 %v579, %v584
        %v588 = vrot.slane %v586, 4
        %v590 = vmul.f32 %v511, %v588
        %v591 = vrot.slane %v515, 4
        %v593 = vmul.f32 %v586, %v591
        %v595 = vrot.slane %v593, 3
        %v597 = vmul.f32 %v511, %v595
        %v598 = vrot.slane %v515, 5
        %v600 = vmul.f32 %v593, %v598
        %v602 = vrot.slane %v600, 2
        %v604 = vmul.f32 %v511, %v602
        %v605 = vsel %vm415, %v510, %v519
        %vm606 = vcmask 1041408
        %v607 = vsel %vm606, %v605, %v526
        %vm608 = vcmask 1042432
        %v609 = vsel %vm608, %v607, %v533
        %vm610 = vcmask 1043456
        %v611 = vsel %vm610, %v609, %v540
        %vm612 = vcmask 1044480
        %v613 = vsel %vm612, %v611, %v547
        %vm614 = vcmask 1045504
        %v615 = vsel %vm614, %v613, %v554
        %v616 = vsel %vm429, %v615, %v561
        %v617 = vsel %vm415, %v563, %v568
        %v618 = vsel %vm606, %v617, %v576
        %v619 = vsel %vm608, %v618, %v583
        %v620 = vsel %vm610, %v619, %v590
        %v621 = vsel %vm612, %v620, %v597
        %v622 = vsel %vm614, %v621, %v604
        %v623 = vmul.f32 %v616, %v451
        %v624 = vmul.f32 %v622, %v452
        %v625 = vmul.f32 %v616, %v453
        %v626 = vmul.f32 %v622, %v454
        %v627 = vmul.f32 %v616, %v455
        %v628 = vmul.f32 %v622, %v456
        %vm629 = vcmask 130048
        %v630 = vsel %vm629, %v623, 0.0
        %vm631 = vcmask 129024
        %v632 = vsel %vm631, %v624, 0.0
        %v633 = vadd.f32 %v630, %v632
        %v634 = vrot.slane %v633, 4
        %v635 = vadd.f32 %v633, %v634
        %v636 = vrot.slane %v635, 2
        %v637 = vadd.f32 %v635, %v636
        %v638 = vrot.slane %v637, 1
        %v639 = vadd.f32 %v637, %v638
        %v640 = vsel %vm629, %v625, 0.0
        %v641 = vsel %vm631, %v626, 0.0
        %v642 = vadd.f32 %v640, %v641
        %v643 = vrot.slane %v642, 4
        %v644 = vadd.f32 %v642, %v643
        %v645 = vrot.slane %v644, 2
        %v646 = vadd.f32 %v644, %v645
        %v647 = vrot.slane %v646, 1
        %v648 = vadd.f32 %v646, %v647
        %v649 = vsel %vm629, %v627, 0.0
        %v650 = vsel %vm631, %v628, 0.0
        %v651 = vadd.f32 %v649, %v650
        %v652 = vrot.slane %v651, 4
        %v653 = vadd.f32 %v651, %v652
        %v654 = vrot.slane %v653, 2
        %v655 = vadd.f32 %v653, %v654
        %v656 = vrot.slane %v655, 1
        %v657 = vadd.f32 %v655, %v656
        %v658 = vsel %vm629, %v616, 0.0
        %v659 = vsel %vm631, %v622, 0.0
        %v660 = vadd.f32 %v658, %v659
        %v661 = vrot.slane %v660, 4
        %v662 = vadd.f32 %v660, %v661
        %v663 = vrot.slane %v662, 2
        %v664 = vadd.f32 %v662, %v663
        %v665 = vrot.slane %v664, 1
        %v666 = vadd.f32 %v664, %v665
        %v667 = vmul.f32 %v616, %v475
        %v668 = vmul.f32 %v622, %v476
        %v669 = vsel %vm629, %v667, 0.0
        %v670 = vsel %vm631, %v668, 0.0
        %v671 = vadd.f32 %v669, %v670
        %v672 = vrot.slane %v671, 4
        %v673 = vadd.f32 %v671, %v672
        %v674 = vrot.slane %v673, 2
        %v675 = vadd.f32 %v673, %v674
        %v676 = vrot.slane %v675, 1
        %v677 = vadd.f32 %v675, %v676
        %v678 = vrcp.pop %v666
        %v679 = vmul.f32 %v677, %v678
        %vm680 = vcmp.ne.f32.partialorder %v679, %v679
        %v681 = vsel %vm680, inf, %v679
        %s682 = sld [smem:[#allocation9]]
        %s683 = sld [smem:[#allocation9 + $0x1]]
        %v684 = vstv %s682
        %v685 = vmax.f32 %v684, %v681
        %v686 = vstv %s683
        %v687 = vmin.f32 %v686, %v685
        %v688 = vmul.f32 %v639, 2.0
        %v689 = vmul.f32 %v648, 2.0
        %v690 = vmul.f32 %v657, 2.0
        %v691 = vsub.f32 %v688, 1.0
        %v692 = vsub.f32 %v689, 1.0
        %v693 = vsub.f32 %v690, 1.0
        %vm697 = vcmask 1041409
        %v698 = vsel %vm697, %v692, %v691
        %vm699 = vcmask 1042434
        %v700 = vsel %vm699, %v693, %v698
        %vm702 = vcmask 124928
        %703 = vst.msk [vmem:[%s389] sm:$0x7] %vm702, %v700
        %vm704 = vcmask 122880
        %705 = vst.msk [vmem:[%s395] sm:$0x1] %vm704, %v687
        %706 = vst.msk [vmem:[%s402] sm:$0xff] %vm629, %v616
        %707 = vst.msk [vmem:[%s402 + $0x8] sm:$0x7f] %vm631, %v622
        %s708 = sand.u32 %s158, 1
        %s709 = scalar_lea.sflag [#allocation4], %s708
        %s710 = sand.u32 %s158, 1
        %s711 = smul.addr %s710, 4
        %s712 = scalar_lea.vmem [#allocation10], %s711
        %s713 = sand.u32 %s31, 1
        %s714 = scalar_lea.sflag [#allocation12], %s713
        %s715 = sand.u32 %s186, 1
        %s716 = scalar_lea.vmem [#allocation11], %s715
        %s717 = sand.u32 %s31, 1
        %s718 = scalar_lea.sflag [#allocation12], %s717
        %s719 = sand.u32 %s214, 1
        %s720 = smul.addr %s719, 16
        %s721 = scalar_lea.vmem [#allocation13], %s720
        // Predicated region
        $region53: #{importance_renderer_forward.9} parent=35 // pred_check
          %p722 = pneg %p168
        $region54: #{importance_renderer_forward.9} parent=35 // pred_check_branch
          %724 = sbr.rel (%p722) target = $region56
        $region55: #{importance_renderer_forward.9} parent=35 // pred_region
          %s726 = ssub.s32 64, 64
          %727 = vsyncadd %s709, %s726
          %s728 = sadd.s32 %s36, %s35
          %s729 = smul.addr %s728, 64
          %s730 = scalar_lea.hbm %s4, %s729
          %s732 = sshll.u32 %s712, 4
          %s733 = int_to_ptr.vmem [resolvable:$true] %s732
          %735 = dma.vmem_to_hbm [thread:$0]  %s733, 64, %s730, %s709
        $region56: #{importance_renderer_forward.9} parent=35 // pred_fallthru
          _
        // Predicated region
        $region57: #{importance_renderer_forward.9} parent=35 // pred_check
          %p736 = pneg %p196
        $region58: #{importance_renderer_forward.9} parent=35 // pred_check_branch
          %738 = sbr.rel (%p736) target = $region60
        $region59: #{importance_renderer_forward.9} parent=35 // pred_region
          %s740 = ssub.s32 16, 16
          %741 = vsyncadd %s714, %s740
          %s742 = sadd.s32 %s36, %s35
          %s743 = smul.addr %s742, 16
          %s744 = scalar_lea.hbm %s5, %s743
          %s746 = sshll.u32 %s716, 4
          %s747 = int_to_ptr.vmem [resolvable:$true] %s746
          %749 = dma.vmem_to_hbm [thread:$0]  %s747, 16, %s744, %s714
        $region60: #{importance_renderer_forward.9} parent=35 // pred_fallthru
          _
        // Predicated region
        $region61: #{importance_renderer_forward.9} parent=35 // pred_check
          %p750 = pneg %p224
        $region62: #{importance_renderer_forward.9} parent=35 // pred_check_branch
          %752 = sbr.rel (%p750) target = $region64
        $region63: #{importance_renderer_forward.9} parent=35 // pred_region
          %s754 = ssub.s32 256, 256
          %755 = vsyncadd %s718, %s754
          %s756 = smul.addr %s35, 2
          %s757 = sadd.s32 %s36, %s756
          %s758 = smul.addr %s757, 128
          %s759 = scalar_lea.hbm %s6, %s758
          %s760 = sshll.u32 %s721, 4
          %s761 = int_to_ptr.vmem [resolvable:$true] %s760
          %766 = dma.vmem_to_hbm [thread:$0]  %s761, 256, %s759, %s718, 128, 128, 8
        $region64: #{importance_renderer_forward.9} parent=35 // pred_fallthru
          _
      $region36: #{importance_renderer_forward.9} parent=5 // pred_fallthru
        _
      %p767 = scmp.le.s32.totalorder 2, %s26
      // Predicated region
      $region65: #{importance_renderer_forward.9} parent=5 // pred_check
        %p768 = pneg %p767
      $region66: #{importance_renderer_forward.9} parent=5 // pred_check_branch
        %770 = sbr.rel (%p768) target = $region68
      $region67: #{importance_renderer_forward.9} parent=5 // pred_region
        %s771 = ssub.s32 %s26, 2
        // Predicated region
        $region69: #{importance_renderer_forward.9} parent=67 // pred_check
          %p772 = pneg %p174
        $region70: #{importance_renderer_forward.9} parent=67 // pred_check_branch
          %774 = sbr.rel (%p772) target = $region72
        $region71: #{importance_renderer_forward.9} parent=67 // pred_region
          %s775 = sand.u32 %s159, 1
          %s776 = scalar_lea.sflag [#allocation4], %s775
          %s777 = sand.u32 %s159, 1
          %s778 = smul.addr %s777, 4
          %s779 = scalar_lea.vmem [#allocation10], %s778
          %780 = dma.done %s776, 64
        $region72: #{importance_renderer_forward.9} parent=67 // pred_fallthru
          _
        // Predicated region
        $region73: #{importance_renderer_forward.9} parent=67 // pred_check
          %p781 = pneg %p202
        $region74: #{importance_renderer_forward.9} parent=67 // pred_check_branch
          %783 = sbr.rel (%p781) target = $region76
        $region75: #{importance_renderer_forward.9} parent=67 // pred_region
          %s784 = sand.u32 %s32, 1
          %s785 = scalar_lea.sflag [#allocation12], %s784
          %s786 = sand.u32 %s187, 1
          %s787 = scalar_lea.vmem [#allocation11], %s786
          %788 = dma.done %s785, 16
        $region76: #{importance_renderer_forward.9} parent=67 // pred_fallthru
          _
        // Predicated region
        $region77: #{importance_renderer_forward.9} parent=67 // pred_check
          %p789 = pneg %p230
        $region78: #{importance_renderer_forward.9} parent=67 // pred_check_branch
          %791 = sbr.rel (%p789) target = $region80
        $region79: #{importance_renderer_forward.9} parent=67 // pred_region
          %s792 = sand.u32 %s32, 1
          %s793 = scalar_lea.sflag [#allocation12], %s792
          %s794 = sand.u32 %s215, 1
          %s795 = smul.addr %s794, 16
          %s796 = scalar_lea.vmem [#allocation13], %s795
          %797 = dma.done %s793, 256
        $region80: #{importance_renderer_forward.9} parent=67 // pred_fallthru
          _
      $region68: #{importance_renderer_forward.9} parent=5 // pred_fallthru
        _
    $region6: #{importance_renderer_forward.9} parent=1 // loop_footer
      %s30 = sadd.s32 1, %s26
    $region7: #{importance_renderer_forward.9} parent=1 // loop_footer_branch
      %25 = sbr.rel target = $region3
    $region8: #{importance_renderer_forward.9} parent=1 // loop_exit
      _
    %798 = vsyncpa [#allocation3], 1
    %s799 = scalar_lea.sflag [#allocation3], 1
    %800 = vsyncpa %s799, 1
    %801 = vsyncpa [#allocation7], 1
    %s802 = scalar_lea.sflag [#allocation7], 1
    %803 = vsyncpa %s802, 1
    %804 = vsyncpa [#allocation4], 1
    %s805 = scalar_lea.sflag [#allocation4], 1
    %806 = vsyncpa %s805, 1
    %807 = vsyncpa [#allocation12], 1
    %s808 = scalar_lea.sflag [#allocation12], 1
    %809 = vsyncpa %s808, 1
    %810 = vsyncpa [#allocation5], 1
    %s811 = scalar_lea.sflag [#allocation5], 1
    %812 = vsyncpa %s811, 1

</llo_original>
